<compile_context>
chip_gen: v7x
topology: tpu7x:2x2x1
jax: 0.10.0
libtpu: 0.0.40
codegen_flags: <defaults>
</compile_context>

<pallas_src>
import math
import jax
import jax.numpy as jnp
from jax.experimental import pallas as pl
from jax.experimental.pallas import tpu as pltpu

HIDDEN = 32
NUM_HEADS = 4
HEAD_DIM = HIDDEN // NUM_HEADS
INTERMEDIATE = 64
LN_EPS = 1e-12
LAYER_NUM = 2

# packed bias/LN vector table: one padded row per vector
VEC_W = max(2 * HIDDEN, INTERMEDIATE, HIDDEN)
(_ROW_BQ, _ROW_BKV, _ROW_BAO, _ROW_G1, _ROW_BE1,
 _ROW_BI, _ROW_BO, _ROW_G2, _ROW_BE2) = range(9)
NUM_VEC_ROWS = 9


def _layer_norm(x, gamma, beta):
    # BertLayerNorm: mean/var over last dim, biased variance, eps inside sqrt.
    u = jnp.mean(x, axis=-1, keepdims=True)
    s = jnp.mean((x - u) ** 2, axis=-1, keepdims=True)
    xhat = (x - u) / jnp.sqrt(s + LN_EPS)
    return xhat * gamma + beta


def _gelu(x):
    # exact erf-based gelu, matching the PyTorch reference
    return x * 0.5 * (1.0 + jax.lax.erf(x / math.sqrt(2.0)))


def encoder_kernel(s1_ref, s2_ref, mask_ref,
                   wq_ref, wkv_ref, wao_ref, wi_ref, wo_ref, vec_ref,
                   out_ref):
    B, S1, H = s1_ref.shape
    S2 = s2_ref.shape[1]
    I = wi_ref.shape[2]
    L = wq_ref.shape[0]
    head_dim = H // NUM_HEADS

    x = s1_ref[...].reshape(B * S1, H).astype(jnp.float32)      # (B*S1, H), resident
    s2 = s2_ref[...].reshape(B * S2, H).astype(jnp.float32)     # (B*S2, H)
    mask = mask_ref[...].astype(jnp.float32)                    # (B, 1, S2) additive

    for l in range(L):                                          # static layer loop
        wq = wq_ref[l]        # (H, H), pre-scaled by 1/sqrt(head_dim)
        wkv = wkv_ref[l]      # (H, 2H) = [Wk | Wv]
        wao = wao_ref[l]      # (H, H)
        wi = wi_ref[l]        # (H, I)
        wo = wo_ref[l]        # (I, H)
        vec = vec_ref[l]      # (NUM_VEC_ROWS, VEC_W)
        bq = vec[_ROW_BQ:_ROW_BQ + 1, :H]
        bkv = vec[_ROW_BKV:_ROW_BKV + 1, :2 * H]
        bao = vec[_ROW_BAO:_ROW_BAO + 1, :H]
        g1 = vec[_ROW_G1:_ROW_G1 + 1, :H]
        be1 = vec[_ROW_BE1:_ROW_BE1 + 1, :H]
        bi = vec[_ROW_BI:_ROW_BI + 1, :I]
        bo = vec[_ROW_BO:_ROW_BO + 1, :H]
        g2 = vec[_ROW_G2:_ROW_G2 + 1, :H]
        be2 = vec[_ROW_BE2:_ROW_BE2 + 1, :H]

        # --- BertCoAttention: Q from s1 (pre-scaled), fused K|V from s2 ---
        q = jnp.dot(x, wq, preferred_element_type=jnp.float32) + bq        # (B*S1, H)
        kv = jnp.dot(s2, wkv, preferred_element_type=jnp.float32) + bkv    # (B*S2, 2H)
        k = kv[:, :H]
        v = kv[:, H:2 * H]

        # per-head attention (static head loop, no transposes);
        # head-merge folded into the output projection wao.
        ctx_proj = jnp.zeros((B * S1, H), jnp.float32)
        for h in range(NUM_HEADS):
            sl = slice(h * head_dim, (h + 1) * head_dim)
            qh = q[:, sl].reshape(B, S1, head_dim)
            kh = k[:, sl].reshape(B, S2, head_dim)
            vh = v[:, sl].reshape(B, S2, head_dim)
            scores = jnp.einsum('bqd,bkd->bqk', qh, kh,
                                preferred_element_type=jnp.float32)        # (B,S1,S2)
            scores = scores + mask                                         # (B,1,S2) bcast
            scores = scores - jnp.max(scores, axis=-1, keepdims=True)
            e = jnp.exp(scores)
            denom = jnp.sum(e, axis=-1, keepdims=True)
            probs = e * pl.reciprocal(denom, approx=False)
            # attention dropout is identity in eval mode
            ctxh = jnp.einsum('bqk,bkd->bqd', probs, vh,
                              preferred_element_type=jnp.float32)          # (B,S1,hd)
            ctx_proj = ctx_proj + jnp.dot(ctxh.reshape(B * S1, head_dim),
                                          wao[sl, :],
                                          preferred_element_type=jnp.float32)

        # --- BertSelfOutput: dense + residual(x) + LayerNorm ---
        attn = _layer_norm(ctx_proj + bao + x, g1, be1)

        # --- BertIntermediate: dense + gelu ---
        inter = _gelu(jnp.dot(attn, wi, preferred_element_type=jnp.float32) + bi)

        # --- BertOutput: dense + residual(attn) + LayerNorm ---
        y = jnp.dot(inter, wo, preferred_element_type=jnp.float32) + bo
        y = _layer_norm(y + attn, g2, be2)

        out_ref[l] = y.astype(out_ref.dtype)                               # (B*S1, H)
        x = y                                                              # carry in VMEM


def bert_cross_encoder(s1, s2, mask, packed_params, output_all_encoded_layers=True):
    """Full BertCrossEncoder forward in one pallas_call.

    s1: (B, S1, H), s2: (B, S2, H), mask: (B, 1, S2) additive attention mask.
    packed_params: (wq_s, wkv, wao, wi, wo, vecs), each stacked over layers.
    Returns a list of per-layer outputs, each (B, S1, H).
    """
    B, S1, H = s1.shape
    L = packed_params[0].shape[0]
    vmem = pl.BlockSpec(memory_space=pltpu.MemorySpace.VMEM)
    out = pl.pallas_call(
        encoder_kernel,
        out_shape=jax.ShapeDtypeStruct((L, B * S1, H), jnp.float32),
        in_specs=[vmem] * (3 + len(packed_params)),
        out_specs=vmem,
    )(s1, s2, mask, *packed_params)
    out = out.reshape(L, B, S1, H)
    if output_all_encoded_layers:
        return [out[l] for l in range(L)]
    return [out[L - 1]]


# ----------------------------- parameters ----------------------------------

def init_layer_params(key):
    """Synthetic weights for one BertCrossAttentionLayer.

    Linear weights are stored as (in, out) (transposed vs. PyTorch nn.Linear),
    biases / LN params are (1, dim).
    """
    ks = jax.random.split(key, 16)
    std = 0.02

    def w(k, shape):
        return jax.random.normal(k, shape, jnp.float32) * std

    wq = w(ks[0], (HIDDEN, HIDDEN));          bq = w(ks[1], (1, HIDDEN))
    wk = w(ks[2], (HIDDEN, HIDDEN));          bk = w(ks[3], (1, HIDDEN))
    wv = w(ks[4], (HIDDEN, HIDDEN));          bv = w(ks[5], (1, HIDDEN))
    wao = w(ks[6], (HIDDEN, HIDDEN));         bao = w(ks[7], (1, HIDDEN))
    wi = w(ks[8], (HIDDEN, INTERMEDIATE));    bi = w(ks[9], (1, INTERMEDIATE))
    wo = w(ks[10], (INTERMEDIATE, HIDDEN));   bo = w(ks[11], (1, HIDDEN))
    g1 = 1.0 + w(ks[12], (1, HIDDEN));        be1 = w(ks[13], (1, HIDDEN))
    g2 = 1.0 + w(ks[14], (1, HIDDEN));        be2 = w(ks[15], (1, HIDDEN))
    return (wq, bq, wk, bk, wv, bv, wao, bao, g1, be1,
            wi, bi, wo, bo, g2, be2)


def _pad_row(v, width):
    return jnp.pad(v, ((0, 0), (0, width - v.shape[1])))


def pack_params(raw_layers):
    """Stack per-layer weights; fuse K|V, fold 1/sqrt(hd) into Wq/bq, pack vectors."""
    scale = 1.0 / math.sqrt(HEAD_DIM)
    wq_l, wkv_l, wao_l, wi_l, wo_l, vec_l = [], [], [], [], [], []
    for (wq, bq, wk, bk, wv, bv, wao, bao, g1, be1,
         wi, bi, wo, bo, g2, be2) in raw_layers:
        wq_l.append(wq * scale)
        wkv_l.append(jnp.concatenate([wk, wv], axis=1))
        wao_l.append(wao)
        wi_l.append(wi)
        wo_l.append(wo)
        rows = [
            _pad_row(bq * scale, VEC_W),
            _pad_row(jnp.concatenate([bk, bv], axis=1), VEC_W),
            _pad_row(bao, VEC_W),
            _pad_row(g1, VEC_W),
            _pad_row(be1, VEC_W),
            _pad_row(bi, VEC_W),
            _pad_row(bo, VEC_W),
            _pad_row(g2, VEC_W),
            _pad_row(be2, VEC_W),
        ]
        vec_l.append(jnp.concatenate(rows, axis=0))  # (NUM_VEC_ROWS, VEC_W)
    stack = lambda xs: jnp.stack(xs, axis=0)
    return (stack(wq_l), stack(wkv_l), stack(wao_l),
            stack(wi_l), stack(wo_l), stack(vec_l))


# -------------------- pure-JAX reference (PyTorch-faithful) -----------------

def reference_encoder(s1, s2, mask, raw_layers):
    outs = []
    x = s1
    B, S1, H = s1.shape
    S2 = s2.shape[1]
    for (wq, bq, wk, bk, wv, bv, wao, bao, g1, be1,
         wi, bi, wo, bo, g2, be2) in raw_layers:
        q = x @ wq + bq
        k = s2 @ wk + bk
        v = s2 @ wv + bv
        qh = q.reshape(B, S1, NUM_HEADS, HEAD_DIM).transpose(0, 2, 1, 3)
        kh = k.reshape(B, S2, NUM_HEADS, HEAD_DIM).transpose(0, 2, 1, 3)
        vh = v.reshape(B, S2, NUM_HEADS, HEAD_DIM).transpose(0, 2, 1, 3)
        scores = jnp.einsum('bhqd,bhkd->bhqk', qh, kh) / math.sqrt(HEAD_DIM)
        scores = scores + mask[:, :, None, :]
        probs = jax.nn.softmax(scores, axis=-1)
        ctx = jnp.einsum('bhqk,bhkd->bhqd', probs, vh)
        ctx = ctx.transpose(0, 2, 1, 3).reshape(B, S1, H)
        attn = _layer_norm(ctx @ wao + bao + x, g1, be1)
        inter = _gelu(attn @ wi + bi)
        y = _layer_norm(inter @ wo + bo + attn, g2, be2)
        outs.append(y)
        x = y
    return outs


if __name__ == "__main__":
    key = jax.random.PRNGKey(0)
    k_s1, k_s2, k_layers = jax.random.split(key, 3)

    B, S1, S2 = 2, 8, 16
    s1 = jax.random.normal(k_s1, (B, S1, HIDDEN), jnp.float32)
    s2 = jax.random.normal(k_s2, (B, S2, HIDDEN), jnp.float32)

    # additive attention mask on s2 (0 = attend, -10000 = masked), like the
    # extended attention mask BERT feeds into these layers.
    lens = jnp.array([S2, S2 - 4], dtype=jnp.int32)                 # (B,)
    pos = jnp.arange(S2)[None, :]                                   # (1, S2)
    mask = jnp.where(pos < lens[:, None], 0.0, -10000.0)            # (B, S2)
    mask = mask[:, None, :].astype(jnp.float32)                     # (B, 1, S2)

    layer_keys = jax.random.split(k_layers, LAYER_NUM)
    raw_layers = [init_layer_params(k) for k in layer_keys]
    packed = pack_params(raw_layers)

    outs = bert_cross_encoder(s1, s2, mask, packed,
                              output_all_encoded_layers=True)
    outs = [jax.block_until_ready(o) for o in outs]

    assert len(outs) == LAYER_NUM
    assert outs[-1].shape == (B, S1, HIDDEN)

    refs = reference_encoder(s1, s2, mask, raw_layers)
    for o, r in zip(outs, refs):
        assert bool(jnp.all(jnp.isfinite(o)))
        err = float(jnp.max(jnp.abs(o - r)))
        assert bool(jnp.allclose(o, r, rtol=2e-3, atol=2e-3)), err

    print("KERNEL_OK")
</pallas_src>

<mosaic_0001>
module attributes {stable_mosaic.version = 11 : i64} {
  func.func @encoder_kernel(%arg0: memref<2x8x32xf32, #tpu.memory_space<vmem>>, %arg1: memref<2x16x32xf32, #tpu.memory_space<vmem>>, %arg2: memref<2x1x16xf32, #tpu.memory_space<vmem>>, %arg3: memref<2x32x32xf32, #tpu.memory_space<vmem>>, %arg4: memref<2x32x64xf32, #tpu.memory_space<vmem>>, %arg5: memref<2x32x32xf32, #tpu.memory_space<vmem>>, %arg6: memref<2x32x64xf32, #tpu.memory_space<vmem>>, %arg7: memref<2x64x32xf32, #tpu.memory_space<vmem>>, %arg8: memref<2x9x64xf32, #tpu.memory_space<vmem>>, %arg9: memref<2x16x32xf32, #tpu.memory_space<vmem>>) attributes {dimension_semantics = [], scalar_prefetch = 0 : i64, scratch_operands = 0 : i64, tpu.core_type = #tpu.core_type<tc>} {
    %c0 = arith.constant 0 : index
    %c0_0 = arith.constant 0 : index
    %c0_1 = arith.constant 0 : index
    %0 = vector.load %arg0[%c0, %c0_0, %c0_1] : memref<2x8x32xf32, #tpu.memory_space<vmem>>, vector<2x8x32xf32>
    %1 = vector.shape_cast %0 : vector<2x8x32xf32> to vector<16x32xf32>
    %c0_2 = arith.constant 0 : index
    %c0_3 = arith.constant 0 : index
    %c0_4 = arith.constant 0 : index
    %2 = vector.load %arg1[%c0_2, %c0_3, %c0_4] : memref<2x16x32xf32, #tpu.memory_space<vmem>>, vector<2x16x32xf32>
    %3 = vector.shape_cast %2 : vector<2x16x32xf32> to vector<32x32xf32>
    %c0_5 = arith.constant 0 : index
    %c0_6 = arith.constant 0 : index
    %c0_7 = arith.constant 0 : index
    %4 = vector.load %arg2[%c0_5, %c0_6, %c0_7] : memref<2x1x16xf32, #tpu.memory_space<vmem>>, vector<2x1x16xf32>
    %c0_8 = arith.constant 0 : index
    %c0_9 = arith.constant 0 : index
    %c0_10 = arith.constant 0 : index
    %5 = vector.load %arg3[%c0_8, %c0_9, %c0_10] : memref<2x32x32xf32, #tpu.memory_space<vmem>>, vector<1x32x32xf32>
    %6 = vector.shape_cast %5 : vector<1x32x32xf32> to vector<32x32xf32>
    %c0_11 = arith.constant 0 : index
    %c0_12 = arith.constant 0 : index
    %c0_13 = arith.constant 0 : index
    %7 = vector.load %arg4[%c0_11, %c0_12, %c0_13] : memref<2x32x64xf32, #tpu.memory_space<vmem>>, vector<1x32x64xf32>
    %8 = vector.shape_cast %7 : vector<1x32x64xf32> to vector<32x64xf32>
    %c0_14 = arith.constant 0 : index
    %c0_15 = arith.constant 0 : index
    %c0_16 = arith.constant 0 : index
    %9 = vector.load %arg5[%c0_14, %c0_15, %c0_16] : memref<2x32x32xf32, #tpu.memory_space<vmem>>, vector<1x32x32xf32>
    %10 = vector.shape_cast %9 : vector<1x32x32xf32> to vector<32x32xf32>
    %c0_17 = arith.constant 0 : index
    %c0_18 = arith.constant 0 : index
    %c0_19 = arith.constant 0 : index
    %11 = vector.load %arg6[%c0_17, %c0_18, %c0_19] : memref<2x32x64xf32, #tpu.memory_space<vmem>>, vector<1x32x64xf32>
    %12 = vector.shape_cast %11 : vector<1x32x64xf32> to vector<32x64xf32>
    %c0_20 = arith.constant 0 : index
    %c0_21 = arith.constant 0 : index
    %c0_22 = arith.constant 0 : index
    %13 = vector.load %arg7[%c0_20, %c0_21, %c0_22] : memref<2x64x32xf32, #tpu.memory_space<vmem>>, vector<1x64x32xf32>
    %14 = vector.shape_cast %13 : vector<1x64x32xf32> to vector<64x32xf32>
    %c0_23 = arith.constant 0 : index
    %c0_24 = arith.constant 0 : index
    %c0_25 = arith.constant 0 : index
    %15 = vector.load %arg8[%c0_23, %c0_24, %c0_25] : memref<2x9x64xf32, #tpu.memory_space<vmem>>, vector<1x9x64xf32>
    %16 = vector.shape_cast %15 : vector<1x9x64xf32> to vector<9x64xf32>
    %17 = vector.extract_strided_slice %16 {offsets = [0, 0], sizes = [1, 32], strides = [1, 1]} : vector<9x64xf32> to vector<1x32xf32>
    %18 = vector.extract_strided_slice %16 {offsets = [1, 0], sizes = [1, 64], strides = [1, 1]} : vector<9x64xf32> to vector<1x64xf32>
    %19 = vector.extract_strided_slice %16 {offsets = [2, 0], sizes = [1, 32], strides = [1, 1]} : vector<9x64xf32> to vector<1x32xf32>
    %20 = vector.extract_strided_slice %16 {offsets = [3, 0], sizes = [1, 32], strides = [1, 1]} : vector<9x64xf32> to vector<1x32xf32>
    %21 = vector.extract_strided_slice %16 {offsets = [4, 0], sizes = [1, 32], strides = [1, 1]} : vector<9x64xf32> to vector<1x32xf32>
    %22 = vector.extract_strided_slice %16 {offsets = [5, 0], sizes = [1, 64], strides = [1, 1]} : vector<9x64xf32> to vector<1x64xf32>
    %23 = vector.extract_strided_slice %16 {offsets = [6, 0], sizes = [1, 32], strides = [1, 1]} : vector<9x64xf32> to vector<1x32xf32>
    %24 = vector.extract_strided_slice %16 {offsets = [7, 0], sizes = [1, 32], strides = [1, 1]} : vector<9x64xf32> to vector<1x32xf32>
    %25 = vector.extract_strided_slice %16 {offsets = [8, 0], sizes = [1, 32], strides = [1, 1]} : vector<9x64xf32> to vector<1x32xf32>
    %cst = arith.constant dense<0.000000e+00> : vector<16x32xf32>
    %26 = tpu.matmul %1, %6, %cst {dimension_numbers = #tpu.dot_dimension_numbers<[1], [0], [0], [1], [0, 0, 1, 1], [], []>} : vector<16x32xf32>, vector<32x32xf32>, vector<16x32xf32> -> vector<16x32xf32>
    %27 = vector.broadcast %17 : vector<1x32xf32> to vector<16x32xf32>
    %28 = arith.addf %26, %27 : vector<16x32xf32>
    %cst_26 = arith.constant dense<0.000000e+00> : vector<32x64xf32>
    %29 = tpu.matmul %3, %8, %cst_26 {dimension_numbers = #tpu.dot_dimension_numbers<[1], [0], [0], [1], [0, 0, 1, 1], [], []>} : vector<32x32xf32>, vector<32x64xf32>, vector<32x64xf32> -> vector<32x64xf32>
    %30 = vector.broadcast %18 : vector<1x64xf32> to vector<32x64xf32>
    %31 = arith.addf %29, %30 : vector<32x64xf32>
    %32 = vector.extract_strided_slice %31 {offsets = [0, 0], sizes = [32, 32], strides = [1, 1]} : vector<32x64xf32> to vector<32x32xf32>
    %33 = vector.extract_strided_slice %31 {offsets = [0, 32], sizes = [32, 32], strides = [1, 1]} : vector<32x64xf32> to vector<32x32xf32>
    %cst_27 = arith.constant 0.000000e+00 : f32
    %34 = vector.broadcast %cst_27 : f32 to vector<16x32xf32>
    %35 = vector.extract_strided_slice %28 {offsets = [0, 0], sizes = [16, 8], strides = [1, 1]} : vector<16x32xf32> to vector<16x8xf32>
    %36 = vector.shape_cast %35 : vector<16x8xf32> to vector<2x8x8xf32>
    %37 = vector.extract_strided_slice %32 {offsets = [0, 0], sizes = [32, 8], strides = [1, 1]} : vector<32x32xf32> to vector<32x8xf32>
    %38 = vector.shape_cast %37 : vector<32x8xf32> to vector<2x16x8xf32>
    %39 = vector.extract_strided_slice %33 {offsets = [0, 0], sizes = [32, 8], strides = [1, 1]} : vector<32x32xf32> to vector<32x8xf32>
    %40 = vector.shape_cast %39 : vector<32x8xf32> to vector<2x16x8xf32>
    "tpu.trace_start"() <{level = 10 : i32, message = "bqd,bkd->bqk"}> : () -> ()
    %cst_28 = arith.constant dense<0.000000e+00> : vector<2x8x16xf32>
    %41 = tpu.matmul %36, %38, %cst_28 {dimension_numbers = #tpu.dot_dimension_numbers<[2], [2], [1], [1], [0, 0, 0, 1, 1, 1], [0], [0]>} : vector<2x8x8xf32>, vector<2x16x8xf32>, vector<2x8x16xf32> -> vector<2x8x16xf32>
    "tpu.trace_stop"() : () -> ()
    %42 = vector.broadcast %4 : vector<2x1x16xf32> to vector<2x8x16xf32>
    %43 = arith.addf %41, %42 : vector<2x8x16xf32>
    %cst_29 = arith.constant dense<0xFF800000> : vector<2x8xf32>
    %44 = vector.multi_reduction <maximumf>, %43, %cst_29 [2] : vector<2x8x16xf32> to vector<2x8xf32>
    %45 = vector.shape_cast %44 : vector<2x8xf32> to vector<2x8x1xf32>
    %46 = vector.broadcast %45 : vector<2x8x1xf32> to vector<2x8x16xf32>
    %47 = arith.subf %43, %46 : vector<2x8x16xf32>
    %48 = math.exp %47 : vector<2x8x16xf32>
    %cst_30 = arith.constant dense<0.000000e+00> : vector<2x8xf32>
    %49 = vector.multi_reduction <add>, %48, %cst_30 [2] : vector<2x8x16xf32> to vector<2x8xf32>
    %50 = vector.shape_cast %49 : vector<2x8xf32> to vector<2x8x1xf32>
    %51 = tpu.reciprocal %50 : vector<2x8x1xf32> -> vector<2x8x1xf32>
    %52 = vector.broadcast %51 : vector<2x8x1xf32> to vector<2x8x16xf32>
    %53 = arith.mulf %48, %52 : vector<2x8x16xf32>
    "tpu.trace_start"() <{level = 10 : i32, message = "bqk,bkd->bqd"}> : () -> ()
    %cst_31 = arith.constant dense<0.000000e+00> : vector<2x8x8xf32>
    %54 = tpu.matmul %53, %40, %cst_31 {dimension_numbers = #tpu.dot_dimension_numbers<[2], [1], [1], [2], [0, 0, 0, 1, 1, 2], [0], [0]>} : vector<2x8x16xf32>, vector<2x16x8xf32>, vector<2x8x8xf32> -> vector<2x8x8xf32>
    "tpu.trace_stop"() : () -> ()
    %55 = vector.shape_cast %54 : vector<2x8x8xf32> to vector<16x8xf32>
    %56 = vector.extract_strided_slice %10 {offsets = [0, 0], sizes = [8, 32], strides = [1, 1]} : vector<32x32xf32> to vector<8x32xf32>
    %cst_32 = arith.constant dense<0.000000e+00> : vector<16x32xf32>
    %57 = tpu.matmul %55, %56, %cst_32 {dimension_numbers = #tpu.dot_dimension_numbers<[1], [0], [0], [1], [0, 0, 1, 1], [], []>} : vector<16x8xf32>, vector<8x32xf32>, vector<16x32xf32> -> vector<16x32xf32>
    %58 = arith.addf %34, %57 : vector<16x32xf32>
    %59 = vector.extract_strided_slice %28 {offsets = [0, 8], sizes = [16, 8], strides = [1, 1]} : vector<16x32xf32> to vector<16x8xf32>
    %60 = vector.shape_cast %59 : vector<16x8xf32> to vector<2x8x8xf32>
    %61 = vector.extract_strided_slice %32 {offsets = [0, 8], sizes = [32, 8], strides = [1, 1]} : vector<32x32xf32> to vector<32x8xf32>
    %62 = vector.shape_cast %61 : vector<32x8xf32> to vector<2x16x8xf32>
    %63 = vector.extract_strided_slice %33 {offsets = [0, 8], sizes = [32, 8], strides = [1, 1]} : vector<32x32xf32> to vector<32x8xf32>
    %64 = vector.shape_cast %63 : vector<32x8xf32> to vector<2x16x8xf32>
    "tpu.trace_start"() <{level = 10 : i32, message = "bqd,bkd->bqk"}> : () -> ()
    %cst_33 = arith.constant dense<0.000000e+00> : vector<2x8x16xf32>
    %65 = tpu.matmul %60, %62, %cst_33 {dimension_numbers = #tpu.dot_dimension_numbers<[2], [2], [1], [1], [0, 0, 0, 1, 1, 1], [0], [0]>} : vector<2x8x8xf32>, vector<2x16x8xf32>, vector<2x8x16xf32> -> vector<2x8x16xf32>
    "tpu.trace_stop"() : () -> ()
    %66 = vector.broadcast %4 : vector<2x1x16xf32> to vector<2x8x16xf32>
    %67 = arith.addf %65, %66 : vector<2x8x16xf32>
    %cst_34 = arith.constant dense<0xFF800000> : vector<2x8xf32>
    %68 = vector.multi_reduction <maximumf>, %67, %cst_34 [2] : vector<2x8x16xf32> to vector<2x8xf32>
    %69 = vector.shape_cast %68 : vector<2x8xf32> to vector<2x8x1xf32>
    %70 = vector.broadcast %69 : vector<2x8x1xf32> to vector<2x8x16xf32>
    %71 = arith.subf %67, %70 : vector<2x8x16xf32>
    %72 = math.exp %71 : vector<2x8x16xf32>
    %cst_35 = arith.constant dense<0.000000e+00> : vector<2x8xf32>
    %73 = vector.multi_reduction <add>, %72, %cst_35 [2] : vector<2x8x16xf32> to vector<2x8xf32>
    %74 = vector.shape_cast %73 : vector<2x8xf32> to vector<2x8x1xf32>
    %75 = tpu.reciprocal %74 : vector<2x8x1xf32> -> vector<2x8x1xf32>
    %76 = vector.broadcast %75 : vector<2x8x1xf32> to vector<2x8x16xf32>
    %77 = arith.mulf %72, %76 : vector<2x8x16xf32>
    "tpu.trace_start"() <{level = 10 : i32, message = "bqk,bkd->bqd"}> : () -> ()
    %cst_36 = arith.constant dense<0.000000e+00> : vector<2x8x8xf32>
    %78 = tpu.matmul %77, %64, %cst_36 {dimension_numbers = #tpu.dot_dimension_numbers<[2], [1], [1], [2], [0, 0, 0, 1, 1, 2], [0], [0]>} : vector<2x8x16xf32>, vector<2x16x8xf32>, vector<2x8x8xf32> -> vector<2x8x8xf32>
    "tpu.trace_stop"() : () -> ()
    %79 = vector.shape_cast %78 : vector<2x8x8xf32> to vector<16x8xf32>
    %80 = vector.extract_strided_slice %10 {offsets = [8, 0], sizes = [8, 32], strides = [1, 1]} : vector<32x32xf32> to vector<8x32xf32>
    %cst_37 = arith.constant dense<0.000000e+00> : vector<16x32xf32>
    %81 = tpu.matmul %79, %80, %cst_37 {dimension_numbers = #tpu.dot_dimension_numbers<[1], [0], [0], [1], [0, 0, 1, 1], [], []>} : vector<16x8xf32>, vector<8x32xf32>, vector<16x32xf32> -> vector<16x32xf32>
    %82 = arith.addf %58, %81 : vector<16x32xf32>
    %83 = vector.extract_strided_slice %28 {offsets = [0, 16], sizes = [16, 8], strides = [1, 1]} : vector<16x32xf32> to vector<16x8xf32>
    %84 = vector.shape_cast %83 : vector<16x8xf32> to vector<2x8x8xf32>
    %85 = vector.extract_strided_slice %32 {offsets = [0, 16], sizes = [32, 8], strides = [1, 1]} : vector<32x32xf32> to vector<32x8xf32>
    %86 = vector.shape_cast %85 : vector<32x8xf32> to vector<2x16x8xf32>
    %87 = vector.extract_strided_slice %33 {offsets = [0, 16], sizes = [32, 8], strides = [1, 1]} : vector<32x32xf32> to vector<32x8xf32>
    %88 = vector.shape_cast %87 : vector<32x8xf32> to vector<2x16x8xf32>
    "tpu.trace_start"() <{level = 10 : i32, message = "bqd,bkd->bqk"}> : () -> ()
    %cst_38 = arith.constant dense<0.000000e+00> : vector<2x8x16xf32>
    %89 = tpu.matmul %84, %86, %cst_38 {dimension_numbers = #tpu.dot_dimension_numbers<[2], [2], [1], [1], [0, 0, 0, 1, 1, 1], [0], [0]>} : vector<2x8x8xf32>, vector<2x16x8xf32>, vector<2x8x16xf32> -> vector<2x8x16xf32>
    "tpu.trace_stop"() : () -> ()
    %90 = vector.broadcast %4 : vector<2x1x16xf32> to vector<2x8x16xf32>
    %91 = arith.addf %89, %90 : vector<2x8x16xf32>
    %cst_39 = arith.constant dense<0xFF800000> : vector<2x8xf32>
    %92 = vector.multi_reduction <maximumf>, %91, %cst_39 [2] : vector<2x8x16xf32> to vector<2x8xf32>
    %93 = vector.shape_cast %92 : vector<2x8xf32> to vector<2x8x1xf32>
    %94 = vector.broadcast %93 : vector<2x8x1xf32> to vector<2x8x16xf32>
    %95 = arith.subf %91, %94 : vector<2x8x16xf32>
    %96 = math.exp %95 : vector<2x8x16xf32>
    %cst_40 = arith.constant dense<0.000000e+00> : vector<2x8xf32>
    %97 = vector.multi_reduction <add>, %96, %cst_40 [2] : vector<2x8x16xf32> to vector<2x8xf32>
    %98 = vector.shape_cast %97 : vector<2x8xf32> to vector<2x8x1xf32>
    %99 = tpu.reciprocal %98 : vector<2x8x1xf32> -> vector<2x8x1xf32>
    %100 = vector.broadcast %99 : vector<2x8x1xf32> to vector<2x8x16xf32>
    %101 = arith.mulf %96, %100 : vector<2x8x16xf32>
    "tpu.trace_start"() <{level = 10 : i32, message = "bqk,bkd->bqd"}> : () -> ()
    %cst_41 = arith.constant dense<0.000000e+00> : vector<2x8x8xf32>
    %102 = tpu.matmul %101, %88, %cst_41 {dimension_numbers = #tpu.dot_dimension_numbers<[2], [1], [1], [2], [0, 0, 0, 1, 1, 2], [0], [0]>} : vector<2x8x16xf32>, vector<2x16x8xf32>, vector<2x8x8xf32> -> vector<2x8x8xf32>
    "tpu.trace_stop"() : () -> ()
    %103 = vector.shape_cast %102 : vector<2x8x8xf32> to vector<16x8xf32>
    %104 = vector.extract_strided_slice %10 {offsets = [16, 0], sizes = [8, 32], strides = [1, 1]} : vector<32x32xf32> to vector<8x32xf32>
    %cst_42 = arith.constant dense<0.000000e+00> : vector<16x32xf32>
    %105 = tpu.matmul %103, %104, %cst_42 {dimension_numbers = #tpu.dot_dimension_numbers<[1], [0], [0], [1], [0, 0, 1, 1], [], []>} : vector<16x8xf32>, vector<8x32xf32>, vector<16x32xf32> -> vector<16x32xf32>
    %106 = arith.addf %82, %105 : vector<16x32xf32>
    %107 = vector.extract_strided_slice %28 {offsets = [0, 24], sizes = [16, 8], strides = [1, 1]} : vector<16x32xf32> to vector<16x8xf32>
    %108 = vector.shape_cast %107 : vector<16x8xf32> to vector<2x8x8xf32>
    %109 = vector.extract_strided_slice %32 {offsets = [0, 24], sizes = [32, 8], strides = [1, 1]} : vector<32x32xf32> to vector<32x8xf32>
    %110 = vector.shape_cast %109 : vector<32x8xf32> to vector<2x16x8xf32>
    %111 = vector.extract_strided_slice %33 {offsets = [0, 24], sizes = [32, 8], strides = [1, 1]} : vector<32x32xf32> to vector<32x8xf32>
    %112 = vector.shape_cast %111 : vector<32x8xf32> to vector<2x16x8xf32>
    "tpu.trace_start"() <{level = 10 : i32, message = "bqd,bkd->bqk"}> : () -> ()
    %cst_43 = arith.constant dense<0.000000e+00> : vector<2x8x16xf32>
    %113 = tpu.matmul %108, %110, %cst_43 {dimension_numbers = #tpu.dot_dimension_numbers<[2], [2], [1], [1], [0, 0, 0, 1, 1, 1], [0], [0]>} : vector<2x8x8xf32>, vector<2x16x8xf32>, vector<2x8x16xf32> -> vector<2x8x16xf32>
    "tpu.trace_stop"() : () -> ()
    %114 = vector.broadcast %4 : vector<2x1x16xf32> to vector<2x8x16xf32>
    %115 = arith.addf %113, %114 : vector<2x8x16xf32>
    %cst_44 = arith.constant dense<0xFF800000> : vector<2x8xf32>
    %116 = vector.multi_reduction <maximumf>, %115, %cst_44 [2] : vector<2x8x16xf32> to vector<2x8xf32>
    %117 = vector.shape_cast %116 : vector<2x8xf32> to vector<2x8x1xf32>
    %118 = vector.broadcast %117 : vector<2x8x1xf32> to vector<2x8x16xf32>
    %119 = arith.subf %115, %118 : vector<2x8x16xf32>
    %120 = math.exp %119 : vector<2x8x16xf32>
    %cst_45 = arith.constant dense<0.000000e+00> : vector<2x8xf32>
    %121 = vector.multi_reduction <add>, %120, %cst_45 [2] : vector<2x8x16xf32> to vector<2x8xf32>
    %122 = vector.shape_cast %121 : vector<2x8xf32> to vector<2x8x1xf32>
    %123 = tpu.reciprocal %122 : vector<2x8x1xf32> -> vector<2x8x1xf32>
    %124 = vector.broadcast %123 : vector<2x8x1xf32> to vector<2x8x16xf32>
    %125 = arith.mulf %120, %124 : vector<2x8x16xf32>
    "tpu.trace_start"() <{level = 10 : i32, message = "bqk,bkd->bqd"}> : () -> ()
    %cst_46 = arith.constant dense<0.000000e+00> : vector<2x8x8xf32>
    %126 = tpu.matmul %125, %112, %cst_46 {dimension_numbers = #tpu.dot_dimension_numbers<[2], [1], [1], [2], [0, 0, 0, 1, 1, 2], [0], [0]>} : vector<2x8x16xf32>, vector<2x16x8xf32>, vector<2x8x8xf32> -> vector<2x8x8xf32>
    "tpu.trace_stop"() : () -> ()
    %127 = vector.shape_cast %126 : vector<2x8x8xf32> to vector<16x8xf32>
    %128 = vector.extract_strided_slice %10 {offsets = [24, 0], sizes = [8, 32], strides = [1, 1]} : vector<32x32xf32> to vector<8x32xf32>
    %cst_47 = arith.constant dense<0.000000e+00> : vector<16x32xf32>
    %129 = tpu.matmul %127, %128, %cst_47 {dimension_numbers = #tpu.dot_dimension_numbers<[1], [0], [0], [1], [0, 0, 1, 1], [], []>} : vector<16x8xf32>, vector<8x32xf32>, vector<16x32xf32> -> vector<16x32xf32>
    %130 = arith.addf %106, %129 : vector<16x32xf32>
    %131 = vector.broadcast %19 : vector<1x32xf32> to vector<16x32xf32>
    %132 = arith.addf %130, %131 : vector<16x32xf32>
    %133 = arith.addf %132, %1 : vector<16x32xf32>
    %cst_48 = arith.constant dense<0.000000e+00> : vector<16xf32>
    %134 = vector.multi_reduction <add>, %133, %cst_48 [1] : vector<16x32xf32> to vector<16xf32>
    %135 = vector.shape_cast %134 : vector<16xf32> to vector<16x1xf32>
    %cst_49 = arith.constant 3.200000e+01 : f32
    %136 = vector.broadcast %cst_49 : f32 to vector<16x1xf32>
    %137 = arith.divf %135, %136 : vector<16x1xf32>
    %138 = vector.broadcast %137 : vector<16x1xf32> to vector<16x32xf32>
    %139 = arith.subf %133, %138 : vector<16x32xf32>
    %140 = arith.mulf %139, %139 : vector<16x32xf32>
    %cst_50 = arith.constant dense<0.000000e+00> : vector<16xf32>
    %141 = vector.multi_reduction <add>, %140, %cst_50 [1] : vector<16x32xf32> to vector<16xf32>
    %142 = vector.shape_cast %141 : vector<16xf32> to vector<16x1xf32>
    %cst_51 = arith.constant 3.200000e+01 : f32
    %143 = vector.broadcast %cst_51 : f32 to vector<16x1xf32>
    %144 = arith.divf %142, %143 : vector<16x1xf32>
    %145 = vector.broadcast %137 : vector<16x1xf32> to vector<16x32xf32>
    %146 = arith.subf %133, %145 : vector<16x32xf32>
    %cst_52 = arith.constant 9.99999996E-13 : f32
    %147 = vector.broadcast %cst_52 : f32 to vector<16x1xf32>
    %148 = arith.addf %144, %147 : vector<16x1xf32>
    %149 = math.sqrt %148 : vector<16x1xf32>
    %150 = vector.broadcast %149 : vector<16x1xf32> to vector<16x32xf32>
    %151 = arith.divf %146, %150 : vector<16x32xf32>
    %152 = vector.broadcast %20 : vector<1x32xf32> to vector<16x32xf32>
    %153 = arith.mulf %151, %152 : vector<16x32xf32>
    %154 = vector.broadcast %21 : vector<1x32xf32> to vector<16x32xf32>
    %155 = arith.addf %153, %154 : vector<16x32xf32>
    %cst_53 = arith.constant dense<0.000000e+00> : vector<16x64xf32>
    %156 = tpu.matmul %155, %12, %cst_53 {dimension_numbers = #tpu.dot_dimension_numbers<[1], [0], [0], [1], [0, 0, 1, 1], [], []>} : vector<16x32xf32>, vector<32x64xf32>, vector<16x64xf32> -> vector<16x64xf32>
    %157 = vector.broadcast %22 : vector<1x64xf32> to vector<16x64xf32>
    %158 = arith.addf %156, %157 : vector<16x64xf32>
    %cst_54 = arith.constant 5.000000e-01 : f32
    %159 = vector.broadcast %cst_54 : f32 to vector<16x64xf32>
    %160 = arith.mulf %158, %159 : vector<16x64xf32>
    %cst_55 = arith.constant 1.41421354 : f32
    %161 = vector.broadcast %cst_55 : f32 to vector<16x64xf32>
    %162 = arith.divf %158, %161 : vector<16x64xf32>
    %163 = math.erf %162 : vector<16x64xf32>
    %cst_56 = arith.constant 1.000000e+00 : f32
    %164 = vector.broadcast %cst_56 : f32 to vector<16x64xf32>
    %165 = arith.addf %164, %163 : vector<16x64xf32>
    %166 = arith.mulf %160, %165 : vector<16x64xf32>
    %cst_57 = arith.constant dense<0.000000e+00> : vector<16x32xf32>
    %167 = tpu.matmul %166, %14, %cst_57 {dimension_numbers = #tpu.dot_dimension_numbers<[1], [0], [0], [1], [0, 0, 1, 1], [], []>} : vector<16x64xf32>, vector<64x32xf32>, vector<16x32xf32> -> vector<16x32xf32>
    %168 = vector.broadcast %23 : vector<1x32xf32> to vector<16x32xf32>
    %169 = arith.addf %167, %168 : vector<16x32xf32>
    %170 = arith.addf %169, %155 : vector<16x32xf32>
    %cst_58 = arith.constant dense<0.000000e+00> : vector<16xf32>
    %171 = vector.multi_reduction <add>, %170, %cst_58 [1] : vector<16x32xf32> to vector<16xf32>
    %172 = vector.shape_cast %171 : vector<16xf32> to vector<16x1xf32>
    %cst_59 = arith.constant 3.200000e+01 : f32
    %173 = vector.broadcast %cst_59 : f32 to vector<16x1xf32>
    %174 = arith.divf %172, %173 : vector<16x1xf32>
    %175 = vector.broadcast %174 : vector<16x1xf32> to vector<16x32xf32>
    %176 = arith.subf %170, %175 : vector<16x32xf32>
    %177 = arith.mulf %176, %176 : vector<16x32xf32>
    %cst_60 = arith.constant dense<0.000000e+00> : vector<16xf32>
    %178 = vector.multi_reduction <add>, %177, %cst_60 [1] : vector<16x32xf32> to vector<16xf32>
    %179 = vector.shape_cast %178 : vector<16xf32> to vector<16x1xf32>
    %cst_61 = arith.constant 3.200000e+01 : f32
    %180 = vector.broadcast %cst_61 : f32 to vector<16x1xf32>
    %181 = arith.divf %179, %180 : vector<16x1xf32>
    %182 = vector.broadcast %174 : vector<16x1xf32> to vector<16x32xf32>
    %183 = arith.subf %170, %182 : vector<16x32xf32>
    %cst_62 = arith.constant 9.99999996E-13 : f32
    %184 = vector.broadcast %cst_62 : f32 to vector<16x1xf32>
    %185 = arith.addf %181, %184 : vector<16x1xf32>
    %186 = math.sqrt %185 : vector<16x1xf32>
    %187 = vector.broadcast %186 : vector<16x1xf32> to vector<16x32xf32>
    %188 = arith.divf %183, %187 : vector<16x32xf32>
    %189 = vector.broadcast %24 : vector<1x32xf32> to vector<16x32xf32>
    %190 = arith.mulf %188, %189 : vector<16x32xf32>
    %191 = vector.broadcast %25 : vector<1x32xf32> to vector<16x32xf32>
    %192 = arith.addf %190, %191 : vector<16x32xf32>
    %c0_63 = arith.constant 0 : index
    %c0_64 = arith.constant 0 : index
    %c0_65 = arith.constant 0 : index
    %193 = vector.load %arg9[%c0_63, %c0_64, %c0_65] : memref<2x16x32xf32, #tpu.memory_space<vmem>>, vector<1x16x32xf32>
    %194 = vector.shape_cast %193 : vector<1x16x32xf32> to vector<16x32xf32>
    %195 = vector.shape_cast %192 : vector<16x32xf32> to vector<1x16x32xf32>
    tpu.vector_store %arg9[%c0_63, %c0_64, %c0_65], %195 {strides = array<i32>} : memref<2x16x32xf32, #tpu.memory_space<vmem>>, vector<1x16x32xf32>,
    %c1 = arith.constant 1 : index
    %c0_66 = arith.constant 0 : index
    %c0_67 = arith.constant 0 : index
    %196 = vector.load %arg3[%c1, %c0_66, %c0_67] : memref<2x32x32xf32, #tpu.memory_space<vmem>>, vector<1x32x32xf32>
    %197 = vector.shape_cast %196 : vector<1x32x32xf32> to vector<32x32xf32>
    %c1_68 = arith.constant 1 : index
    %c0_69 = arith.constant 0 : index
    %c0_70 = arith.constant 0 : index
    %198 = vector.load %arg4[%c1_68, %c0_69, %c0_70] : memref<2x32x64xf32, #tpu.memory_space<vmem>>, vector<1x32x64xf32>
    %199 = vector.shape_cast %198 : vector<1x32x64xf32> to vector<32x64xf32>
    %c1_71 = arith.constant 1 : index
    %c0_72 = arith.constant 0 : index
    %c0_73 = arith.constant 0 : index
    %200 = vector.load %arg5[%c1_71, %c0_72, %c0_73] : memref<2x32x32xf32, #tpu.memory_space<vmem>>, vector<1x32x32xf32>
    %201 = vector.shape_cast %200 : vector<1x32x32xf32> to vector<32x32xf32>
    %c1_74 = arith.constant 1 : index
    %c0_75 = arith.constant 0 : index
    %c0_76 = arith.constant 0 : index
    %202 = vector.load %arg6[%c1_74, %c0_75, %c0_76] : memref<2x32x64xf32, #tpu.memory_space<vmem>>, vector<1x32x64xf32>
    %203 = vector.shape_cast %202 : vector<1x32x64xf32> to vector<32x64xf32>
    %c1_77 = arith.constant 1 : index
    %c0_78 = arith.constant 0 : index
    %c0_79 = arith.constant 0 : index
    %204 = vector.load %arg7[%c1_77, %c0_78, %c0_79] : memref<2x64x32xf32, #tpu.memory_space<vmem>>, vector<1x64x32xf32>
    %205 = vector.shape_cast %204 : vector<1x64x32xf32> to vector<64x32xf32>
    %c1_80 = arith.constant 1 : index
    %c0_81 = arith.constant 0 : index
    %c0_82 = arith.constant 0 : index
    %206 = vector.load %arg8[%c1_80, %c0_81, %c0_82] : memref<2x9x64xf32, #tpu.memory_space<vmem>>, vector<1x9x64xf32>
    %207 = vector.shape_cast %206 : vector<1x9x64xf32> to vector<9x64xf32>
    %208 = vector.extract_strided_slice %207 {offsets = [0, 0], sizes = [1, 32], strides = [1, 1]} : vector<9x64xf32> to vector<1x32xf32>
    %209 = vector.extract_strided_slice %207 {offsets = [1, 0], sizes = [1, 64], strides = [1, 1]} : vector<9x64xf32> to vector<1x64xf32>
    %210 = vector.extract_strided_slice %207 {offsets = [2, 0], sizes = [1, 32], strides = [1, 1]} : vector<9x64xf32> to vector<1x32xf32>
    %211 = vector.extract_strided_slice %207 {offsets = [3, 0], sizes = [1, 32], strides = [1, 1]} : vector<9x64xf32> to vector<1x32xf32>
    %212 = vector.extract_strided_slice %207 {offsets = [4, 0], sizes = [1, 32], strides = [1, 1]} : vector<9x64xf32> to vector<1x32xf32>
    %213 = vector.extract_strided_slice %207 {offsets = [5, 0], sizes = [1, 64], strides = [1, 1]} : vector<9x64xf32> to vector<1x64xf32>
    %214 = vector.extract_strided_slice %207 {offsets = [6, 0], sizes = [1, 32], strides = [1, 1]} : vector<9x64xf32> to vector<1x32xf32>
    %215 = vector.extract_strided_slice %207 {offsets = [7, 0], sizes = [1, 32], strides = [1, 1]} : vector<9x64xf32> to vector<1x32xf32>
    %216 = vector.extract_strided_slice %207 {offsets = [8, 0], sizes = [1, 32], strides = [1, 1]} : vector<9x64xf32> to vector<1x32xf32>
    %cst_83 = arith.constant dense<0.000000e+00> : vector<16x32xf32>
    %217 = tpu.matmul %192, %197, %cst_83 {dimension_numbers = #tpu.dot_dimension_numbers<[1], [0], [0], [1], [0, 0, 1, 1], [], []>} : vector<16x32xf32>, vector<32x32xf32>, vector<16x32xf32> -> vector<16x32xf32>
    %218 = vector.broadcast %208 : vector<1x32xf32> to vector<16x32xf32>
    %219 = arith.addf %217, %218 : vector<16x32xf32>
    %cst_84 = arith.constant dense<0.000000e+00> : vector<32x64xf32>
    %220 = tpu.matmul %3, %199, %cst_84 {dimension_numbers = #tpu.dot_dimension_numbers<[1], [0], [0], [1], [0, 0, 1, 1], [], []>} : vector<32x32xf32>, vector<32x64xf32>, vector<32x64xf32> -> vector<32x64xf32>
    %221 = vector.broadcast %209 : vector<1x64xf32> to vector<32x64xf32>
    %222 = arith.addf %220, %221 : vector<32x64xf32>
    %223 = vector.extract_strided_slice %222 {offsets = [0, 0], sizes = [32, 32], strides = [1, 1]} : vector<32x64xf32> to vector<32x32xf32>
    %224 = vector.extract_strided_slice %222 {offsets = [0, 32], sizes = [32, 32], strides = [1, 1]} : vector<32x64xf32> to vector<32x32xf32>
    %cst_85 = arith.constant 0.000000e+00 : f32
    %225 = vector.broadcast %cst_85 : f32 to vector<16x32xf32>
    %226 = vector.extract_strided_slice %219 {offsets = [0, 0], sizes = [16, 8], strides = [1, 1]} : vector<16x32xf32> to vector<16x8xf32>
    %227 = vector.shape_cast %226 : vector<16x8xf32> to vector<2x8x8xf32>
    %228 = vector.extract_strided_slice %223 {offsets = [0, 0], sizes = [32, 8], strides = [1, 1]} : vector<32x32xf32> to vector<32x8xf32>
    %229 = vector.shape_cast %228 : vector<32x8xf32> to vector<2x16x8xf32>
    %230 = vector.extract_strided_slice %224 {offsets = [0, 0], sizes = [32, 8], strides = [1, 1]} : vector<32x32xf32> to vector<32x8xf32>
    %231 = vector.shape_cast %230 : vector<32x8xf32> to vector<2x16x8xf32>
    "tpu.trace_start"() <{level = 10 : i32, message = "bqd,bkd->bqk"}> : () -> ()
    %cst_86 = arith.constant dense<0.000000e+00> : vector<2x8x16xf32>
    %232 = tpu.matmul %227, %229, %cst_86 {dimension_numbers = #tpu.dot_dimension_numbers<[2], [2], [1], [1], [0, 0, 0, 1, 1, 1], [0], [0]>} : vector<2x8x8xf32>, vector<2x16x8xf32>, vector<2x8x16xf32> -> vector<2x8x16xf32>
    "tpu.trace_stop"() : () -> ()
    %233 = vector.broadcast %4 : vector<2x1x16xf32> to vector<2x8x16xf32>
    %234 = arith.addf %232, %233 : vector<2x8x16xf32>
    %cst_87 = arith.constant dense<0xFF800000> : vector<2x8xf32>
    %235 = vector.multi_reduction <maximumf>, %234, %cst_87 [2] : vector<2x8x16xf32> to vector<2x8xf32>
    %236 = vector.shape_cast %235 : vector<2x8xf32> to vector<2x8x1xf32>
    %237 = vector.broadcast %236 : vector<2x8x1xf32> to vector<2x8x16xf32>
    %238 = arith.subf %234, %237 : vector<2x8x16xf32>
    %239 = math.exp %238 : vector<2x8x16xf32>
    %cst_88 = arith.constant dense<0.000000e+00> : vector<2x8xf32>
    %240 = vector.multi_reduction <add>, %239, %cst_88 [2] : vector<2x8x16xf32> to vector<2x8xf32>
    %241 = vector.shape_cast %240 : vector<2x8xf32> to vector<2x8x1xf32>
    %242 = tpu.reciprocal %241 : vector<2x8x1xf32> -> vector<2x8x1xf32>
    %243 = vector.broadcast %242 : vector<2x8x1xf32> to vector<2x8x16xf32>
    %244 = arith.mulf %239, %243 : vector<2x8x16xf32>
    "tpu.trace_start"() <{level = 10 : i32, message = "bqk,bkd->bqd"}> : () -> ()
    %cst_89 = arith.constant dense<0.000000e+00> : vector<2x8x8xf32>
    %245 = tpu.matmul %244, %231, %cst_89 {dimension_numbers = #tpu.dot_dimension_numbers<[2], [1], [1], [2], [0, 0, 0, 1, 1, 2], [0], [0]>} : vector<2x8x16xf32>, vector<2x16x8xf32>, vector<2x8x8xf32> -> vector<2x8x8xf32>
    "tpu.trace_stop"() : () -> ()
    %246 = vector.shape_cast %245 : vector<2x8x8xf32> to vector<16x8xf32>
    %247 = vector.extract_strided_slice %201 {offsets = [0, 0], sizes = [8, 32], strides = [1, 1]} : vector<32x32xf32> to vector<8x32xf32>
    %cst_90 = arith.constant dense<0.000000e+00> : vector<16x32xf32>
    %248 = tpu.matmul %246, %247, %cst_90 {dimension_numbers = #tpu.dot_dimension_numbers<[1], [0], [0], [1], [0, 0, 1, 1], [], []>} : vector<16x8xf32>, vector<8x32xf32>, vector<16x32xf32> -> vector<16x32xf32>
    %249 = arith.addf %225, %248 : vector<16x32xf32>
    %250 = vector.extract_strided_slice %219 {offsets = [0, 8], sizes = [16, 8], strides = [1, 1]} : vector<16x32xf32> to vector<16x8xf32>
    %251 = vector.shape_cast %250 : vector<16x8xf32> to vector<2x8x8xf32>
    %252 = vector.extract_strided_slice %223 {offsets = [0, 8], sizes = [32, 8], strides = [1, 1]} : vector<32x32xf32> to vector<32x8xf32>
    %253 = vector.shape_cast %252 : vector<32x8xf32> to vector<2x16x8xf32>
    %254 = vector.extract_strided_slice %224 {offsets = [0, 8], sizes = [32, 8], strides = [1, 1]} : vector<32x32xf32> to vector<32x8xf32>
    %255 = vector.shape_cast %254 : vector<32x8xf32> to vector<2x16x8xf32>
    "tpu.trace_start"() <{level = 10 : i32, message = "bqd,bkd->bqk"}> : () -> ()
    %cst_91 = arith.constant dense<0.000000e+00> : vector<2x8x16xf32>
    %256 = tpu.matmul %251, %253, %cst_91 {dimension_numbers = #tpu.dot_dimension_numbers<[2], [2], [1], [1], [0, 0, 0, 1, 1, 1], [0], [0]>} : vector<2x8x8xf32>, vector<2x16x8xf32>, vector<2x8x16xf32> -> vector<2x8x16xf32>
    "tpu.trace_stop"() : () -> ()
    %257 = vector.broadcast %4 : vector<2x1x16xf32> to vector<2x8x16xf32>
    %258 = arith.addf %256, %257 : vector<2x8x16xf32>
    %cst_92 = arith.constant dense<0xFF800000> : vector<2x8xf32>
    %259 = vector.multi_reduction <maximumf>, %258, %cst_92 [2] : vector<2x8x16xf32> to vector<2x8xf32>
    %260 = vector.shape_cast %259 : vector<2x8xf32> to vector<2x8x1xf32>
    %261 = vector.broadcast %260 : vector<2x8x1xf32> to vector<2x8x16xf32>
    %262 = arith.subf %258, %261 : vector<2x8x16xf32>
    %263 = math.exp %262 : vector<2x8x16xf32>
    %cst_93 = arith.constant dense<0.000000e+00> : vector<2x8xf32>
    %264 = vector.multi_reduction <add>, %263, %cst_93 [2] : vector<2x8x16xf32> to vector<2x8xf32>
    %265 = vector.shape_cast %264 : vector<2x8xf32> to vector<2x8x1xf32>
    %266 = tpu.reciprocal %265 : vector<2x8x1xf32> -> vector<2x8x1xf32>
    %267 = vector.broadcast %266 : vector<2x8x1xf32> to vector<2x8x16xf32>
    %268 = arith.mulf %263, %267 : vector<2x8x16xf32>
    "tpu.trace_start"() <{level = 10 : i32, message = "bqk,bkd->bqd"}> : () -> ()
    %cst_94 = arith.constant dense<0.000000e+00> : vector<2x8x8xf32>
    %269 = tpu.matmul %268, %255, %cst_94 {dimension_numbers = #tpu.dot_dimension_numbers<[2], [1], [1], [2], [0, 0, 0, 1, 1, 2], [0], [0]>} : vector<2x8x16xf32>, vector<2x16x8xf32>, vector<2x8x8xf32> -> vector<2x8x8xf32>
    "tpu.trace_stop"() : () -> ()
    %270 = vector.shape_cast %269 : vector<2x8x8xf32> to vector<16x8xf32>
    %271 = vector.extract_strided_slice %201 {offsets = [8, 0], sizes = [8, 32], strides = [1, 1]} : vector<32x32xf32> to vector<8x32xf32>
    %cst_95 = arith.constant dense<0.000000e+00> : vector<16x32xf32>
    %272 = tpu.matmul %270, %271, %cst_95 {dimension_numbers = #tpu.dot_dimension_numbers<[1], [0], [0], [1], [0, 0, 1, 1], [], []>} : vector<16x8xf32>, vector<8x32xf32>, vector<16x32xf32> -> vector<16x32xf32>
    %273 = arith.addf %249, %272 : vector<16x32xf32>
    %274 = vector.extract_strided_slice %219 {offsets = [0, 16], sizes = [16, 8], strides = [1, 1]} : vector<16x32xf32> to vector<16x8xf32>
    %275 = vector.shape_cast %274 : vector<16x8xf32> to vector<2x8x8xf32>
    %276 = vector.extract_strided_slice %223 {offsets = [0, 16], sizes = [32, 8], strides = [1, 1]} : vector<32x32xf32> to vector<32x8xf32>
    %277 = vector.shape_cast %276 : vector<32x8xf32> to vector<2x16x8xf32>
    %278 = vector.extract_strided_slice %224 {offsets = [0, 16], sizes = [32, 8], strides = [1, 1]} : vector<32x32xf32> to vector<32x8xf32>
    %279 = vector.shape_cast %278 : vector<32x8xf32> to vector<2x16x8xf32>
    "tpu.trace_start"() <{level = 10 : i32, message = "bqd,bkd->bqk"}> : () -> ()
    %cst_96 = arith.constant dense<0.000000e+00> : vector<2x8x16xf32>
    %280 = tpu.matmul %275, %277, %cst_96 {dimension_numbers = #tpu.dot_dimension_numbers<[2], [2], [1], [1], [0, 0, 0, 1, 1, 1], [0], [0]>} : vector<2x8x8xf32>, vector<2x16x8xf32>, vector<2x8x16xf32> -> vector<2x8x16xf32>
    "tpu.trace_stop"() : () -> ()
    %281 = vector.broadcast %4 : vector<2x1x16xf32> to vector<2x8x16xf32>
    %282 = arith.addf %280, %281 : vector<2x8x16xf32>
    %cst_97 = arith.constant dense<0xFF800000> : vector<2x8xf32>
    %283 = vector.multi_reduction <maximumf>, %282, %cst_97 [2] : vector<2x8x16xf32> to vector<2x8xf32>
    %284 = vector.shape_cast %283 : vector<2x8xf32> to vector<2x8x1xf32>
    %285 = vector.broadcast %284 : vector<2x8x1xf32> to vector<2x8x16xf32>
    %286 = arith.subf %282, %285 : vector<2x8x16xf32>
    %287 = math.exp %286 : vector<2x8x16xf32>
    %cst_98 = arith.constant dense<0.000000e+00> : vector<2x8xf32>
    %288 = vector.multi_reduction <add>, %287, %cst_98 [2] : vector<2x8x16xf32> to vector<2x8xf32>
    %289 = vector.shape_cast %288 : vector<2x8xf32> to vector<2x8x1xf32>
    %290 = tpu.reciprocal %289 : vector<2x8x1xf32> -> vector<2x8x1xf32>
    %291 = vector.broadcast %290 : vector<2x8x1xf32> to vector<2x8x16xf32>
    %292 = arith.mulf %287, %291 : vector<2x8x16xf32>
    "tpu.trace_start"() <{level = 10 : i32, message = "bqk,bkd->bqd"}> : () -> ()
    %cst_99 = arith.constant dense<0.000000e+00> : vector<2x8x8xf32>
    %293 = tpu.matmul %292, %279, %cst_99 {dimension_numbers = #tpu.dot_dimension_numbers<[2], [1], [1], [2], [0, 0, 0, 1, 1, 2], [0], [0]>} : vector<2x8x16xf32>, vector<2x16x8xf32>, vector<2x8x8xf32> -> vector<2x8x8xf32>
    "tpu.trace_stop"() : () -> ()
    %294 = vector.shape_cast %293 : vector<2x8x8xf32> to vector<16x8xf32>
    %295 = vector.extract_strided_slice %201 {offsets = [16, 0], sizes = [8, 32], strides = [1, 1]} : vector<32x32xf32> to vector<8x32xf32>
    %cst_100 = arith.constant dense<0.000000e+00> : vector<16x32xf32>
    %296 = tpu.matmul %294, %295, %cst_100 {dimension_numbers = #tpu.dot_dimension_numbers<[1], [0], [0], [1], [0, 0, 1, 1], [], []>} : vector<16x8xf32>, vector<8x32xf32>, vector<16x32xf32> -> vector<16x32xf32>
    %297 = arith.addf %273, %296 : vector<16x32xf32>
    %298 = vector.extract_strided_slice %219 {offsets = [0, 24], sizes = [16, 8], strides = [1, 1]} : vector<16x32xf32> to vector<16x8xf32>
    %299 = vector.shape_cast %298 : vector<16x8xf32> to vector<2x8x8xf32>
    %300 = vector.extract_strided_slice %223 {offsets = [0, 24], sizes = [32, 8], strides = [1, 1]} : vector<32x32xf32> to vector<32x8xf32>
    %301 = vector.shape_cast %300 : vector<32x8xf32> to vector<2x16x8xf32>
    %302 = vector.extract_strided_slice %224 {offsets = [0, 24], sizes = [32, 8], strides = [1, 1]} : vector<32x32xf32> to vector<32x8xf32>
    %303 = vector.shape_cast %302 : vector<32x8xf32> to vector<2x16x8xf32>
    "tpu.trace_start"() <{level = 10 : i32, message = "bqd,bkd->bqk"}> : () -> ()
    %cst_101 = arith.constant dense<0.000000e+00> : vector<2x8x16xf32>
    %304 = tpu.matmul %299, %301, %cst_101 {dimension_numbers = #tpu.dot_dimension_numbers<[2], [2], [1], [1], [0, 0, 0, 1, 1, 1], [0], [0]>} : vector<2x8x8xf32>, vector<2x16x8xf32>, vector<2x8x16xf32> -> vector<2x8x16xf32>
    "tpu.trace_stop"() : () -> ()
    %305 = vector.broadcast %4 : vector<2x1x16xf32> to vector<2x8x16xf32>
    %306 = arith.addf %304, %305 : vector<2x8x16xf32>
    %cst_102 = arith.constant dense<0xFF800000> : vector<2x8xf32>
    %307 = vector.multi_reduction <maximumf>, %306, %cst_102 [2] : vector<2x8x16xf32> to vector<2x8xf32>
    %308 = vector.shape_cast %307 : vector<2x8xf32> to vector<2x8x1xf32>
    %309 = vector.broadcast %308 : vector<2x8x1xf32> to vector<2x8x16xf32>
    %310 = arith.subf %306, %309 : vector<2x8x16xf32>
    %311 = math.exp %310 : vector<2x8x16xf32>
    %cst_103 = arith.constant dense<0.000000e+00> : vector<2x8xf32>
    %312 = vector.multi_reduction <add>, %311, %cst_103 [2] : vector<2x8x16xf32> to vector<2x8xf32>
    %313 = vector.shape_cast %312 : vector<2x8xf32> to vector<2x8x1xf32>
    %314 = tpu.reciprocal %313 : vector<2x8x1xf32> -> vector<2x8x1xf32>
    %315 = vector.broadcast %314 : vector<2x8x1xf32> to vector<2x8x16xf32>
    %316 = arith.mulf %311, %315 : vector<2x8x16xf32>
    "tpu.trace_start"() <{level = 10 : i32, message = "bqk,bkd->bqd"}> : () -> ()
    %cst_104 = arith.constant dense<0.000000e+00> : vector<2x8x8xf32>
    %317 = tpu.matmul %316, %303, %cst_104 {dimension_numbers = #tpu.dot_dimension_numbers<[2], [1], [1], [2], [0, 0, 0, 1, 1, 2], [0], [0]>} : vector<2x8x16xf32>, vector<2x16x8xf32>, vector<2x8x8xf32> -> vector<2x8x8xf32>
    "tpu.trace_stop"() : () -> ()
    %318 = vector.shape_cast %317 : vector<2x8x8xf32> to vector<16x8xf32>
    %319 = vector.extract_strided_slice %201 {offsets = [24, 0], sizes = [8, 32], strides = [1, 1]} : vector<32x32xf32> to vector<8x32xf32>
    %cst_105 = arith.constant dense<0.000000e+00> : vector<16x32xf32>
    %320 = tpu.matmul %318, %319, %cst_105 {dimension_numbers = #tpu.dot_dimension_numbers<[1], [0], [0], [1], [0, 0, 1, 1], [], []>} : vector<16x8xf32>, vector<8x32xf32>, vector<16x32xf32> -> vector<16x32xf32>
    %321 = arith.addf %297, %320 : vector<16x32xf32>
    %322 = vector.broadcast %210 : vector<1x32xf32> to vector<16x32xf32>
    %323 = arith.addf %321, %322 : vector<16x32xf32>
    %324 = arith.addf %323, %192 : vector<16x32xf32>
    %cst_106 = arith.constant dense<0.000000e+00> : vector<16xf32>
    %325 = vector.multi_reduction <add>, %324, %cst_106 [1] : vector<16x32xf32> to vector<16xf32>
    %326 = vector.shape_cast %325 : vector<16xf32> to vector<16x1xf32>
    %cst_107 = arith.constant 3.200000e+01 : f32
    %327 = vector.broadcast %cst_107 : f32 to vector<16x1xf32>
    %328 = arith.divf %326, %327 : vector<16x1xf32>
    %329 = vector.broadcast %328 : vector<16x1xf32> to vector<16x32xf32>
    %330 = arith.subf %324, %329 : vector<16x32xf32>
    %331 = arith.mulf %330, %330 : vector<16x32xf32>
    %cst_108 = arith.constant dense<0.000000e+00> : vector<16xf32>
    %332 = vector.multi_reduction <add>, %331, %cst_108 [1] : vector<16x32xf32> to vector<16xf32>
    %333 = vector.shape_cast %332 : vector<16xf32> to vector<16x1xf32>
    %cst_109 = arith.constant 3.200000e+01 : f32
    %334 = vector.broadcast %cst_109 : f32 to vector<16x1xf32>
    %335 = arith.divf %333, %334 : vector<16x1xf32>
    %336 = vector.broadcast %328 : vector<16x1xf32> to vector<16x32xf32>
    %337 = arith.subf %324, %336 : vector<16x32xf32>
    %cst_110 = arith.constant 9.99999996E-13 : f32
    %338 = vector.broadcast %cst_110 : f32 to vector<16x1xf32>
    %339 = arith.addf %335, %338 : vector<16x1xf32>
    %340 = math.sqrt %339 : vector<16x1xf32>
    %341 = vector.broadcast %340 : vector<16x1xf32> to vector<16x32xf32>
    %342 = arith.divf %337, %341 : vector<16x32xf32>
    %343 = vector.broadcast %211 : vector<1x32xf32> to vector<16x32xf32>
    %344 = arith.mulf %342, %343 : vector<16x32xf32>
    %345 = vector.broadcast %212 : vector<1x32xf32> to vector<16x32xf32>
    %346 = arith.addf %344, %345 : vector<16x32xf32>
    %cst_111 = arith.constant dense<0.000000e+00> : vector<16x64xf32>
    %347 = tpu.matmul %346, %203, %cst_111 {dimension_numbers = #tpu.dot_dimension_numbers<[1], [0], [0], [1], [0, 0, 1, 1], [], []>} : vector<16x32xf32>, vector<32x64xf32>, vector<16x64xf32> -> vector<16x64xf32>
    %348 = vector.broadcast %213 : vector<1x64xf32> to vector<16x64xf32>
    %349 = arith.addf %347, %348 : vector<16x64xf32>
    %cst_112 = arith.constant 5.000000e-01 : f32
    %350 = vector.broadcast %cst_112 : f32 to vector<16x64xf32>
    %351 = arith.mulf %349, %350 : vector<16x64xf32>
    %cst_113 = arith.constant 1.41421354 : f32
    %352 = vector.broadcast %cst_113 : f32 to vector<16x64xf32>
    %353 = arith.divf %349, %352 : vector<16x64xf32>
    %354 = math.erf %353 : vector<16x64xf32>
    %cst_114 = arith.constant 1.000000e+00 : f32
    %355 = vector.broadcast %cst_114 : f32 to vector<16x64xf32>
    %356 = arith.addf %355, %354 : vector<16x64xf32>
    %357 = arith.mulf %351, %356 : vector<16x64xf32>
    %cst_115 = arith.constant dense<0.000000e+00> : vector<16x32xf32>
    %358 = tpu.matmul %357, %205, %cst_115 {dimension_numbers = #tpu.dot_dimension_numbers<[1], [0], [0], [1], [0, 0, 1, 1], [], []>} : vector<16x64xf32>, vector<64x32xf32>, vector<16x32xf32> -> vector<16x32xf32>
    %359 = vector.broadcast %214 : vector<1x32xf32> to vector<16x32xf32>
    %360 = arith.addf %358, %359 : vector<16x32xf32>
    %361 = arith.addf %360, %346 : vector<16x32xf32>
    %cst_116 = arith.constant dense<0.000000e+00> : vector<16xf32>
    %362 = vector.multi_reduction <add>, %361, %cst_116 [1] : vector<16x32xf32> to vector<16xf32>
    %363 = vector.shape_cast %362 : vector<16xf32> to vector<16x1xf32>
    %cst_117 = arith.constant 3.200000e+01 : f32
    %364 = vector.broadcast %cst_117 : f32 to vector<16x1xf32>
    %365 = arith.divf %363, %364 : vector<16x1xf32>
    %366 = vector.broadcast %365 : vector<16x1xf32> to vector<16x32xf32>
    %367 = arith.subf %361, %366 : vector<16x32xf32>
    %368 = arith.mulf %367, %367 : vector<16x32xf32>
    %cst_118 = arith.constant dense<0.000000e+00> : vector<16xf32>
    %369 = vector.multi_reduction <add>, %368, %cst_118 [1] : vector<16x32xf32> to vector<16xf32>
    %370 = vector.shape_cast %369 : vector<16xf32> to vector<16x1xf32>
    %cst_119 = arith.constant 3.200000e+01 : f32
    %371 = vector.broadcast %cst_119 : f32 to vector<16x1xf32>
    %372 = arith.divf %370, %371 : vector<16x1xf32>
    %373 = vector.broadcast %365 : vector<16x1xf32> to vector<16x32xf32>
    %374 = arith.subf %361, %373 : vector<16x32xf32>
    %cst_120 = arith.constant 9.99999996E-13 : f32
    %375 = vector.broadcast %cst_120 : f32 to vector<16x1xf32>
    %376 = arith.addf %372, %375 : vector<16x1xf32>
    %377 = math.sqrt %376 : vector<16x1xf32>
    %378 = vector.broadcast %377 : vector<16x1xf32> to vector<16x32xf32>
    %379 = arith.divf %374, %378 : vector<16x32xf32>
    %380 = vector.broadcast %215 : vector<1x32xf32> to vector<16x32xf32>
    %381 = arith.mulf %379, %380 : vector<16x32xf32>
    %382 = vector.broadcast %216 : vector<1x32xf32> to vector<16x32xf32>
    %383 = arith.addf %381, %382 : vector<16x32xf32>
    %c1_121 = arith.constant 1 : index
    %c0_122 = arith.constant 0 : index
    %c0_123 = arith.constant 0 : index
    %384 = vector.load %arg9[%c1_121, %c0_122, %c0_123] : memref<2x16x32xf32, #tpu.memory_space<vmem>>, vector<1x16x32xf32>
    %385 = vector.shape_cast %384 : vector<1x16x32xf32> to vector<16x32xf32>
    %386 = vector.shape_cast %383 : vector<16x32xf32> to vector<1x16x32xf32>
    tpu.vector_store %arg9[%c1_121, %c0_122, %c0_123], %386 {strides = array<i32>} : memref<2x16x32xf32, #tpu.memory_space<vmem>>, vector<1x16x32xf32>,
    return
  }
}

</mosaic_0001>

<llo_original>
// kernel: tpu_custom_call.1
$region0: #{tpu_custom_call.1}
  #allocation0 [shape = 'u32[]', space=smem, size = 0x4, offset = 0x4, fixed_abs, tag = 'smem constant byte address 0x4 - core index']
  #allocation1 [shape = 'u32[144,128]{1,0:T(1,128)}', space=vmem, size = 0x12000, scoped, tag = 'internal scratch']
  %s0 = inlined_call_operand.hbm [shape: f32[2,8,32], index: 0, kind: input, shape index: {}]
  %s1 = inlined_call_operand.hbm [shape: f32[2,16,32], index: 1, kind: input, shape index: {}]
  %s2 = inlined_call_operand.vmem [shape: f32[2,1,16], index: 2, kind: input, shape index: {}]
  %s3 = inlined_call_operand.vmem [shape: f32[2,32,32], index: 3, kind: input, shape index: {}]
  %s4 = inlined_call_operand.vmem [shape: f32[2,32,64], index: 4, kind: input, shape index: {}]
  %s5 = inlined_call_operand.vmem [shape: f32[2,32,32], index: 5, kind: input, shape index: {}]
  %s6 = inlined_call_operand.hbm [shape: f32[2,32,64], index: 6, kind: input, shape index: {}]
  %s7 = inlined_call_operand.vmem [shape: f32[2,64,32], index: 7, kind: input, shape index: {}]
  %s8 = inlined_call_operand.vmem [shape: f32[2,9,64], index: 8, kind: input, shape index: {}]
  %s9 = inlined_call_operand.hbm [shape: f32[2,16,32], index: 9, kind: output, shape index: {}]
  %s10 = sld [smem:[#allocation0]]
  $region58: #{tpu_custom_call.1} parent=0
    _
  %s12 = ssub.s32 1, %s10
  %s13 = scalar_select 0, %s12, %s10
  $region1: #{tpu_custom_call.1} parent=0
    #allocation2 [shape = 'u8[8192]{0}', space=vmem, size = 0x2000, scoped, tag = 'input window, operand 0, single buffered']
    #allocation3 [shape = 's32[1]{0}', space=sflag, size = 0x4, scoped, tag = 'scoped memory for tpu_custom_call.1']
    #allocation4 [shape = 's32[1]{0}', space=sflag, size = 0x4, scoped, tag = 'scoped memory for tpu_custom_call.1']
    #allocation5 [shape = 'u8[16384]{0}', space=vmem, size = 0x4000, scoped, tag = 'input window, operand 1, single buffered']
    #allocation6 [shape = 's32[1]{0}', space=sflag, size = 0x4, scoped, tag = 'scoped memory for tpu_custom_call.1']
    #allocation7 [shape = 'u8[32768]{0}', space=vmem, size = 0x8000, scoped, tag = 'input window, operand 6, single buffered']
    #allocation8 [shape = 'u8[16384]{0}', space=vmem, size = 0x4000, scoped, tag = 'output window, operand 0, single buffered']
    %14 = vsyncpa [#allocation3], 0
    %15 = vsyncpa [#allocation6], 0
    %16 = vsyncpa [#allocation4], 0
    // Predicated region
    $region2: #{tpu_custom_call.1} parent=1 // pred_check
      _
    $region3: #{tpu_custom_call.1} parent=1 // pred_check_branch
      %18 = sbr.rel (0) target = $region5
    $region4: #{tpu_custom_call.1} parent=1 // pred_region
      %s20 = ssub.s32 256, 256
      %21 = vsyncadd [#allocation3], %s20
      %s22 = sshll.u32 [#allocation2], 4
      %s23 = int_to_ptr.vmem [resolvable:$true] %s22
      %28 = dma.hbm_to_vmem [thread:$0]  %s0, 256, %s23, [#allocation3], 128, 128, 8
    $region5: #{tpu_custom_call.1} parent=1 // pred_fallthru
      _
    // Predicated region
    $region6: #{tpu_custom_call.1} parent=1 // pred_check
      _
    $region7: #{tpu_custom_call.1} parent=1 // pred_check_branch
      %30 = sbr.rel (0) target = $region9
    $region8: #{tpu_custom_call.1} parent=1 // pred_region
      %s32 = ssub.s32 512, 512
      %33 = vsyncadd [#allocation6], %s32
      %s34 = sshll.u32 [#allocation5], 4
      %s35 = int_to_ptr.vmem [resolvable:$true] %s34
      %40 = dma.hbm_to_vmem [thread:$0]  %s1, 512, %s35, [#allocation6], 128, 128, 8
    $region9: #{tpu_custom_call.1} parent=1 // pred_fallthru
      _
    // Predicated region
    $region10: #{tpu_custom_call.1} parent=1 // pred_check
      _
    $region11: #{tpu_custom_call.1} parent=1 // pred_check_branch
      %42 = sbr.rel (0) target = $region13
    $region12: #{tpu_custom_call.1} parent=1 // pred_region
      _
    $region13: #{tpu_custom_call.1} parent=1 // pred_fallthru
      _
    // Predicated region
    $region14: #{tpu_custom_call.1} parent=1 // pred_check
      _
    $region15: #{tpu_custom_call.1} parent=1 // pred_check_branch
      %44 = sbr.rel (0) target = $region17
    $region16: #{tpu_custom_call.1} parent=1 // pred_region
      _
    $region17: #{tpu_custom_call.1} parent=1 // pred_fallthru
      _
    // Predicated region
    $region18: #{tpu_custom_call.1} parent=1 // pred_check
      _
    $region19: #{tpu_custom_call.1} parent=1 // pred_check_branch
      %46 = sbr.rel (0) target = $region21
    $region20: #{tpu_custom_call.1} parent=1 // pred_region
      _
    $region21: #{tpu_custom_call.1} parent=1 // pred_fallthru
      _
    // Predicated region
    $region22: #{tpu_custom_call.1} parent=1 // pred_check
      _
    $region23: #{tpu_custom_call.1} parent=1 // pred_check_branch
      %48 = sbr.rel (0) target = $region25
    $region24: #{tpu_custom_call.1} parent=1 // pred_region
      _
    $region25: #{tpu_custom_call.1} parent=1 // pred_fallthru
      _
    // Predicated region
    $region26: #{tpu_custom_call.1} parent=1 // pred_check
      _
    $region27: #{tpu_custom_call.1} parent=1 // pred_check_branch
      %50 = sbr.rel (0) target = $region29
    $region28: #{tpu_custom_call.1} parent=1 // pred_region
      %s52 = ssub.s32 1024, 1024
      %53 = vsyncadd [#allocation6], %s52
      %s54 = sshll.u32 [#allocation7], 4
      %s55 = int_to_ptr.vmem [resolvable:$true] %s54
      %60 = dma.hbm_to_vmem [thread:$0]  %s6, 1024, %s55, [#allocation6], 128, 128, 8
    $region29: #{tpu_custom_call.1} parent=1 // pred_fallthru
      _
    // Predicated region
    $region30: #{tpu_custom_call.1} parent=1 // pred_check
      _
    $region31: #{tpu_custom_call.1} parent=1 // pred_check_branch
      %62 = sbr.rel (0) target = $region33
    $region32: #{tpu_custom_call.1} parent=1 // pred_region
      _
    $region33: #{tpu_custom_call.1} parent=1 // pred_fallthru
      _
    // Predicated region
    $region34: #{tpu_custom_call.1} parent=1 // pred_check
      _
    $region35: #{tpu_custom_call.1} parent=1 // pred_check_branch
      %64 = sbr.rel (0) target = $region37
    $region36: #{tpu_custom_call.1} parent=1 // pred_region
      _
    $region37: #{tpu_custom_call.1} parent=1 // pred_fallthru
      _
    // Predicated region
    $region38: #{tpu_custom_call.1} parent=1 // pred_check
      _
    $region39: #{tpu_custom_call.1} parent=1 // pred_check_branch
      %66 = sbr.rel (0) target = $region41
    $region40: #{tpu_custom_call.1} parent=1 // pred_region
      %67 = dma.done [#allocation3], 256
    $region41: #{tpu_custom_call.1} parent=1 // pred_fallthru
      _
    // Predicated region
    $region42: #{tpu_custom_call.1} parent=1 // pred_check
      _
    $region43: #{tpu_custom_call.1} parent=1 // pred_check_branch
      %69 = sbr.rel (0) target = $region45
    $region44: #{tpu_custom_call.1} parent=1 // pred_region
      %70 = dma.done [#allocation6], 512
    $region45: #{tpu_custom_call.1} parent=1 // pred_fallthru
      _
    // Predicated region
    $region46: #{tpu_custom_call.1} parent=1 // pred_check
      _
    $region47: #{tpu_custom_call.1} parent=1 // pred_check_branch
      %72 = sbr.rel (0) target = $region49
    $region48: #{tpu_custom_call.1} parent=1 // pred_region
      %73 = dma.done [#allocation6], 1024
    $region49: #{tpu_custom_call.1} parent=1 // pred_fallthru
      _
    %v74 = vld [vmem:[#allocation2] sm:$0xff]
    %v75 = vld [vmem:[#allocation2 + $0x8] sm:$0xff]
    %v76 = vld [vmem:[#allocation5] sm:$0xff]
    %v77 = vld [vmem:[#allocation5 + $0x8] sm:$0xff]
    %v78 = vld [vmem:[#allocation5 + $0x10] sm:$0xff]
    %v79 = vld [vmem:[#allocation5 + $0x18] sm:$0xff]
    %v80 = vld [vmem:[%s2] sm:$0x1]
    %v81 = vld [vmem:[%s2 + $0x1] sm:$0x1]
    %v82 = vld [vmem:[%s3] sm:$0xff]
    %v83 = vld [vmem:[%s3 + $0x8] sm:$0xff]
    %v84 = vld [vmem:[%s3 + $0x10] sm:$0xff]
    %v85 = vld [vmem:[%s3 + $0x18] sm:$0xff]
    %v86 = vld [vmem:[%s4] sm:$0xff]
    %v87 = vld [vmem:[%s4 + $0x8] sm:$0xff]
    %v88 = vld [vmem:[%s4 + $0x10] sm:$0xff]
    %v89 = vld [vmem:[%s4 + $0x18] sm:$0xff]
    %v90 = vld [vmem:[%s5] sm:$0xff]
    %v91 = vld [vmem:[%s5 + $0x8] sm:$0xff]
    %v92 = vld [vmem:[%s5 + $0x10] sm:$0xff]
    %v93 = vld [vmem:[%s5 + $0x18] sm:$0xff]
    %v94 = vld [vmem:[#allocation7] sm:$0xff]
    %v95 = vld [vmem:[#allocation7 + $0x8] sm:$0xff]
    %v96 = vld [vmem:[#allocation7 + $0x10] sm:$0xff]
    %v97 = vld [vmem:[#allocation7 + $0x18] sm:$0xff]
    %v98 = vld [vmem:[%s7] sm:$0xff]
    %v99 = vld [vmem:[%s7 + $0x8] sm:$0xff]
    %v100 = vld [vmem:[%s7 + $0x10] sm:$0xff]
    %v101 = vld [vmem:[%s7 + $0x18] sm:$0xff]
    %v102 = vld [vmem:[%s7 + $0x20] sm:$0xff]
    %v103 = vld [vmem:[%s7 + $0x28] sm:$0xff]
    %v104 = vld [vmem:[%s7 + $0x30] sm:$0xff]
    %v105 = vld [vmem:[%s7 + $0x38] sm:$0xff]
    %v106 = vld [vmem:[%s8] sm:$0xff]
    %v107 = vld [vmem:[%s8 + $0x8] sm:$0x1]
    %v108 = vlaneseq
    %v109 = vshrl.u32 %v108, 7
    %v110 = vsub.s32 0, %v109
    %v111 = vrot.slane %v106, %v110
    %vm112 = vcmask 261120
    %v114 = vsel %vm112, %v74, 0
    %v117 = vsel %vm112, %v75, 0
    %119 = vmatprep.subr.mxu0 0.0
    %120 = vmatpush1.msra.mxu0 %v82
    %121 = vmatprep.subr.mxu0 0.0
    %122 = vmatpush1.msra.mxu0 %v83
    %123 = vmatprep.subr.mxu0 0.0
    %124 = vmatpush1.msra.mxu0 %v84
    %125 = vmatprep.subr.mxu0 0.0
    %126 = vmatpush1.msra.mxu0 %v85
    %127 = vmatprep.subr.mxu0 0.0
    %128 = vmatpush1.msra.mxu0 0.0
    %129 = vmatprep.subr.mxu0 0.0
    %130 = vmatpush1.msra.mxu0 0.0
    %131 = vmatprep.subr.mxu0 0.0
    %132 = vmatpush1.msra.mxu0 0.0
    %133 = vmatprep.subr.mxu0 0.0
    %134 = vmatpush1.msra.mxu0 0.0
    %135 = vmatprep.subr.mxu0 0.0
    %136 = vmatpush1.msra.mxu0 0.0
    %137 = vmatprep.subr.mxu0 0.0
    %138 = vmatpush1.msra.mxu0 0.0
    %139 = vmatprep.subr.mxu0 0.0
    %140 = vmatpush1.msra.mxu0 0.0
    %141 = vmatprep.subr.mxu0 0.0
    %142 = vmatpush1.msra.mxu0 0.0
    %143 = vmatprep.subr.mxu0 0.0
    %144 = vmatpush1.msra.mxu0 0.0
    %145 = vmatprep.subr.mxu0 0.0
    %146 = vmatpush1.msra.mxu0 0.0
    %147 = vmatprep.subr.mxu0 0.0
    %148 = vmatpush1.msra.mxu0 0.0
    %149 = vmatprep.subr.mxu0 0.0
    %150 = vmatpush1.msra.mxu0 0.0
    %151 = vmatprep.subr.mxu0 0.0
    %152 = vmatpush1.msra.mxu0 0.0
    %153 = vmatprep.subr.mxu0 0.0
    %154 = vmatpush1.msra.mxu0 0.0
    %155 = vmatprep.subr.mxu0 0.0
    %156 = vmatpush1.msra.mxu0 0.0
    %157 = vmatprep.subr.mxu0 0.0
    %158 = vmatpush1.msra.mxu0 0.0
    %159 = vmatprep.subr.mxu0 0.0
    %160 = vmatpush1.msra.mxu0 0.0
    %161 = vmatprep.subr.mxu0 0.0
    %162 = vmatpush1.msra.mxu0 0.0
    %163 = vmatprep.subr.mxu0 0.0
    %164 = vmatpush1.msra.mxu0 0.0
    %165 = vmatprep.subr.mxu0 0.0
    %166 = vmatpush1.msra.mxu0 0.0
    %167 = vmatprep.subr.mxu0 0.0
    %168 = vmatpush1.msra.mxu0 0.0
    %169 = vmatprep.subr.mxu0 0.0
    %170 = vmatpush1.msra.mxu0 0.0
    %171 = vmatprep.subr.mxu0 0.0
    %172 = vmatpush1.msra.mxu0 0.0
    %173 = vmatprep.subr.mxu0 0.0
    %174 = vmatpush1.msra.mxu0 0.0
    %175 = vmatprep.subr.mxu0 0.0
    %176 = vmatpush1.msra.mxu0 0.0
    %177 = vmatprep.subr.mxu0 0.0
    %178 = vmatpush1.msra.mxu0 0.0
    %179 = vmatprep.subr.mxu0 0.0
    %180 = vmatpush1.msra.mxu0 0.0
    %181 = vmatprep.subr.mxu0 0.0
    %182 = vmatpush1.msra.mxu0 0.0
    %183 = vmatprep.mubr.f32.mxu0 0.0
    %184 = vmatmul.mubr.f32.gmra.mrb[0].mxu0 %v114
    %v185 = vpop.f32.mrb[0].mxu0
    %v186 = vadd.f32 %v111, %v185
    %v187 = vpop.f32.mrb[0].mxu0
    %188 = vmatprep.mubr.f32.mxu0 0.0
    %189 = vmatmul.mubr.f32.gmra.mrb[0].mxu0 %v117
    %v190 = vpop.f32.mrb[0].mxu0
    %v191 = vadd.f32 %v111, %v190
    %v192 = vpop.f32.mrb[0].mxu0
    %193 = vdwg.mxu0
    %v194 = vlaneseq
    %v195 = vshrl.u32 %v194, 7
    %v196 = vsub.s32 1, %v195
    %v197 = vrot.slane %v106, %v196
    %v199 = vsel %vm112, %v76, 0
    %v202 = vsel %vm112, %v77, 0
    %v205 = vsel %vm112, %v78, 0
    %v208 = vsel %vm112, %v79, 0
    %210 = vmatprep.subr.mxu0 0.0
    %211 = vmatpush1.msra.mxu0 %v86
    %212 = vmatprep.subr.mxu0 0.0
    %213 = vmatpush1.msra.mxu0 %v87
    %214 = vmatprep.subr.mxu0 0.0
    %215 = vmatpush1.msra.mxu0 %v88
    %216 = vmatprep.subr.mxu0 0.0
    %217 = vmatpush1.msra.mxu0 %v89
    %218 = vmatprep.subr.mxu0 0.0
    %219 = vmatpush1.msra.mxu0 0.0
    %220 = vmatprep.subr.mxu0 0.0
    %221 = vmatpush1.msra.mxu0 0.0
    %222 = vmatprep.subr.mxu0 0.0
    %223 = vmatpush1.msra.mxu0 0.0
    %224 = vmatprep.subr.mxu0 0.0
    %225 = vmatpush1.msra.mxu0 0.0
    %226 = vmatprep.subr.mxu0 0.0
    %227 = vmatpush1.msra.mxu0 0.0
    %228 = vmatprep.subr.mxu0 0.0
    %229 = vmatpush1.msra.mxu0 0.0
    %230 = vmatprep.subr.mxu0 0.0
    %231 = vmatpush1.msra.mxu0 0.0
    %232 = vmatprep.subr.mxu0 0.0
    %233 = vmatpush1.msra.mxu0 0.0
    %234 = vmatprep.subr.mxu0 0.0
    %235 = vmatpush1.msra.mxu0 0.0
    %236 = vmatprep.subr.mxu0 0.0
    %237 = vmatpush1.msra.mxu0 0.0
    %238 = vmatprep.subr.mxu0 0.0
    %239 = vmatpush1.msra.mxu0 0.0
    %240 = vmatprep.subr.mxu0 0.0
    %241 = vmatpush1.msra.mxu0 0.0
    %242 = vmatprep.subr.mxu0 0.0
    %243 = vmatpush1.msra.mxu0 0.0
    %244 = vmatprep.subr.mxu0 0.0
    %245 = vmatpush1.msra.mxu0 0.0
    %246 = vmatprep.subr.mxu0 0.0
    %247 = vmatpush1.msra.mxu0 0.0
    %248 = vmatprep.subr.mxu0 0.0
    %249 = vmatpush1.msra.mxu0 0.0
    %250 = vmatprep.subr.mxu0 0.0
    %251 = vmatpush1.msra.mxu0 0.0
    %252 = vmatprep.subr.mxu0 0.0
    %253 = vmatpush1.msra.mxu0 0.0
    %254 = vmatprep.subr.mxu0 0.0
    %255 = vmatpush1.msra.mxu0 0.0
    %256 = vmatprep.subr.mxu0 0.0
    %257 = vmatpush1.msra.mxu0 0.0
    %258 = vmatprep.subr.mxu0 0.0
    %259 = vmatpush1.msra.mxu0 0.0
    %260 = vmatprep.subr.mxu0 0.0
    %261 = vmatpush1.msra.mxu0 0.0
    %262 = vmatprep.subr.mxu0 0.0
    %263 = vmatpush1.msra.mxu0 0.0
    %264 = vmatprep.subr.mxu0 0.0
    %265 = vmatpush1.msra.mxu0 0.0
    %266 = vmatprep.subr.mxu0 0.0
    %267 = vmatpush1.msra.mxu0 0.0
    %268 = vmatprep.subr.mxu0 0.0
    %269 = vmatpush1.msra.mxu0 0.0
    %270 = vmatprep.subr.mxu0 0.0
    %271 = vmatpush1.msra.mxu0 0.0
    %272 = vmatprep.subr.mxu0 0.0
    %273 = vmatpush1.msra.mxu0 0.0
    %274 = vmatprep.mubr.f32.mxu0 0.0
    %275 = vmatmul.mubr.f32.gmra.mrb[0].mxu0 %v199
    %v276 = vpop.f32.mrb[0].mxu0
    %v277 = vadd.f32 %v197, %v276
    %v278 = vpop.f32.mrb[0].mxu0
    %279 = vmatprep.mubr.f32.mxu0 0.0
    %280 = vmatmul.mubr.f32.gmra.mrb[0].mxu0 %v202
    %v281 = vpop.f32.mrb[0].mxu0
    %v282 = vadd.f32 %v197, %v281
    %v283 = vpop.f32.mrb[0].mxu0
    %284 = vmatprep.mubr.f32.mxu0 0.0
    %285 = vmatmul.mubr.f32.gmra.mrb[0].mxu0 %v205
    %v286 = vpop.f32.mrb[0].mxu0
    %v287 = vadd.f32 %v197, %v286
    %v288 = vpop.f32.mrb[0].mxu0
    %289 = vmatprep.mubr.f32.mxu0 0.0
    %290 = vmatmul.mubr.f32.gmra.mrb[0].mxu0 %v208
    %v291 = vpop.f32.mrb[0].mxu0
    %v292 = vadd.f32 %v197, %v291
    %v293 = vpop.f32.mrb[0].mxu0
    %294 = vdwg.mxu0
    %v297 = vlaneseq
    %v298 = vshrl.u32 %v297, 7
    %v299 = vsub.s32 0, %v298
    %v300 = vrot.slane %v80, %v299
    %v301 = vlaneseq
    %v302 = vshrl.u32 %v301, 7
    %v303 = vsub.s32 0, %v302
    %v304 = vrot.slane %v81, %v303
    %vm307 = vcmask 64512
    %v309 = vsel %vm307, %v186, 0
    %v312 = vsel %vm307, %v277, 0
    %v315 = vsel %vm307, %v282, 0
    %317 = vmatprep.subr.mxu0 0.0
    %318 = vmatpush1.xpose.msra.mxu0 %v312
    %319 = vmatprep.subr.mxu0 0.0
    %320 = vmatpush1.xpose.msra.mxu0 %v315
    %321 = vmatprep.subr.mxu0 0.0
    %322 = vmatpush1.xpose.msra.mxu0 0.0
    %323 = vmatprep.subr.mxu0 0.0
    %324 = vmatpush1.xpose.msra.mxu0 0.0
    %325 = vmatprep.subr.mxu0 0.0
    %326 = vmatpush1.xpose.msra.mxu0 0.0
    %327 = vmatprep.subr.mxu0 0.0
    %328 = vmatpush1.xpose.msra.mxu0 0.0
    %329 = vmatprep.subr.mxu0 0.0
    %330 = vmatpush1.xpose.msra.mxu0 0.0
    %331 = vmatprep.subr.mxu0 0.0
    %332 = vmatpush1.xpose.msra.mxu0 0.0
    %333 = vmatprep.subr.mxu0 0.0
    %334 = vmatpush1.xpose.msra.mxu0 0.0
    %335 = vmatprep.subr.mxu0 0.0
    %336 = vmatpush1.xpose.msra.mxu0 0.0
    %337 = vmatprep.subr.mxu0 0.0
    %338 = vmatpush1.xpose.msra.mxu0 0.0
    %339 = vmatprep.subr.mxu0 0.0
    %340 = vmatpush1.xpose.msra.mxu0 0.0
    %341 = vmatprep.subr.mxu0 0.0
    %342 = vmatpush1.xpose.msra.mxu0 0.0
    %343 = vmatprep.subr.mxu0 0.0
    %344 = vmatpush1.xpose.msra.mxu0 0.0
    %345 = vmatprep.subr.mxu0 0.0
    %346 = vmatpush1.xpose.msra.mxu0 0.0
    %347 = vmatprep.subr.mxu0 0.0
    %348 = vmatpush1.xpose.msra.mxu0 0.0
    %349 = vmatprep.subr.mxu0 0.0
    %350 = vmatpush1.xpose.msra.mxu0 0.0
    %351 = vmatprep.subr.mxu0 0.0
    %352 = vmatpush1.xpose.msra.mxu0 0.0
    %353 = vmatprep.subr.mxu0 0.0
    %354 = vmatpush1.xpose.msra.mxu0 0.0
    %355 = vmatprep.subr.mxu0 0.0
    %356 = vmatpush1.xpose.msra.mxu0 0.0
    %357 = vmatprep.subr.mxu0 0.0
    %358 = vmatpush1.xpose.msra.mxu0 0.0
    %359 = vmatprep.subr.mxu0 0.0
    %360 = vmatpush1.xpose.msra.mxu0 0.0
    %361 = vmatprep.subr.mxu0 0.0
    %362 = vmatpush1.xpose.msra.mxu0 0.0
    %363 = vmatprep.subr.mxu0 0.0
    %364 = vmatpush1.xpose.msra.mxu0 0.0
    %365 = vmatprep.subr.mxu0 0.0
    %366 = vmatpush1.xpose.msra.mxu0 0.0
    %367 = vmatprep.subr.mxu0 0.0
    %368 = vmatpush1.xpose.msra.mxu0 0.0
    %369 = vmatprep.subr.mxu0 0.0
    %370 = vmatpush1.xpose.msra.mxu0 0.0
    %371 = vmatprep.subr.mxu0 0.0
    %372 = vmatpush1.xpose.msra.mxu0 0.0
    %373 = vmatprep.subr.mxu0 0.0
    %374 = vmatpush1.xpose.msra.mxu0 0.0
    %375 = vmatprep.subr.mxu0 0.0
    %376 = vmatpush1.xpose.msra.mxu0 0.0
    %377 = vmatprep.subr.mxu0 0.0
    %378 = vmatpush1.xpose.msra.mxu0 0.0
    %379 = vmatprep.subr.mxu0 0.0
    %380 = vmatpush1.xpose.msra.mxu0 0.0
    %381 = vmatprep.mubr.f32.mxu0 0.0
    %382 = vmatmul.mubr.f32.gmra.mrb[0].mxu0 %v309
    %v383 = vpop.f32.mrb[0].mxu0
    %v384 = vadd.f32 %v300, %v383
    %v385 = vpop.f32.mrb[0].mxu0
    %386 = vdwg.mxu0
    %v388 = vsel %vm307, %v191, 0
    %v391 = vsel %vm307, %v287, 0
    %v394 = vsel %vm307, %v292, 0
    %396 = vmatprep.subr.mxu0 0.0
    %397 = vmatpush1.xpose.msra.mxu0 %v391
    %398 = vmatprep.subr.mxu0 0.0
    %399 = vmatpush1.xpose.msra.mxu0 %v394
    %400 = vmatprep.subr.mxu0 0.0
    %401 = vmatpush1.xpose.msra.mxu0 0.0
    %402 = vmatprep.subr.mxu0 0.0
    %403 = vmatpush1.xpose.msra.mxu0 0.0
    %404 = vmatprep.subr.mxu0 0.0
    %405 = vmatpush1.xpose.msra.mxu0 0.0
    %406 = vmatprep.subr.mxu0 0.0
    %407 = vmatpush1.xpose.msra.mxu0 0.0
    %408 = vmatprep.subr.mxu0 0.0
    %409 = vmatpush1.xpose.msra.mxu0 0.0
    %410 = vmatprep.subr.mxu0 0.0
    %411 = vmatpush1.xpose.msra.mxu0 0.0
    %412 = vmatprep.subr.mxu0 0.0
    %413 = vmatpush1.xpose.msra.mxu0 0.0
    %414 = vmatprep.subr.mxu0 0.0
    %415 = vmatpush1.xpose.msra.mxu0 0.0
    %416 = vmatprep.subr.mxu0 0.0
    %417 = vmatpush1.xpose.msra.mxu0 0.0
    %418 = vmatprep.subr.mxu0 0.0
    %419 = vmatpush1.xpose.msra.mxu0 0.0
    %420 = vmatprep.subr.mxu0 0.0
    %421 = vmatpush1.xpose.msra.mxu0 0.0
    %422 = vmatprep.subr.mxu0 0.0
    %423 = vmatpush1.xpose.msra.mxu0 0.0
    %424 = vmatprep.subr.mxu0 0.0
    %425 = vmatpush1.xpose.msra.mxu0 0.0
    %426 = vmatprep.subr.mxu0 0.0
    %427 = vmatpush1.xpose.msra.mxu0 0.0
    %428 = vmatprep.subr.mxu0 0.0
    %429 = vmatpush1.xpose.msra.mxu0 0.0
    %430 = vmatprep.subr.mxu0 0.0
    %431 = vmatpush1.xpose.msra.mxu0 0.0
    %432 = vmatprep.subr.mxu0 0.0
    %433 = vmatpush1.xpose.msra.mxu0 0.0
    %434 = vmatprep.subr.mxu0 0.0
    %435 = vmatpush1.xpose.msra.mxu0 0.0
    %436 = vmatprep.subr.mxu0 0.0
    %437 = vmatpush1.xpose.msra.mxu0 0.0
    %438 = vmatprep.subr.mxu0 0.0
    %439 = vmatpush1.xpose.msra.mxu0 0.0
    %440 = vmatprep.subr.mxu0 0.0
    %441 = vmatpush1.xpose.msra.mxu0 0.0
    %442 = vmatprep.subr.mxu0 0.0
    %443 = vmatpush1.xpose.msra.mxu0 0.0
    %444 = vmatprep.subr.mxu0 0.0
    %445 = vmatpush1.xpose.msra.mxu0 0.0
    %446 = vmatprep.subr.mxu0 0.0
    %447 = vmatpush1.xpose.msra.mxu0 0.0
    %448 = vmatprep.subr.mxu0 0.0
    %449 = vmatpush1.xpose.msra.mxu0 0.0
    %450 = vmatprep.subr.mxu0 0.0
    %451 = vmatpush1.xpose.msra.mxu0 0.0
    %452 = vmatprep.subr.mxu0 0.0
    %453 = vmatpush1.xpose.msra.mxu0 0.0
    %454 = vmatprep.subr.mxu0 0.0
    %455 = vmatpush1.xpose.msra.mxu0 0.0
    %456 = vmatprep.subr.mxu0 0.0
    %457 = vmatpush1.xpose.msra.mxu0 0.0
    %458 = vmatprep.subr.mxu0 0.0
    %459 = vmatpush1.xpose.msra.mxu0 0.0
    %460 = vmatprep.mubr.f32.mxu0 0.0
    %461 = vmatmul.mubr.f32.gmra.mrb[0].mxu0 %v388
    %v462 = vpop.f32.mrb[0].mxu0
    %v463 = vadd.f32 %v304, %v462
    %v464 = vpop.f32.mrb[0].mxu0
    %465 = vdwg.mxu0
    %vm466 = vcmask 130048
    %v467 = vsel %vm466, %v384, -inf
    %468 = vmax.xlane.f32.xlu0 %v467
    %v469 = vpop.xlane.xlu0 %468
    %v470 = vsel %vm466, %v463, -inf
    %471 = vmax.xlane.f32.xlu0 %v470
    %v472 = vpop.xlane.xlu0 %471
    %v473 = vsub.f32 %v384, %v469
    %v474 = vsub.f32 %v463, %v472
    %v475 = vmul.f32 %v473, 1.442695
    %v476 = vpow.pop %v475
    %v477 = vmul.f32 %v474, 1.442695
    %v478 = vpow.pop %v477
    %v479 = vsel %vm466, %v476, 0.0
    %480 = vadd.xlane.f32.xlu0 %v479
    %v481 = vpop.xlane.xlu0 %480
    %v482 = vsel %vm466, %v478, 0.0
    %483 = vadd.xlane.f32.xlu0 %v482
    %v484 = vpop.xlane.xlu0 %483
    %v485 = vrcp.pop %v481
    %v486 = vrcp.pop %v484
    %v487 = vmul.f32 %v476, %v485
    %v488 = vmul.f32 %v478, %v486
    %489 = vrot.lane.b32.xlu0 %v277, 96
    %v490 = vpop.permute.xlu0 %489
    %491 = vrot.lane.b32.xlu0 %v282, 96
    %v492 = vpop.permute.xlu0 %491
    %v496 = vsel %vm466, %v487, 0
    %498 = vmatprep.subr.mxu0 0.0
    %499 = vmatpush1.msra.mxu0 %v490
    %500 = vmatprep.subr.mxu0 0.0
    %501 = vmatpush1.msra.mxu0 %v492
    %502 = vmatprep.subr.mxu0 0.0
    %503 = vmatpush1.msra.mxu0 0.0
    %504 = vmatprep.subr.mxu0 0.0
    %505 = vmatpush1.msra.mxu0 0.0
    %506 = vmatprep.subr.mxu0 0.0
    %507 = vmatpush1.msra.mxu0 0.0
    %508 = vmatprep.subr.mxu0 0.0
    %509 = vmatpush1.msra.mxu0 0.0
    %510 = vmatprep.subr.mxu0 0.0
    %511 = vmatpush1.msra.mxu0 0.0
    %512 = vmatprep.subr.mxu0 0.0
    %513 = vmatpush1.msra.mxu0 0.0
    %514 = vmatprep.subr.mxu0 0.0
    %515 = vmatpush1.msra.mxu0 0.0
    %516 = vmatprep.subr.mxu0 0.0
    %517 = vmatpush1.msra.mxu0 0.0
    %518 = vmatprep.subr.mxu0 0.0
    %519 = vmatpush1.msra.mxu0 0.0
    %520 = vmatprep.subr.mxu0 0.0
    %521 = vmatpush1.msra.mxu0 0.0
    %522 = vmatprep.subr.mxu0 0.0
    %523 = vmatpush1.msra.mxu0 0.0
    %524 = vmatprep.subr.mxu0 0.0
    %525 = vmatpush1.msra.mxu0 0.0
    %526 = vmatprep.subr.mxu0 0.0
    %527 = vmatpush1.msra.mxu0 0.0
    %528 = vmatprep.subr.mxu0 0.0
    %529 = vmatpush1.msra.mxu0 0.0
    %530 = vmatprep.subr.mxu0 0.0
    %531 = vmatpush1.msra.mxu0 0.0
    %532 = vmatprep.subr.mxu0 0.0
    %533 = vmatpush1.msra.mxu0 0.0
    %534 = vmatprep.subr.mxu0 0.0
    %535 = vmatpush1.msra.mxu0 0.0
    %536 = vmatprep.subr.mxu0 0.0
    %537 = vmatpush1.msra.mxu0 0.0
    %538 = vmatprep.subr.mxu0 0.0
    %539 = vmatpush1.msra.mxu0 0.0
    %540 = vmatprep.subr.mxu0 0.0
    %541 = vmatpush1.msra.mxu0 0.0
    %542 = vmatprep.subr.mxu0 0.0
    %543 = vmatpush1.msra.mxu0 0.0
    %544 = vmatprep.subr.mxu0 0.0
    %545 = vmatpush1.msra.mxu0 0.0
    %546 = vmatprep.subr.mxu0 0.0
    %547 = vmatpush1.msra.mxu0 0.0
    %548 = vmatprep.subr.mxu0 0.0
    %549 = vmatpush1.msra.mxu0 0.0
    %550 = vmatprep.subr.mxu0 0.0
    %551 = vmatpush1.msra.mxu0 0.0
    %552 = vmatprep.subr.mxu0 0.0
    %553 = vmatpush1.msra.mxu0 0.0
    %554 = vmatprep.subr.mxu0 0.0
    %555 = vmatpush1.msra.mxu0 0.0
    %556 = vmatprep.subr.mxu0 0.0
    %557 = vmatpush1.msra.mxu0 0.0
    %558 = vmatprep.subr.mxu0 0.0
    %559 = vmatpush1.msra.mxu0 0.0
    %560 = vmatprep.subr.mxu0 0.0
    %561 = vmatpush1.msra.mxu0 0.0
    %562 = vmatprep.mubr.f32.mxu0 0.0
    %563 = vmatmul.mubr.f32.gmra.mrb[0].mxu0 %v496
    %v564 = vpop.f32.mrb[0].mxu0
    %v565 = vadd.f32 0.0, %v564
    %v566 = vpop.f32.mrb[0].mxu0
    %567 = vdwg.mxu0
    %568 = vrot.lane.b32.xlu0 %v287, 96
    %v569 = vpop.permute.xlu0 %568
    %570 = vrot.lane.b32.xlu0 %v292, 96
    %v571 = vpop.permute.xlu0 %570
    %v575 = vsel %vm466, %v488, 0
    %577 = vmatprep.subr.mxu0 0.0
    %578 = vmatpush1.msra.mxu0 %v569
    %579 = vmatprep.subr.mxu0 0.0
    %580 = vmatpush1.msra.mxu0 %v571
    %581 = vmatprep.subr.mxu0 0.0
    %582 = vmatpush1.msra.mxu0 0.0
    %583 = vmatprep.subr.mxu0 0.0
    %584 = vmatpush1.msra.mxu0 0.0
    %585 = vmatprep.subr.mxu0 0.0
    %586 = vmatpush1.msra.mxu0 0.0
    %587 = vmatprep.subr.mxu0 0.0
    %588 = vmatpush1.msra.mxu0 0.0
    %589 = vmatprep.subr.mxu0 0.0
    %590 = vmatpush1.msra.mxu0 0.0
    %591 = vmatprep.subr.mxu0 0.0
    %592 = vmatpush1.msra.mxu0 0.0
    %593 = vmatprep.subr.mxu0 0.0
    %594 = vmatpush1.msra.mxu0 0.0
    %595 = vmatprep.subr.mxu0 0.0
    %596 = vmatpush1.msra.mxu0 0.0
    %597 = vmatprep.subr.mxu0 0.0
    %598 = vmatpush1.msra.mxu0 0.0
    %599 = vmatprep.subr.mxu0 0.0
    %600 = vmatpush1.msra.mxu0 0.0
    %601 = vmatprep.subr.mxu0 0.0
    %602 = vmatpush1.msra.mxu0 0.0
    %603 = vmatprep.subr.mxu0 0.0
    %604 = vmatpush1.msra.mxu0 0.0
    %605 = vmatprep.subr.mxu0 0.0
    %606 = vmatpush1.msra.mxu0 0.0
    %607 = vmatprep.subr.mxu0 0.0
    %608 = vmatpush1.msra.mxu0 0.0
    %609 = vmatprep.subr.mxu0 0.0
    %610 = vmatpush1.msra.mxu0 0.0
    %611 = vmatprep.subr.mxu0 0.0
    %612 = vmatpush1.msra.mxu0 0.0
    %613 = vmatprep.subr.mxu0 0.0
    %614 = vmatpush1.msra.mxu0 0.0
    %615 = vmatprep.subr.mxu0 0.0
    %616 = vmatpush1.msra.mxu0 0.0
    %617 = vmatprep.subr.mxu0 0.0
    %618 = vmatpush1.msra.mxu0 0.0
    %619 = vmatprep.subr.mxu0 0.0
    %620 = vmatpush1.msra.mxu0 0.0
    %621 = vmatprep.subr.mxu0 0.0
    %622 = vmatpush1.msra.mxu0 0.0
    %623 = vmatprep.subr.mxu0 0.0
    %624 = vmatpush1.msra.mxu0 0.0
    %625 = vmatprep.subr.mxu0 0.0
    %626 = vmatpush1.msra.mxu0 0.0
    %627 = vmatprep.subr.mxu0 0.0
    %628 = vmatpush1.msra.mxu0 0.0
    %629 = vmatprep.subr.mxu0 0.0
    %630 = vmatpush1.msra.mxu0 0.0
    %631 = vmatprep.subr.mxu0 0.0
    %632 = vmatpush1.msra.mxu0 0.0
    %633 = vmatprep.subr.mxu0 0.0
    %634 = vmatpush1.msra.mxu0 0.0
    %635 = vmatprep.subr.mxu0 0.0
    %636 = vmatpush1.msra.mxu0 0.0
    %637 = vmatprep.subr.mxu0 0.0
    %638 = vmatpush1.msra.mxu0 0.0
    %639 = vmatprep.subr.mxu0 0.0
    %640 = vmatpush1.msra.mxu0 0.0
    %641 = vmatprep.mubr.f32.mxu0 0.0
    %642 = vmatmul.mubr.f32.gmra.mrb[0].mxu0 %v575
    %v643 = vpop.f32.mrb[0].mxu0
    %v644 = vadd.f32 0.0, %v643
    %v645 = vpop.f32.mrb[0].mxu0
    %646 = vdwg.mxu0
    %647 = vrot.lane.b32.xlu0 %v186, 120
    %v648 = vpop.permute.xlu0 %647
    %649 = vrot.lane.b32.xlu0 %v277, 120
    %v650 = vpop.permute.xlu0 %649
    %651 = vrot.lane.b32.xlu0 %v282, 120
    %v652 = vpop.permute.xlu0 %651
    %v653 = vsel %vm307, %v648, 0
    %v655 = vsel %vm307, %v650, 0
    %v657 = vsel %vm307, %v652, 0
    %659 = vmatprep.subr.mxu0 0.0
    %660 = vmatpush1.xpose.msra.mxu0 %v655
    %661 = vmatprep.subr.mxu0 0.0
    %662 = vmatpush1.xpose.msra.mxu0 %v657
    %663 = vmatprep.subr.mxu0 0.0
    %664 = vmatpush1.xpose.msra.mxu0 0.0
    %665 = vmatprep.subr.mxu0 0.0
    %666 = vmatpush1.xpose.msra.mxu0 0.0
    %667 = vmatprep.subr.mxu0 0.0
    %668 = vmatpush1.xpose.msra.mxu0 0.0
    %669 = vmatprep.subr.mxu0 0.0
    %670 = vmatpush1.xpose.msra.mxu0 0.0
    %671 = vmatprep.subr.mxu0 0.0
    %672 = vmatpush1.xpose.msra.mxu0 0.0
    %673 = vmatprep.subr.mxu0 0.0
    %674 = vmatpush1.xpose.msra.mxu0 0.0
    %675 = vmatprep.subr.mxu0 0.0
    %676 = vmatpush1.xpose.msra.mxu0 0.0
    %677 = vmatprep.subr.mxu0 0.0
    %678 = vmatpush1.xpose.msra.mxu0 0.0
    %679 = vmatprep.subr.mxu0 0.0
    %680 = vmatpush1.xpose.msra.mxu0 0.0
    %681 = vmatprep.subr.mxu0 0.0
    %682 = vmatpush1.xpose.msra.mxu0 0.0
    %683 = vmatprep.subr.mxu0 0.0
    %684 = vmatpush1.xpose.msra.mxu0 0.0
    %685 = vmatprep.subr.mxu0 0.0
    %686 = vmatpush1.xpose.msra.mxu0 0.0
    %687 = vmatprep.subr.mxu0 0.0
    %688 = vmatpush1.xpose.msra.mxu0 0.0
    %689 = vmatprep.subr.mxu0 0.0
    %690 = vmatpush1.xpose.msra.mxu0 0.0
    %691 = vmatprep.subr.mxu0 0.0
    %692 = vmatpush1.xpose.msra.mxu0 0.0
    %693 = vmatprep.subr.mxu0 0.0
    %694 = vmatpush1.xpose.msra.mxu0 0.0
    %695 = vmatprep.subr.mxu0 0.0
    %696 = vmatpush1.xpose.msra.mxu0 0.0
    %697 = vmatprep.subr.mxu0 0.0
    %698 = vmatpush1.xpose.msra.mxu0 0.0
    %699 = vmatprep.subr.mxu0 0.0
    %700 = vmatpush1.xpose.msra.mxu0 0.0
    %701 = vmatprep.subr.mxu0 0.0
    %702 = vmatpush1.xpose.msra.mxu0 0.0
    %703 = vmatprep.subr.mxu0 0.0
    %704 = vmatpush1.xpose.msra.mxu0 0.0
    %705 = vmatprep.subr.mxu0 0.0
    %706 = vmatpush1.xpose.msra.mxu0 0.0
    %707 = vmatprep.subr.mxu0 0.0
    %708 = vmatpush1.xpose.msra.mxu0 0.0
    %709 = vmatprep.subr.mxu0 0.0
    %710 = vmatpush1.xpose.msra.mxu0 0.0
    %711 = vmatprep.subr.mxu0 0.0
    %712 = vmatpush1.xpose.msra.mxu0 0.0
    %713 = vmatprep.subr.mxu0 0.0
    %714 = vmatpush1.xpose.msra.mxu0 0.0
    %715 = vmatprep.subr.mxu0 0.0
    %716 = vmatpush1.xpose.msra.mxu0 0.0
    %717 = vmatprep.subr.mxu0 0.0
    %718 = vmatpush1.xpose.msra.mxu0 0.0
    %719 = vmatprep.subr.mxu0 0.0
    %720 = vmatpush1.xpose.msra.mxu0 0.0
    %721 = vmatprep.subr.mxu0 0.0
    %722 = vmatpush1.xpose.msra.mxu0 0.0
    %723 = vmatprep.mubr.f32.mxu0 0.0
    %724 = vmatmul.mubr.f32.gmra.mrb[0].mxu0 %v653
    %v725 = vpop.f32.mrb[0].mxu0
    %v726 = vadd.f32 %v300, %v725
    %v727 = vpop.f32.mrb[0].mxu0
    %728 = vdwg.mxu0
    %729 = vrot.lane.b32.xlu0 %v191, 120
    %v730 = vpop.permute.xlu0 %729
    %731 = vrot.lane.b32.xlu0 %v287, 120
    %v732 = vpop.permute.xlu0 %731
    %733 = vrot.lane.b32.xlu0 %v292, 120
    %v734 = vpop.permute.xlu0 %733
    %v735 = vsel %vm307, %v730, 0
    %v737 = vsel %vm307, %v732, 0
    %v739 = vsel %vm307, %v734, 0
    %741 = vmatprep.subr.mxu0 0.0
    %742 = vmatpush1.xpose.msra.mxu0 %v737
    %743 = vmatprep.subr.mxu0 0.0
    %744 = vmatpush1.xpose.msra.mxu0 %v739
    %745 = vmatprep.subr.mxu0 0.0
    %746 = vmatpush1.xpose.msra.mxu0 0.0
    %747 = vmatprep.subr.mxu0 0.0
    %748 = vmatpush1.xpose.msra.mxu0 0.0
    %749 = vmatprep.subr.mxu0 0.0
    %750 = vmatpush1.xpose.msra.mxu0 0.0
    %751 = vmatprep.subr.mxu0 0.0
    %752 = vmatpush1.xpose.msra.mxu0 0.0
    %753 = vmatprep.subr.mxu0 0.0
    %754 = vmatpush1.xpose.msra.mxu0 0.0
    %755 = vmatprep.subr.mxu0 0.0
    %756 = vmatpush1.xpose.msra.mxu0 0.0
    %757 = vmatprep.subr.mxu0 0.0
    %758 = vmatpush1.xpose.msra.mxu0 0.0
    %759 = vmatprep.subr.mxu0 0.0
    %760 = vmatpush1.xpose.msra.mxu0 0.0
    %761 = vmatprep.subr.mxu0 0.0
    %762 = vmatpush1.xpose.msra.mxu0 0.0
    %763 = vmatprep.subr.mxu0 0.0
    %764 = vmatpush1.xpose.msra.mxu0 0.0
    %765 = vmatprep.subr.mxu0 0.0
    %766 = vmatpush1.xpose.msra.mxu0 0.0
    %767 = vmatprep.subr.mxu0 0.0
    %768 = vmatpush1.xpose.msra.mxu0 0.0
    %769 = vmatprep.subr.mxu0 0.0
    %770 = vmatpush1.xpose.msra.mxu0 0.0
    %771 = vmatprep.subr.mxu0 0.0
    %772 = vmatpush1.xpose.msra.mxu0 0.0
    %773 = vmatprep.subr.mxu0 0.0
    %774 = vmatpush1.xpose.msra.mxu0 0.0
    %775 = vmatprep.subr.mxu0 0.0
    %776 = vmatpush1.xpose.msra.mxu0 0.0
    %777 = vmatprep.subr.mxu0 0.0
    %778 = vmatpush1.xpose.msra.mxu0 0.0
    %779 = vmatprep.subr.mxu0 0.0
    %780 = vmatpush1.xpose.msra.mxu0 0.0
    %781 = vmatprep.subr.mxu0 0.0
    %782 = vmatpush1.xpose.msra.mxu0 0.0
    %783 = vmatprep.subr.mxu0 0.0
    %784 = vmatpush1.xpose.msra.mxu0 0.0
    %785 = vmatprep.subr.mxu0 0.0
    %786 = vmatpush1.xpose.msra.mxu0 0.0
    %787 = vmatprep.subr.mxu0 0.0
    %788 = vmatpush1.xpose.msra.mxu0 0.0
    %789 = vmatprep.subr.mxu0 0.0
    %790 = vmatpush1.xpose.msra.mxu0 0.0
    %791 = vmatprep.subr.mxu0 0.0
    %792 = vmatpush1.xpose.msra.mxu0 0.0
    %793 = vmatprep.subr.mxu0 0.0
    %794 = vmatpush1.xpose.msra.mxu0 0.0
    %795 = vmatprep.subr.mxu0 0.0
    %796 = vmatpush1.xpose.msra.mxu0 0.0
    %797 = vmatprep.subr.mxu0 0.0
    %798 = vmatpush1.xpose.msra.mxu0 0.0
    %799 = vmatprep.subr.mxu0 0.0
    %800 = vmatpush1.xpose.msra.mxu0 0.0
    %801 = vmatprep.subr.mxu0 0.0
    %802 = vmatpush1.xpose.msra.mxu0 0.0
    %803 = vmatprep.subr.mxu0 0.0
    %804 = vmatpush1.xpose.msra.mxu0 0.0
    %805 = vmatprep.mubr.f32.mxu0 0.0
    %806 = vmatmul.mubr.f32.gmra.mrb[0].mxu0 %v735
    %v807 = vpop.f32.mrb[0].mxu0
    %v808 = vadd.f32 %v304, %v807
    %v809 = vpop.f32.mrb[0].mxu0
    %810 = vdwg.mxu0
    %v811 = vsel %vm466, %v726, -inf
    %812 = vmax.xlane.f32.xlu0 %v811
    %v813 = vpop.xlane.xlu0 %812
    %v814 = vsel %vm466, %v808, -inf
    %815 = vmax.xlane.f32.xlu0 %v814
    %v816 = vpop.xlane.xlu0 %815
    %v817 = vsub.f32 %v726, %v813
    %v818 = vsub.f32 %v808, %v816
    %v819 = vmul.f32 %v817, 1.442695
    %v820 = vpow.pop %v819
    %v821 = vmul.f32 %v818, 1.442695
    %v822 = vpow.pop %v821
    %v823 = vsel %vm466, %v820, 0.0
    %824 = vadd.xlane.f32.xlu0 %v823
    %v825 = vpop.xlane.xlu0 %824
    %v826 = vsel %vm466, %v822, 0.0
    %827 = vadd.xlane.f32.xlu0 %v826
    %v828 = vpop.xlane.xlu0 %827
    %v829 = vrcp.pop %v825
    %v830 = vrcp.pop %v828
    %v831 = vmul.f32 %v820, %v829
    %v832 = vmul.f32 %v822, %v830
    %833 = vrot.lane.b32.xlu0 %v277, 88
    %v834 = vpop.permute.xlu0 %833
    %835 = vrot.lane.b32.xlu0 %v282, 88
    %v836 = vpop.permute.xlu0 %835
    %v840 = vsel %vm466, %v831, 0
    %842 = vmatprep.subr.mxu0 0.0
    %843 = vmatpush1.msra.mxu0 %v834
    %844 = vmatprep.subr.mxu0 0.0
    %845 = vmatpush1.msra.mxu0 %v836
    %846 = vmatprep.subr.mxu0 0.0
    %847 = vmatpush1.msra.mxu0 0.0
    %848 = vmatprep.subr.mxu0 0.0
    %849 = vmatpush1.msra.mxu0 0.0
    %850 = vmatprep.subr.mxu0 0.0
    %851 = vmatpush1.msra.mxu0 0.0
    %852 = vmatprep.subr.mxu0 0.0
    %853 = vmatpush1.msra.mxu0 0.0
    %854 = vmatprep.subr.mxu0 0.0
    %855 = vmatpush1.msra.mxu0 0.0
    %856 = vmatprep.subr.mxu0 0.0
    %857 = vmatpush1.msra.mxu0 0.0
    %858 = vmatprep.subr.mxu0 0.0
    %859 = vmatpush1.msra.mxu0 0.0
    %860 = vmatprep.subr.mxu0 0.0
    %861 = vmatpush1.msra.mxu0 0.0
    %862 = vmatprep.subr.mxu0 0.0
    %863 = vmatpush1.msra.mxu0 0.0
    %864 = vmatprep.subr.mxu0 0.0
    %865 = vmatpush1.msra.mxu0 0.0
    %866 = vmatprep.subr.mxu0 0.0
    %867 = vmatpush1.msra.mxu0 0.0
    %868 = vmatprep.subr.mxu0 0.0
    %869 = vmatpush1.msra.mxu0 0.0
    %870 = vmatprep.subr.mxu0 0.0
    %871 = vmatpush1.msra.mxu0 0.0
    %872 = vmatprep.subr.mxu0 0.0
    %873 = vmatpush1.msra.mxu0 0.0
    %874 = vmatprep.subr.mxu0 0.0
    %875 = vmatpush1.msra.mxu0 0.0
    %876 = vmatprep.subr.mxu0 0.0
    %877 = vmatpush1.msra.mxu0 0.0
    %878 = vmatprep.subr.mxu0 0.0
    %879 = vmatpush1.msra.mxu0 0.0
    %880 = vmatprep.subr.mxu0 0.0
    %881 = vmatpush1.msra.mxu0 0.0
    %882 = vmatprep.subr.mxu0 0.0
    %883 = vmatpush1.msra.mxu0 0.0
    %884 = vmatprep.subr.mxu0 0.0
    %885 = vmatpush1.msra.mxu0 0.0
    %886 = vmatprep.subr.mxu0 0.0
    %887 = vmatpush1.msra.mxu0 0.0
    %888 = vmatprep.subr.mxu0 0.0
    %889 = vmatpush1.msra.mxu0 0.0
    %890 = vmatprep.subr.mxu0 0.0
    %891 = vmatpush1.msra.mxu0 0.0
    %892 = vmatprep.subr.mxu0 0.0
    %893 = vmatpush1.msra.mxu0 0.0
    %894 = vmatprep.subr.mxu0 0.0
    %895 = vmatpush1.msra.mxu0 0.0
    %896 = vmatprep.subr.mxu0 0.0
    %897 = vmatpush1.msra.mxu0 0.0
    %898 = vmatprep.subr.mxu0 0.0
    %899 = vmatpush1.msra.mxu0 0.0
    %900 = vmatprep.subr.mxu0 0.0
    %901 = vmatpush1.msra.mxu0 0.0
    %902 = vmatprep.subr.mxu0 0.0
    %903 = vmatpush1.msra.mxu0 0.0
    %904 = vmatprep.subr.mxu0 0.0
    %905 = vmatpush1.msra.mxu0 0.0
    %906 = vmatprep.mubr.f32.mxu0 0.0
    %907 = vmatmul.mubr.f32.gmra.mrb[0].mxu0 %v840
    %v908 = vpop.f32.mrb[0].mxu0
    %v909 = vadd.f32 0.0, %v908
    %v910 = vpop.f32.mrb[0].mxu0
    %911 = vdwg.mxu0
    %912 = vrot.lane.b32.xlu0 %v287, 88
    %v913 = vpop.permute.xlu0 %912
    %914 = vrot.lane.b32.xlu0 %v292, 88
    %v915 = vpop.permute.xlu0 %914
    %v919 = vsel %vm466, %v832, 0
    %921 = vmatprep.subr.mxu0 0.0
    %922 = vmatpush1.msra.mxu0 %v913
    %923 = vmatprep.subr.mxu0 0.0
    %924 = vmatpush1.msra.mxu0 %v915
    %925 = vmatprep.subr.mxu0 0.0
    %926 = vmatpush1.msra.mxu0 0.0
    %927 = vmatprep.subr.mxu0 0.0
    %928 = vmatpush1.msra.mxu0 0.0
    %929 = vmatprep.subr.mxu0 0.0
    %930 = vmatpush1.msra.mxu0 0.0
    %931 = vmatprep.subr.mxu0 0.0
    %932 = vmatpush1.msra.mxu0 0.0
    %933 = vmatprep.subr.mxu0 0.0
    %934 = vmatpush1.msra.mxu0 0.0
    %935 = vmatprep.subr.mxu0 0.0
    %936 = vmatpush1.msra.mxu0 0.0
    %937 = vmatprep.subr.mxu0 0.0
    %938 = vmatpush1.msra.mxu0 0.0
    %939 = vmatprep.subr.mxu0 0.0
    %940 = vmatpush1.msra.mxu0 0.0
    %941 = vmatprep.subr.mxu0 0.0
    %942 = vmatpush1.msra.mxu0 0.0
    %943 = vmatprep.subr.mxu0 0.0
    %944 = vmatpush1.msra.mxu0 0.0
    %945 = vmatprep.subr.mxu0 0.0
    %946 = vmatpush1.msra.mxu0 0.0
    %947 = vmatprep.subr.mxu0 0.0
    %948 = vmatpush1.msra.mxu0 0.0
    %949 = vmatprep.subr.mxu0 0.0
    %950 = vmatpush1.msra.mxu0 0.0
    %951 = vmatprep.subr.mxu0 0.0
    %952 = vmatpush1.msra.mxu0 0.0
    %953 = vmatprep.subr.mxu0 0.0
    %954 = vmatpush1.msra.mxu0 0.0
    %955 = vmatprep.subr.mxu0 0.0
    %956 = vmatpush1.msra.mxu0 0.0
    %957 = vmatprep.subr.mxu0 0.0
    %958 = vmatpush1.msra.mxu0 0.0
    %959 = vmatprep.subr.mxu0 0.0
    %960 = vmatpush1.msra.mxu0 0.0
    %961 = vmatprep.subr.mxu0 0.0
    %962 = vmatpush1.msra.mxu0 0.0
    %963 = vmatprep.subr.mxu0 0.0
    %964 = vmatpush1.msra.mxu0 0.0
    %965 = vmatprep.subr.mxu0 0.0
    %966 = vmatpush1.msra.mxu0 0.0
    %967 = vmatprep.subr.mxu0 0.0
    %968 = vmatpush1.msra.mxu0 0.0
    %969 = vmatprep.subr.mxu0 0.0
    %970 = vmatpush1.msra.mxu0 0.0
    %971 = vmatprep.subr.mxu0 0.0
    %972 = vmatpush1.msra.mxu0 0.0
    %973 = vmatprep.subr.mxu0 0.0
    %974 = vmatpush1.msra.mxu0 0.0
    %975 = vmatprep.subr.mxu0 0.0
    %976 = vmatpush1.msra.mxu0 0.0
    %977 = vmatprep.subr.mxu0 0.0
    %978 = vmatpush1.msra.mxu0 0.0
    %979 = vmatprep.subr.mxu0 0.0
    %980 = vmatpush1.msra.mxu0 0.0
    %981 = vmatprep.subr.mxu0 0.0
    %982 = vmatpush1.msra.mxu0 0.0
    %983 = vmatprep.subr.mxu0 0.0
    %984 = vmatpush1.msra.mxu0 0.0
    %985 = vmatprep.mubr.f32.mxu0 0.0
    %986 = vmatmul.mubr.f32.gmra.mrb[0].mxu0 %v919
    %v987 = vpop.f32.mrb[0].mxu0
    %v988 = vadd.f32 0.0, %v987
    %v989 = vpop.f32.mrb[0].mxu0
    %990 = vdwg.mxu0
    %v992 = vsel %vm307, %v909, 0
    %v995 = vsel %vm307, %v988, 0
    %997 = vmatprep.subr.mxu0 0.0
    %998 = vmatpush1.msra.mxu0 %v91
    %999 = vmatprep.subr.mxu0 0.0
    %1000 = vmatpush1.msra.mxu0 0.0
    %1001 = vmatprep.subr.mxu0 0.0
    %1002 = vmatpush1.msra.mxu0 0.0
    %1003 = vmatprep.subr.mxu0 0.0
    %1004 = vmatpush1.msra.mxu0 0.0
    %1005 = vmatprep.subr.mxu0 0.0
    %1006 = vmatpush1.msra.mxu0 0.0
    %1007 = vmatprep.subr.mxu0 0.0
    %1008 = vmatpush1.msra.mxu0 0.0
    %1009 = vmatprep.subr.mxu0 0.0
    %1010 = vmatpush1.msra.mxu0 0.0
    %1011 = vmatprep.subr.mxu0 0.0
    %1012 = vmatpush1.msra.mxu0 0.0
    %1013 = vmatprep.subr.mxu0 0.0
    %1014 = vmatpush1.msra.mxu0 0.0
    %1015 = vmatprep.subr.mxu0 0.0
    %1016 = vmatpush1.msra.mxu0 0.0
    %1017 = vmatprep.subr.mxu0 0.0
    %1018 = vmatpush1.msra.mxu0 0.0
    %1019 = vmatprep.subr.mxu0 0.0
    %1020 = vmatpush1.msra.mxu0 0.0
    %1021 = vmatprep.subr.mxu0 0.0
    %1022 = vmatpush1.msra.mxu0 0.0
    %1023 = vmatprep.subr.mxu0 0.0
    %1024 = vmatpush1.msra.mxu0 0.0
    %1025 = vmatprep.subr.mxu0 0.0
    %1026 = vmatpush1.msra.mxu0 0.0
    %1027 = vmatprep.subr.mxu0 0.0
    %1028 = vmatpush1.msra.mxu0 0.0
    %1029 = vmatprep.subr.mxu0 0.0
    %1030 = vmatpush1.msra.mxu0 0.0
    %1031 = vmatprep.subr.mxu0 0.0
    %1032 = vmatpush1.msra.mxu0 0.0
    %1033 = vmatprep.subr.mxu0 0.0
    %1034 = vmatpush1.msra.mxu0 0.0
    %1035 = vmatprep.subr.mxu0 0.0
    %1036 = vmatpush1.msra.mxu0 0.0
    %1037 = vmatprep.subr.mxu0 0.0
    %1038 = vmatpush1.msra.mxu0 0.0
    %1039 = vmatprep.subr.mxu0 0.0
    %1040 = vmatpush1.msra.mxu0 0.0
    %1041 = vmatprep.subr.mxu0 0.0
    %1042 = vmatpush1.msra.mxu0 0.0
    %1043 = vmatprep.subr.mxu0 0.0
    %1044 = vmatpush1.msra.mxu0 0.0
    %1045 = vmatprep.subr.mxu0 0.0
    %1046 = vmatpush1.msra.mxu0 0.0
    %1047 = vmatprep.subr.mxu0 0.0
    %1048 = vmatpush1.msra.mxu0 0.0
    %1049 = vmatprep.subr.mxu0 0.0
    %1050 = vmatpush1.msra.mxu0 0.0
    %1051 = vmatprep.subr.mxu0 0.0
    %1052 = vmatpush1.msra.mxu0 0.0
    %1053 = vmatprep.subr.mxu0 0.0
    %1054 = vmatpush1.msra.mxu0 0.0
    %1055 = vmatprep.subr.mxu0 0.0
    %1056 = vmatpush1.msra.mxu0 0.0
    %1057 = vmatprep.subr.mxu0 0.0
    %1058 = vmatpush1.msra.mxu0 0.0
    %1059 = vmatprep.subr.mxu0 0.0
    %1060 = vmatpush1.msra.mxu0 0.0
    %1061 = vmatprep.mubr.f32.mxu0 0.0
    %1062 = vmatmul.mubr.f32.gmra.mrb[0].mxu0 %v992
    %v1063 = vpop.f32.mrb[0].mxu0
    %v1064 = vadd.f32 0.0, %v1063
    %v1065 = vpop.f32.mrb[0].mxu0
    %1066 = vmatprep.mubr.f32.mxu0 0.0
    %1067 = vmatmul.mubr.f32.gmra.mrb[0].mxu0 %v995
    %v1068 = vpop.f32.mrb[0].mxu0
    %v1069 = vadd.f32 0.0, %v1068
    %v1070 = vpop.f32.mrb[0].mxu0
    %1071 = vdwg.mxu0
    %v1073 = vsel %vm307, %v565, 0
    %v1076 = vsel %vm307, %v644, 0
    %1078 = vmatprep.subr.mxu0 0.0
    %1079 = vmatpush1.msra.mxu0 %v90
    %1080 = vmatprep.subr.mxu0 0.0
    %1081 = vmatpush1.msra.mxu0 0.0
    %1082 = vmatprep.subr.mxu0 0.0
    %1083 = vmatpush1.msra.mxu0 0.0
    %1084 = vmatprep.subr.mxu0 0.0
    %1085 = vmatpush1.msra.mxu0 0.0
    %1086 = vmatprep.subr.mxu0 0.0
    %1087 = vmatpush1.msra.mxu0 0.0
    %1088 = vmatprep.subr.mxu0 0.0
    %1089 = vmatpush1.msra.mxu0 0.0
    %1090 = vmatprep.subr.mxu0 0.0
    %1091 = vmatpush1.msra.mxu0 0.0
    %1092 = vmatprep.subr.mxu0 0.0
    %1093 = vmatpush1.msra.mxu0 0.0
    %1094 = vmatprep.subr.mxu0 0.0
    %1095 = vmatpush1.msra.mxu0 0.0
    %1096 = vmatprep.subr.mxu0 0.0
    %1097 = vmatpush1.msra.mxu0 0.0
    %1098 = vmatprep.subr.mxu0 0.0
    %1099 = vmatpush1.msra.mxu0 0.0
    %1100 = vmatprep.subr.mxu0 0.0
    %1101 = vmatpush1.msra.mxu0 0.0
    %1102 = vmatprep.subr.mxu0 0.0
    %1103 = vmatpush1.msra.mxu0 0.0
    %1104 = vmatprep.subr.mxu0 0.0
    %1105 = vmatpush1.msra.mxu0 0.0
    %1106 = vmatprep.subr.mxu0 0.0
    %1107 = vmatpush1.msra.mxu0 0.0
    %1108 = vmatprep.subr.mxu0 0.0
    %1109 = vmatpush1.msra.mxu0 0.0
    %1110 = vmatprep.subr.mxu0 0.0
    %1111 = vmatpush1.msra.mxu0 0.0
    %1112 = vmatprep.subr.mxu0 0.0
    %1113 = vmatpush1.msra.mxu0 0.0
    %1114 = vmatprep.subr.mxu0 0.0
    %1115 = vmatpush1.msra.mxu0 0.0
    %1116 = vmatprep.subr.mxu0 0.0
    %1117 = vmatpush1.msra.mxu0 0.0
    %1118 = vmatprep.subr.mxu0 0.0
    %1119 = vmatpush1.msra.mxu0 0.0
    %1120 = vmatprep.subr.mxu0 0.0
    %1121 = vmatpush1.msra.mxu0 0.0
    %1122 = vmatprep.subr.mxu0 0.0
    %1123 = vmatpush1.msra.mxu0 0.0
    %1124 = vmatprep.subr.mxu0 0.0
    %1125 = vmatpush1.msra.mxu0 0.0
    %1126 = vmatprep.subr.mxu0 0.0
    %1127 = vmatpush1.msra.mxu0 0.0
    %1128 = vmatprep.subr.mxu0 0.0
    %1129 = vmatpush1.msra.mxu0 0.0
    %1130 = vmatprep.subr.mxu0 0.0
    %1131 = vmatpush1.msra.mxu0 0.0
    %1132 = vmatprep.subr.mxu0 0.0
    %1133 = vmatpush1.msra.mxu0 0.0
    %1134 = vmatprep.subr.mxu0 0.0
    %1135 = vmatpush1.msra.mxu0 0.0
    %1136 = vmatprep.subr.mxu0 0.0
    %1137 = vmatpush1.msra.mxu0 0.0
    %1138 = vmatprep.subr.mxu0 0.0
    %1139 = vmatpush1.msra.mxu0 0.0
    %1140 = vmatprep.subr.mxu0 0.0
    %1141 = vmatpush1.msra.mxu0 0.0
    %1142 = vmatprep.mubr.f32.mxu0 0.0
    %1143 = vmatmul.mubr.f32.gmra.mrb[0].mxu0 %v1073
    %v1144 = vpop.f32.mrb[0].mxu0
    %v1145 = vadd.f32 %v1064, %v1144
    %v1146 = vpop.f32.mrb[0].mxu0
    %1147 = vmatprep.mubr.f32.mxu0 0.0
    %1148 = vmatmul.mubr.f32.gmra.mrb[0].mxu0 %v1076
    %v1149 = vpop.f32.mrb[0].mxu0
    %v1150 = vadd.f32 %v1069, %v1149
    %v1151 = vpop.f32.mrb[0].mxu0
    %1152 = vdwg.mxu0
    %1153 = vrot.lane.b32.xlu0 %v186, 112
    %v1154 = vpop.permute.xlu0 %1153
    %1155 = vrot.lane.b32.xlu0 %v277, 112
    %v1156 = vpop.permute.xlu0 %1155
    %1157 = vrot.lane.b32.xlu0 %v282, 112
    %v1158 = vpop.permute.xlu0 %1157
    %v1159 = vsel %vm307, %v1154, 0
    %v1161 = vsel %vm307, %v1156, 0
    %v1163 = vsel %vm307, %v1158, 0
    %1165 = vmatprep.subr.mxu0 0.0
    %1166 = vmatpush1.xpose.msra.mxu0 %v1161
    %1167 = vmatprep.subr.mxu0 0.0
    %1168 = vmatpush1.xpose.msra.mxu0 %v1163
    %1169 = vmatprep.subr.mxu0 0.0
    %1170 = vmatpush1.xpose.msra.mxu0 0.0
    %1171 = vmatprep.subr.mxu0 0.0
    %1172 = vmatpush1.xpose.msra.mxu0 0.0
    %1173 = vmatprep.subr.mxu0 0.0
    %1174 = vmatpush1.xpose.msra.mxu0 0.0
    %1175 = vmatprep.subr.mxu0 0.0
    %1176 = vmatpush1.xpose.msra.mxu0 0.0
    %1177 = vmatprep.subr.mxu0 0.0
    %1178 = vmatpush1.xpose.msra.mxu0 0.0
    %1179 = vmatprep.subr.mxu0 0.0
    %1180 = vmatpush1.xpose.msra.mxu0 0.0
    %1181 = vmatprep.subr.mxu0 0.0
    %1182 = vmatpush1.xpose.msra.mxu0 0.0
    %1183 = vmatprep.subr.mxu0 0.0
    %1184 = vmatpush1.xpose.msra.mxu0 0.0
    %1185 = vmatprep.subr.mxu0 0.0
    %1186 = vmatpush1.xpose.msra.mxu0 0.0
    %1187 = vmatprep.subr.mxu0 0.0
    %1188 = vmatpush1.xpose.msra.mxu0 0.0
    %1189 = vmatprep.subr.mxu0 0.0
    %1190 = vmatpush1.xpose.msra.mxu0 0.0
    %1191 = vmatprep.subr.mxu0 0.0
    %1192 = vmatpush1.xpose.msra.mxu0 0.0
    %1193 = vmatprep.subr.mxu0 0.0
    %1194 = vmatpush1.xpose.msra.mxu0 0.0
    %1195 = vmatprep.subr.mxu0 0.0
    %1196 = vmatpush1.xpose.msra.mxu0 0.0
    %1197 = vmatprep.subr.mxu0 0.0
    %1198 = vmatpush1.xpose.msra.mxu0 0.0
    %1199 = vmatprep.subr.mxu0 0.0
    %1200 = vmatpush1.xpose.msra.mxu0 0.0
    %1201 = vmatprep.subr.mxu0 0.0
    %1202 = vmatpush1.xpose.msra.mxu0 0.0
    %1203 = vmatprep.subr.mxu0 0.0
    %1204 = vmatpush1.xpose.msra.mxu0 0.0
    %1205 = vmatprep.subr.mxu0 0.0
    %1206 = vmatpush1.xpose.msra.mxu0 0.0
    %1207 = vmatprep.subr.mxu0 0.0
    %1208 = vmatpush1.xpose.msra.mxu0 0.0
    %1209 = vmatprep.subr.mxu0 0.0
    %1210 = vmatpush1.xpose.msra.mxu0 0.0
    %1211 = vmatprep.subr.mxu0 0.0
    %1212 = vmatpush1.xpose.msra.mxu0 0.0
    %1213 = vmatprep.subr.mxu0 0.0
    %1214 = vmatpush1.xpose.msra.mxu0 0.0
    %1215 = vmatprep.subr.mxu0 0.0
    %1216 = vmatpush1.xpose.msra.mxu0 0.0
    %1217 = vmatprep.subr.mxu0 0.0
    %1218 = vmatpush1.xpose.msra.mxu0 0.0
    %1219 = vmatprep.subr.mxu0 0.0
    %1220 = vmatpush1.xpose.msra.mxu0 0.0
    %1221 = vmatprep.subr.mxu0 0.0
    %1222 = vmatpush1.xpose.msra.mxu0 0.0
    %1223 = vmatprep.subr.mxu0 0.0
    %1224 = vmatpush1.xpose.msra.mxu0 0.0
    %1225 = vmatprep.subr.mxu0 0.0
    %1226 = vmatpush1.xpose.msra.mxu0 0.0
    %1227 = vmatprep.subr.mxu0 0.0
    %1228 = vmatpush1.xpose.msra.mxu0 0.0
    %1229 = vmatprep.mubr.f32.mxu0 0.0
    %1230 = vmatmul.mubr.f32.gmra.mrb[0].mxu0 %v1159
    %v1231 = vpop.f32.mrb[0].mxu0
    %v1232 = vadd.f32 %v300, %v1231
    %v1233 = vpop.f32.mrb[0].mxu0
    %1234 = vdwg.mxu0
    %1235 = vrot.lane.b32.xlu0 %v191, 112
    %v1236 = vpop.permute.xlu0 %1235
    %1237 = vrot.lane.b32.xlu0 %v287, 112
    %v1238 = vpop.permute.xlu0 %1237
    %1239 = vrot.lane.b32.xlu0 %v292, 112
    %v1240 = vpop.permute.xlu0 %1239
    %v1241 = vsel %vm307, %v1236, 0
    %v1243 = vsel %vm307, %v1238, 0
    %v1245 = vsel %vm307, %v1240, 0
    %1247 = vmatprep.subr.mxu0 0.0
    %1248 = vmatpush1.xpose.msra.mxu0 %v1243
    %1249 = vmatprep.subr.mxu0 0.0
    %1250 = vmatpush1.xpose.msra.mxu0 %v1245
    %1251 = vmatprep.subr.mxu0 0.0
    %1252 = vmatpush1.xpose.msra.mxu0 0.0
    %1253 = vmatprep.subr.mxu0 0.0
    %1254 = vmatpush1.xpose.msra.mxu0 0.0
    %1255 = vmatprep.subr.mxu0 0.0
    %1256 = vmatpush1.xpose.msra.mxu0 0.0
    %1257 = vmatprep.subr.mxu0 0.0
    %1258 = vmatpush1.xpose.msra.mxu0 0.0
    %1259 = vmatprep.subr.mxu0 0.0
    %1260 = vmatpush1.xpose.msra.mxu0 0.0
    %1261 = vmatprep.subr.mxu0 0.0
    %1262 = vmatpush1.xpose.msra.mxu0 0.0
    %1263 = vmatprep.subr.mxu0 0.0
    %1264 = vmatpush1.xpose.msra.mxu0 0.0
    %1265 = vmatprep.subr.mxu0 0.0
    %1266 = vmatpush1.xpose.msra.mxu0 0.0
    %1267 = vmatprep.subr.mxu0 0.0
    %1268 = vmatpush1.xpose.msra.mxu0 0.0
    %1269 = vmatprep.subr.mxu0 0.0
    %1270 = vmatpush1.xpose.msra.mxu0 0.0
    %1271 = vmatprep.subr.mxu0 0.0
    %1272 = vmatpush1.xpose.msra.mxu0 0.0
    %1273 = vmatprep.subr.mxu0 0.0
    %1274 = vmatpush1.xpose.msra.mxu0 0.0
    %1275 = vmatprep.subr.mxu0 0.0
    %1276 = vmatpush1.xpose.msra.mxu0 0.0
    %1277 = vmatprep.subr.mxu0 0.0
    %1278 = vmatpush1.xpose.msra.mxu0 0.0
    %1279 = vmatprep.subr.mxu0 0.0
    %1280 = vmatpush1.xpose.msra.mxu0 0.0
    %1281 = vmatprep.subr.mxu0 0.0
    %1282 = vmatpush1.xpose.msra.mxu0 0.0
    %1283 = vmatprep.subr.mxu0 0.0
    %1284 = vmatpush1.xpose.msra.mxu0 0.0
    %1285 = vmatprep.subr.mxu0 0.0
    %1286 = vmatpush1.xpose.msra.mxu0 0.0
    %1287 = vmatprep.subr.mxu0 0.0
    %1288 = vmatpush1.xpose.msra.mxu0 0.0
    %1289 = vmatprep.subr.mxu0 0.0
    %1290 = vmatpush1.xpose.msra.mxu0 0.0
    %1291 = vmatprep.subr.mxu0 0.0
    %1292 = vmatpush1.xpose.msra.mxu0 0.0
    %1293 = vmatprep.subr.mxu0 0.0
    %1294 = vmatpush1.xpose.msra.mxu0 0.0
    %1295 = vmatprep.subr.mxu0 0.0
    %1296 = vmatpush1.xpose.msra.mxu0 0.0
    %1297 = vmatprep.subr.mxu0 0.0
    %1298 = vmatpush1.xpose.msra.mxu0 0.0
    %1299 = vmatprep.subr.mxu0 0.0
    %1300 = vmatpush1.xpose.msra.mxu0 0.0
    %1301 = vmatprep.subr.mxu0 0.0
    %1302 = vmatpush1.xpose.msra.mxu0 0.0
    %1303 = vmatprep.subr.mxu0 0.0
    %1304 = vmatpush1.xpose.msra.mxu0 0.0
    %1305 = vmatprep.subr.mxu0 0.0
    %1306 = vmatpush1.xpose.msra.mxu0 0.0
    %1307 = vmatprep.subr.mxu0 0.0
    %1308 = vmatpush1.xpose.msra.mxu0 0.0
    %1309 = vmatprep.subr.mxu0 0.0
    %1310 = vmatpush1.xpose.msra.mxu0 0.0
    %1311 = vmatprep.mubr.f32.mxu0 0.0
    %1312 = vmatmul.mubr.f32.gmra.mrb[0].mxu0 %v1241
    %v1313 = vpop.f32.mrb[0].mxu0
    %v1314 = vadd.f32 %v304, %v1313
    %v1315 = vpop.f32.mrb[0].mxu0
    %1316 = vdwg.mxu0
    %v1317 = vsel %vm466, %v1232, -inf
    %1318 = vmax.xlane.f32.xlu0 %v1317
    %v1319 = vpop.xlane.xlu0 %1318
    %v1320 = vsel %vm466, %v1314, -inf
    %1321 = vmax.xlane.f32.xlu0 %v1320
    %v1322 = vpop.xlane.xlu0 %1321
    %v1323 = vsub.f32 %v1232, %v1319
    %v1324 = vsub.f32 %v1314, %v1322
    %v1325 = vmul.f32 %v1323, 1.442695
    %v1326 = vpow.pop %v1325
    %v1327 = vmul.f32 %v1324, 1.442695
    %v1328 = vpow.pop %v1327
    %v1329 = vsel %vm466, %v1326, 0.0
    %1330 = vadd.xlane.f32.xlu0 %v1329
    %v1331 = vpop.xlane.xlu0 %1330
    %v1332 = vsel %vm466, %v1328, 0.0
    %1333 = vadd.xlane.f32.xlu0 %v1332
    %v1334 = vpop.xlane.xlu0 %1333
    %v1335 = vrcp.pop %v1331
    %v1336 = vrcp.pop %v1334
    %v1337 = vmul.f32 %v1326, %v1335
    %v1338 = vmul.f32 %v1328, %v1336
    %1339 = vrot.lane.b32.xlu0 %v277, 80
    %v1340 = vpop.permute.xlu0 %1339
    %1341 = vrot.lane.b32.xlu0 %v282, 80
    %v1342 = vpop.permute.xlu0 %1341
    %v1346 = vsel %vm466, %v1337, 0
    %1348 = vmatprep.subr.mxu0 0.0
    %1349 = vmatpush1.msra.mxu0 %v1340
    %1350 = vmatprep.subr.mxu0 0.0
    %1351 = vmatpush1.msra.mxu0 %v1342
    %1352 = vmatprep.subr.mxu0 0.0
    %1353 = vmatpush1.msra.mxu0 0.0
    %1354 = vmatprep.subr.mxu0 0.0
    %1355 = vmatpush1.msra.mxu0 0.0
    %1356 = vmatprep.subr.mxu0 0.0
    %1357 = vmatpush1.msra.mxu0 0.0
    %1358 = vmatprep.subr.mxu0 0.0
    %1359 = vmatpush1.msra.mxu0 0.0
    %1360 = vmatprep.subr.mxu0 0.0
    %1361 = vmatpush1.msra.mxu0 0.0
    %1362 = vmatprep.subr.mxu0 0.0
    %1363 = vmatpush1.msra.mxu0 0.0
    %1364 = vmatprep.subr.mxu0 0.0
    %1365 = vmatpush1.msra.mxu0 0.0
    %1366 = vmatprep.subr.mxu0 0.0
    %1367 = vmatpush1.msra.mxu0 0.0
    %1368 = vmatprep.subr.mxu0 0.0
    %1369 = vmatpush1.msra.mxu0 0.0
    %1370 = vmatprep.subr.mxu0 0.0
    %1371 = vmatpush1.msra.mxu0 0.0
    %1372 = vmatprep.subr.mxu0 0.0
    %1373 = vmatpush1.msra.mxu0 0.0
    %1374 = vmatprep.subr.mxu0 0.0
    %1375 = vmatpush1.msra.mxu0 0.0
    %1376 = vmatprep.subr.mxu0 0.0
    %1377 = vmatpush1.msra.mxu0 0.0
    %1378 = vmatprep.subr.mxu0 0.0
    %1379 = vmatpush1.msra.mxu0 0.0
    %1380 = vmatprep.subr.mxu0 0.0
    %1381 = vmatpush1.msra.mxu0 0.0
    %1382 = vmatprep.subr.mxu0 0.0
    %1383 = vmatpush1.msra.mxu0 0.0
    %1384 = vmatprep.subr.mxu0 0.0
    %1385 = vmatpush1.msra.mxu0 0.0
    %1386 = vmatprep.subr.mxu0 0.0
    %1387 = vmatpush1.msra.mxu0 0.0
    %1388 = vmatprep.subr.mxu0 0.0
    %1389 = vmatpush1.msra.mxu0 0.0
    %1390 = vmatprep.subr.mxu0 0.0
    %1391 = vmatpush1.msra.mxu0 0.0
    %1392 = vmatprep.subr.mxu0 0.0
    %1393 = vmatpush1.msra.mxu0 0.0
    %1394 = vmatprep.subr.mxu0 0.0
    %1395 = vmatpush1.msra.mxu0 0.0
    %1396 = vmatprep.subr.mxu0 0.0
    %1397 = vmatpush1.msra.mxu0 0.0
    %1398 = vmatprep.subr.mxu0 0.0
    %1399 = vmatpush1.msra.mxu0 0.0
    %1400 = vmatprep.subr.mxu0 0.0
    %1401 = vmatpush1.msra.mxu0 0.0
    %1402 = vmatprep.subr.mxu0 0.0
    %1403 = vmatpush1.msra.mxu0 0.0
    %1404 = vmatprep.subr.mxu0 0.0
    %1405 = vmatpush1.msra.mxu0 0.0
    %1406 = vmatprep.subr.mxu0 0.0
    %1407 = vmatpush1.msra.mxu0 0.0
    %1408 = vmatprep.subr.mxu0 0.0
    %1409 = vmatpush1.msra.mxu0 0.0
    %1410 = vmatprep.subr.mxu0 0.0
    %1411 = vmatpush1.msra.mxu0 0.0
    %1412 = vmatprep.mubr.f32.mxu0 0.0
    %1413 = vmatmul.mubr.f32.gmra.mrb[0].mxu0 %v1346
    %v1414 = vpop.f32.mrb[0].mxu0
    %v1415 = vadd.f32 0.0, %v1414
    %v1416 = vpop.f32.mrb[0].mxu0
    %1417 = vdwg.mxu0
    %1418 = vrot.lane.b32.xlu0 %v287, 80
    %v1419 = vpop.permute.xlu0 %1418
    %1420 = vrot.lane.b32.xlu0 %v292, 80
    %v1421 = vpop.permute.xlu0 %1420
    %v1425 = vsel %vm466, %v1338, 0
    %1427 = vmatprep.subr.mxu0 0.0
    %1428 = vmatpush1.msra.mxu0 %v1419
    %1429 = vmatprep.subr.mxu0 0.0
    %1430 = vmatpush1.msra.mxu0 %v1421
    %1431 = vmatprep.subr.mxu0 0.0
    %1432 = vmatpush1.msra.mxu0 0.0
    %1433 = vmatprep.subr.mxu0 0.0
    %1434 = vmatpush1.msra.mxu0 0.0
    %1435 = vmatprep.subr.mxu0 0.0
    %1436 = vmatpush1.msra.mxu0 0.0
    %1437 = vmatprep.subr.mxu0 0.0
    %1438 = vmatpush1.msra.mxu0 0.0
    %1439 = vmatprep.subr.mxu0 0.0
    %1440 = vmatpush1.msra.mxu0 0.0
    %1441 = vmatprep.subr.mxu0 0.0
    %1442 = vmatpush1.msra.mxu0 0.0
    %1443 = vmatprep.subr.mxu0 0.0
    %1444 = vmatpush1.msra.mxu0 0.0
    %1445 = vmatprep.subr.mxu0 0.0
    %1446 = vmatpush1.msra.mxu0 0.0
    %1447 = vmatprep.subr.mxu0 0.0
    %1448 = vmatpush1.msra.mxu0 0.0
    %1449 = vmatprep.subr.mxu0 0.0
    %1450 = vmatpush1.msra.mxu0 0.0
    %1451 = vmatprep.subr.mxu0 0.0
    %1452 = vmatpush1.msra.mxu0 0.0
    %1453 = vmatprep.subr.mxu0 0.0
    %1454 = vmatpush1.msra.mxu0 0.0
    %1455 = vmatprep.subr.mxu0 0.0
    %1456 = vmatpush1.msra.mxu0 0.0
    %1457 = vmatprep.subr.mxu0 0.0
    %1458 = vmatpush1.msra.mxu0 0.0
    %1459 = vmatprep.subr.mxu0 0.0
    %1460 = vmatpush1.msra.mxu0 0.0
    %1461 = vmatprep.subr.mxu0 0.0
    %1462 = vmatpush1.msra.mxu0 0.0
    %1463 = vmatprep.subr.mxu0 0.0
    %1464 = vmatpush1.msra.mxu0 0.0
    %1465 = vmatprep.subr.mxu0 0.0
    %1466 = vmatpush1.msra.mxu0 0.0
    %1467 = vmatprep.subr.mxu0 0.0
    %1468 = vmatpush1.msra.mxu0 0.0
    %1469 = vmatprep.subr.mxu0 0.0
    %1470 = vmatpush1.msra.mxu0 0.0
    %1471 = vmatprep.subr.mxu0 0.0
    %1472 = vmatpush1.msra.mxu0 0.0
    %1473 = vmatprep.subr.mxu0 0.0
    %1474 = vmatpush1.msra.mxu0 0.0
    %1475 = vmatprep.subr.mxu0 0.0
    %1476 = vmatpush1.msra.mxu0 0.0
    %1477 = vmatprep.subr.mxu0 0.0
    %1478 = vmatpush1.msra.mxu0 0.0
    %1479 = vmatprep.subr.mxu0 0.0
    %1480 = vmatpush1.msra.mxu0 0.0
    %1481 = vmatprep.subr.mxu0 0.0
    %1482 = vmatpush1.msra.mxu0 0.0
    %1483 = vmatprep.subr.mxu0 0.0
    %1484 = vmatpush1.msra.mxu0 0.0
    %1485 = vmatprep.subr.mxu0 0.0
    %1486 = vmatpush1.msra.mxu0 0.0
    %1487 = vmatprep.subr.mxu0 0.0
    %1488 = vmatpush1.msra.mxu0 0.0
    %1489 = vmatprep.subr.mxu0 0.0
    %1490 = vmatpush1.msra.mxu0 0.0
    %1491 = vmatprep.mubr.f32.mxu0 0.0
    %1492 = vmatmul.mubr.f32.gmra.mrb[0].mxu0 %v1425
    %v1493 = vpop.f32.mrb[0].mxu0
    %v1494 = vadd.f32 0.0, %v1493
    %v1495 = vpop.f32.mrb[0].mxu0
    %1496 = vdwg.mxu0
    %v1498 = vsel %vm307, %v1415, 0
    %v1501 = vsel %vm307, %v1494, 0
    %1503 = vmatprep.subr.mxu0 0.0
    %1504 = vmatpush1.msra.mxu0 %v92
    %1505 = vmatprep.subr.mxu0 0.0
    %1506 = vmatpush1.msra.mxu0 0.0
    %1507 = vmatprep.subr.mxu0 0.0
    %1508 = vmatpush1.msra.mxu0 0.0
    %1509 = vmatprep.subr.mxu0 0.0
    %1510 = vmatpush1.msra.mxu0 0.0
    %1511 = vmatprep.subr.mxu0 0.0
    %1512 = vmatpush1.msra.mxu0 0.0
    %1513 = vmatprep.subr.mxu0 0.0
    %1514 = vmatpush1.msra.mxu0 0.0
    %1515 = vmatprep.subr.mxu0 0.0
    %1516 = vmatpush1.msra.mxu0 0.0
    %1517 = vmatprep.subr.mxu0 0.0
    %1518 = vmatpush1.msra.mxu0 0.0
    %1519 = vmatprep.subr.mxu0 0.0
    %1520 = vmatpush1.msra.mxu0 0.0
    %1521 = vmatprep.subr.mxu0 0.0
    %1522 = vmatpush1.msra.mxu0 0.0
    %1523 = vmatprep.subr.mxu0 0.0
    %1524 = vmatpush1.msra.mxu0 0.0
    %1525 = vmatprep.subr.mxu0 0.0
    %1526 = vmatpush1.msra.mxu0 0.0
    %1527 = vmatprep.subr.mxu0 0.0
    %1528 = vmatpush1.msra.mxu0 0.0
    %1529 = vmatprep.subr.mxu0 0.0
    %1530 = vmatpush1.msra.mxu0 0.0
    %1531 = vmatprep.subr.mxu0 0.0
    %1532 = vmatpush1.msra.mxu0 0.0
    %1533 = vmatprep.subr.mxu0 0.0
    %1534 = vmatpush1.msra.mxu0 0.0
    %1535 = vmatprep.subr.mxu0 0.0
    %1536 = vmatpush1.msra.mxu0 0.0
    %1537 = vmatprep.subr.mxu0 0.0
    %1538 = vmatpush1.msra.mxu0 0.0
    %1539 = vmatprep.subr.mxu0 0.0
    %1540 = vmatpush1.msra.mxu0 0.0
    %1541 = vmatprep.subr.mxu0 0.0
    %1542 = vmatpush1.msra.mxu0 0.0
    %1543 = vmatprep.subr.mxu0 0.0
    %1544 = vmatpush1.msra.mxu0 0.0
    %1545 = vmatprep.subr.mxu0 0.0
    %1546 = vmatpush1.msra.mxu0 0.0
    %1547 = vmatprep.subr.mxu0 0.0
    %1548 = vmatpush1.msra.mxu0 0.0
    %1549 = vmatprep.subr.mxu0 0.0
    %1550 = vmatpush1.msra.mxu0 0.0
    %1551 = vmatprep.subr.mxu0 0.0
    %1552 = vmatpush1.msra.mxu0 0.0
    %1553 = vmatprep.subr.mxu0 0.0
    %1554 = vmatpush1.msra.mxu0 0.0
    %1555 = vmatprep.subr.mxu0 0.0
    %1556 = vmatpush1.msra.mxu0 0.0
    %1557 = vmatprep.subr.mxu0 0.0
    %1558 = vmatpush1.msra.mxu0 0.0
    %1559 = vmatprep.subr.mxu0 0.0
    %1560 = vmatpush1.msra.mxu0 0.0
    %1561 = vmatprep.subr.mxu0 0.0
    %1562 = vmatpush1.msra.mxu0 0.0
    %1563 = vmatprep.subr.mxu0 0.0
    %1564 = vmatpush1.msra.mxu0 0.0
    %1565 = vmatprep.subr.mxu0 0.0
    %1566 = vmatpush1.msra.mxu0 0.0
    %1567 = vmatprep.mubr.f32.mxu0 0.0
    %1568 = vmatmul.mubr.f32.gmra.mrb[0].mxu0 %v1498
    %v1569 = vpop.f32.mrb[0].mxu0
    %v1570 = vadd.f32 0.0, %v1569
    %v1571 = vpop.f32.mrb[0].mxu0
    %1572 = vmatprep.mubr.f32.mxu0 0.0
    %1573 = vmatmul.mubr.f32.gmra.mrb[0].mxu0 %v1501
    %v1574 = vpop.f32.mrb[0].mxu0
    %v1575 = vadd.f32 0.0, %v1574
    %v1576 = vpop.f32.mrb[0].mxu0
    %1577 = vdwg.mxu0
    %v1578 = vadd.f32 %v1145, %v1570
    %v1579 = vadd.f32 %v1150, %v1575
    %1580 = vrot.lane.b32.xlu0 %v186, 104
    %v1581 = vpop.permute.xlu0 %1580
    %1582 = vrot.lane.b32.xlu0 %v277, 104
    %v1583 = vpop.permute.xlu0 %1582
    %1584 = vrot.lane.b32.xlu0 %v282, 104
    %v1585 = vpop.permute.xlu0 %1584
    %v1586 = vsel %vm307, %v1581, 0
    %v1588 = vsel %vm307, %v1583, 0
    %v1590 = vsel %vm307, %v1585, 0
    %1592 = vmatprep.subr.mxu0 0.0
    %1593 = vmatpush1.xpose.msra.mxu0 %v1588
    %1594 = vmatprep.subr.mxu0 0.0
    %1595 = vmatpush1.xpose.msra.mxu0 %v1590
    %1596 = vmatprep.subr.mxu0 0.0
    %1597 = vmatpush1.xpose.msra.mxu0 0.0
    %1598 = vmatprep.subr.mxu0 0.0
    %1599 = vmatpush1.xpose.msra.mxu0 0.0
    %1600 = vmatprep.subr.mxu0 0.0
    %1601 = vmatpush1.xpose.msra.mxu0 0.0
    %1602 = vmatprep.subr.mxu0 0.0
    %1603 = vmatpush1.xpose.msra.mxu0 0.0
    %1604 = vmatprep.subr.mxu0 0.0
    %1605 = vmatpush1.xpose.msra.mxu0 0.0
    %1606 = vmatprep.subr.mxu0 0.0
    %1607 = vmatpush1.xpose.msra.mxu0 0.0
    %1608 = vmatprep.subr.mxu0 0.0
    %1609 = vmatpush1.xpose.msra.mxu0 0.0
    %1610 = vmatprep.subr.mxu0 0.0
    %1611 = vmatpush1.xpose.msra.mxu0 0.0
    %1612 = vmatprep.subr.mxu0 0.0
    %1613 = vmatpush1.xpose.msra.mxu0 0.0
    %1614 = vmatprep.subr.mxu0 0.0
    %1615 = vmatpush1.xpose.msra.mxu0 0.0
    %1616 = vmatprep.subr.mxu0 0.0
    %1617 = vmatpush1.xpose.msra.mxu0 0.0
    %1618 = vmatprep.subr.mxu0 0.0
    %1619 = vmatpush1.xpose.msra.mxu0 0.0
    %1620 = vmatprep.subr.mxu0 0.0
    %1621 = vmatpush1.xpose.msra.mxu0 0.0
    %1622 = vmatprep.subr.mxu0 0.0
    %1623 = vmatpush1.xpose.msra.mxu0 0.0
    %1624 = vmatprep.subr.mxu0 0.0
    %1625 = vmatpush1.xpose.msra.mxu0 0.0
    %1626 = vmatprep.subr.mxu0 0.0
    %1627 = vmatpush1.xpose.msra.mxu0 0.0
    %1628 = vmatprep.subr.mxu0 0.0
    %1629 = vmatpush1.xpose.msra.mxu0 0.0
    %1630 = vmatprep.subr.mxu0 0.0
    %1631 = vmatpush1.xpose.msra.mxu0 0.0
    %1632 = vmatprep.subr.mxu0 0.0
    %1633 = vmatpush1.xpose.msra.mxu0 0.0
    %1634 = vmatprep.subr.mxu0 0.0
    %1635 = vmatpush1.xpose.msra.mxu0 0.0
    %1636 = vmatprep.subr.mxu0 0.0
    %1637 = vmatpush1.xpose.msra.mxu0 0.0
    %1638 = vmatprep.subr.mxu0 0.0
    %1639 = vmatpush1.xpose.msra.mxu0 0.0
    %1640 = vmatprep.subr.mxu0 0.0
    %1641 = vmatpush1.xpose.msra.mxu0 0.0
    %1642 = vmatprep.subr.mxu0 0.0
    %1643 = vmatpush1.xpose.msra.mxu0 0.0
    %1644 = vmatprep.subr.mxu0 0.0
    %1645 = vmatpush1.xpose.msra.mxu0 0.0
    %1646 = vmatprep.subr.mxu0 0.0
    %1647 = vmatpush1.xpose.msra.mxu0 0.0
    %1648 = vmatprep.subr.mxu0 0.0
    %1649 = vmatpush1.xpose.msra.mxu0 0.0
    %1650 = vmatprep.subr.mxu0 0.0
    %1651 = vmatpush1.xpose.msra.mxu0 0.0
    %1652 = vmatprep.subr.mxu0 0.0
    %1653 = vmatpush1.xpose.msra.mxu0 0.0
    %1654 = vmatprep.subr.mxu0 0.0
    %1655 = vmatpush1.xpose.msra.mxu0 0.0
    %1656 = vmatprep.mubr.f32.mxu0 0.0
    %1657 = vmatmul.mubr.f32.gmra.mrb[0].mxu0 %v1586
    %v1658 = vpop.f32.mrb[0].mxu0
    %v1659 = vadd.f32 %v300, %v1658
    %v1660 = vpop.f32.mrb[0].mxu0
    %1661 = vdwg.mxu0
    %1662 = vrot.lane.b32.xlu0 %v191, 104
    %v1663 = vpop.permute.xlu0 %1662
    %1664 = vrot.lane.b32.xlu0 %v287, 104
    %v1665 = vpop.permute.xlu0 %1664
    %1666 = vrot.lane.b32.xlu0 %v292, 104
    %v1667 = vpop.permute.xlu0 %1666
    %v1668 = vsel %vm307, %v1663, 0
    %v1670 = vsel %vm307, %v1665, 0
    %v1672 = vsel %vm307, %v1667, 0
    %1674 = vmatprep.subr.mxu0 0.0
    %1675 = vmatpush1.xpose.msra.mxu0 %v1670
    %1676 = vmatprep.subr.mxu0 0.0
    %1677 = vmatpush1.xpose.msra.mxu0 %v1672
    %1678 = vmatprep.subr.mxu0 0.0
    %1679 = vmatpush1.xpose.msra.mxu0 0.0
    %1680 = vmatprep.subr.mxu0 0.0
    %1681 = vmatpush1.xpose.msra.mxu0 0.0
    %1682 = vmatprep.subr.mxu0 0.0
    %1683 = vmatpush1.xpose.msra.mxu0 0.0
    %1684 = vmatprep.subr.mxu0 0.0
    %1685 = vmatpush1.xpose.msra.mxu0 0.0
    %1686 = vmatprep.subr.mxu0 0.0
    %1687 = vmatpush1.xpose.msra.mxu0 0.0
    %1688 = vmatprep.subr.mxu0 0.0
    %1689 = vmatpush1.xpose.msra.mxu0 0.0
    %1690 = vmatprep.subr.mxu0 0.0
    %1691 = vmatpush1.xpose.msra.mxu0 0.0
    %1692 = vmatprep.subr.mxu0 0.0
    %1693 = vmatpush1.xpose.msra.mxu0 0.0
    %1694 = vmatprep.subr.mxu0 0.0
    %1695 = vmatpush1.xpose.msra.mxu0 0.0
    %1696 = vmatprep.subr.mxu0 0.0
    %1697 = vmatpush1.xpose.msra.mxu0 0.0
    %1698 = vmatprep.subr.mxu0 0.0
    %1699 = vmatpush1.xpose.msra.mxu0 0.0
    %1700 = vmatprep.subr.mxu0 0.0
    %1701 = vmatpush1.xpose.msra.mxu0 0.0
    %1702 = vmatprep.subr.mxu0 0.0
    %1703 = vmatpush1.xpose.msra.mxu0 0.0
    %1704 = vmatprep.subr.mxu0 0.0
    %1705 = vmatpush1.xpose.msra.mxu0 0.0
    %1706 = vmatprep.subr.mxu0 0.0
    %1707 = vmatpush1.xpose.msra.mxu0 0.0
    %1708 = vmatprep.subr.mxu0 0.0
    %1709 = vmatpush1.xpose.msra.mxu0 0.0
    %1710 = vmatprep.subr.mxu0 0.0
    %1711 = vmatpush1.xpose.msra.mxu0 0.0
    %1712 = vmatprep.subr.mxu0 0.0
    %1713 = vmatpush1.xpose.msra.mxu0 0.0
    %1714 = vmatprep.subr.mxu0 0.0
    %1715 = vmatpush1.xpose.msra.mxu0 0.0
    %1716 = vmatprep.subr.mxu0 0.0
    %1717 = vmatpush1.xpose.msra.mxu0 0.0
    %1718 = vmatprep.subr.mxu0 0.0
    %1719 = vmatpush1.xpose.msra.mxu0 0.0
    %1720 = vmatprep.subr.mxu0 0.0
    %1721 = vmatpush1.xpose.msra.mxu0 0.0
    %1722 = vmatprep.subr.mxu0 0.0
    %1723 = vmatpush1.xpose.msra.mxu0 0.0
    %1724 = vmatprep.subr.mxu0 0.0
    %1725 = vmatpush1.xpose.msra.mxu0 0.0
    %1726 = vmatprep.subr.mxu0 0.0
    %1727 = vmatpush1.xpose.msra.mxu0 0.0
    %1728 = vmatprep.subr.mxu0 0.0
    %1729 = vmatpush1.xpose.msra.mxu0 0.0
    %1730 = vmatprep.subr.mxu0 0.0
    %1731 = vmatpush1.xpose.msra.mxu0 0.0
    %1732 = vmatprep.subr.mxu0 0.0
    %1733 = vmatpush1.xpose.msra.mxu0 0.0
    %1734 = vmatprep.subr.mxu0 0.0
    %1735 = vmatpush1.xpose.msra.mxu0 0.0
    %1736 = vmatprep.subr.mxu0 0.0
    %1737 = vmatpush1.xpose.msra.mxu0 0.0
    %1738 = vmatprep.mubr.f32.mxu0 0.0
    %1739 = vmatmul.mubr.f32.gmra.mrb[0].mxu0 %v1668
    %v1740 = vpop.f32.mrb[0].mxu0
    %v1741 = vadd.f32 %v304, %v1740
    %v1742 = vpop.f32.mrb[0].mxu0
    %1743 = vdwg.mxu0
    %v1744 = vsel %vm466, %v1659, -inf
    %1745 = vmax.xlane.f32.xlu0 %v1744
    %v1746 = vpop.xlane.xlu0 %1745
    %v1747 = vsel %vm466, %v1741, -inf
    %1748 = vmax.xlane.f32.xlu0 %v1747
    %v1749 = vpop.xlane.xlu0 %1748
    %v1750 = vsub.f32 %v1659, %v1746
    %v1751 = vsub.f32 %v1741, %v1749
    %v1752 = vmul.f32 %v1750, 1.442695
    %v1753 = vpow.pop %v1752
    %v1754 = vmul.f32 %v1751, 1.442695
    %v1755 = vpow.pop %v1754
    %v1756 = vsel %vm466, %v1753, 0.0
    %1757 = vadd.xlane.f32.xlu0 %v1756
    %v1758 = vpop.xlane.xlu0 %1757
    %v1759 = vsel %vm466, %v1755, 0.0
    %1760 = vadd.xlane.f32.xlu0 %v1759
    %v1761 = vpop.xlane.xlu0 %1760
    %v1762 = vrcp.pop %v1758
    %v1763 = vrcp.pop %v1761
    %v1764 = vmul.f32 %v1753, %v1762
    %v1765 = vmul.f32 %v1755, %v1763
    %1766 = vrot.lane.b32.xlu0 %v277, 72
    %v1767 = vpop.permute.xlu0 %1766
    %1768 = vrot.lane.b32.xlu0 %v282, 72
    %v1769 = vpop.permute.xlu0 %1768
    %v1773 = vsel %vm466, %v1764, 0
    %1775 = vmatprep.subr.mxu0 0.0
    %1776 = vmatpush1.msra.mxu0 %v1767
    %1777 = vmatprep.subr.mxu0 0.0
    %1778 = vmatpush1.msra.mxu0 %v1769
    %1779 = vmatprep.subr.mxu0 0.0
    %1780 = vmatpush1.msra.mxu0 0.0
    %1781 = vmatprep.subr.mxu0 0.0
    %1782 = vmatpush1.msra.mxu0 0.0
    %1783 = vmatprep.subr.mxu0 0.0
    %1784 = vmatpush1.msra.mxu0 0.0
    %1785 = vmatprep.subr.mxu0 0.0
    %1786 = vmatpush1.msra.mxu0 0.0
    %1787 = vmatprep.subr.mxu0 0.0
    %1788 = vmatpush1.msra.mxu0 0.0
    %1789 = vmatprep.subr.mxu0 0.0
    %1790 = vmatpush1.msra.mxu0 0.0
    %1791 = vmatprep.subr.mxu0 0.0
    %1792 = vmatpush1.msra.mxu0 0.0
    %1793 = vmatprep.subr.mxu0 0.0
    %1794 = vmatpush1.msra.mxu0 0.0
    %1795 = vmatprep.subr.mxu0 0.0
    %1796 = vmatpush1.msra.mxu0 0.0
    %1797 = vmatprep.subr.mxu0 0.0
    %1798 = vmatpush1.msra.mxu0 0.0
    %1799 = vmatprep.subr.mxu0 0.0
    %1800 = vmatpush1.msra.mxu0 0.0
    %1801 = vmatprep.subr.mxu0 0.0
    %1802 = vmatpush1.msra.mxu0 0.0
    %1803 = vmatprep.subr.mxu0 0.0
    %1804 = vmatpush1.msra.mxu0 0.0
    %1805 = vmatprep.subr.mxu0 0.0
    %1806 = vmatpush1.msra.mxu0 0.0
    %1807 = vmatprep.subr.mxu0 0.0
    %1808 = vmatpush1.msra.mxu0 0.0
    %1809 = vmatprep.subr.mxu0 0.0
    %1810 = vmatpush1.msra.mxu0 0.0
    %1811 = vmatprep.subr.mxu0 0.0
    %1812 = vmatpush1.msra.mxu0 0.0
    %1813 = vmatprep.subr.mxu0 0.0
    %1814 = vmatpush1.msra.mxu0 0.0
    %1815 = vmatprep.subr.mxu0 0.0
    %1816 = vmatpush1.msra.mxu0 0.0
    %1817 = vmatprep.subr.mxu0 0.0
    %1818 = vmatpush1.msra.mxu0 0.0
    %1819 = vmatprep.subr.mxu0 0.0
    %1820 = vmatpush1.msra.mxu0 0.0
    %1821 = vmatprep.subr.mxu0 0.0
    %1822 = vmatpush1.msra.mxu0 0.0
    %1823 = vmatprep.subr.mxu0 0.0
    %1824 = vmatpush1.msra.mxu0 0.0
    %1825 = vmatprep.subr.mxu0 0.0
    %1826 = vmatpush1.msra.mxu0 0.0
    %1827 = vmatprep.subr.mxu0 0.0
    %1828 = vmatpush1.msra.mxu0 0.0
    %1829 = vmatprep.subr.mxu0 0.0
    %1830 = vmatpush1.msra.mxu0 0.0
    %1831 = vmatprep.subr.mxu0 0.0
    %1832 = vmatpush1.msra.mxu0 0.0
    %1833 = vmatprep.subr.mxu0 0.0
    %1834 = vmatpush1.msra.mxu0 0.0
    %1835 = vmatprep.subr.mxu0 0.0
    %1836 = vmatpush1.msra.mxu0 0.0
    %1837 = vmatprep.subr.mxu0 0.0
    %1838 = vmatpush1.msra.mxu0 0.0
    %1839 = vmatprep.mubr.f32.mxu0 0.0
    %1840 = vmatmul.mubr.f32.gmra.mrb[0].mxu0 %v1773
    %v1841 = vpop.f32.mrb[0].mxu0
    %v1842 = vadd.f32 0.0, %v1841
    %v1843 = vpop.f32.mrb[0].mxu0
    %1844 = vdwg.mxu0
    %1845 = vrot.lane.b32.xlu0 %v287, 72
    %v1846 = vpop.permute.xlu0 %1845
    %1847 = vrot.lane.b32.xlu0 %v292, 72
    %v1848 = vpop.permute.xlu0 %1847
    %v1852 = vsel %vm466, %v1765, 0
    %1854 = vmatprep.subr.mxu0 0.0
    %1855 = vmatpush1.msra.mxu0 %v1846
    %1856 = vmatprep.subr.mxu0 0.0
    %1857 = vmatpush1.msra.mxu0 %v1848
    %1858 = vmatprep.subr.mxu0 0.0
    %1859 = vmatpush1.msra.mxu0 0.0
    %1860 = vmatprep.subr.mxu0 0.0
    %1861 = vmatpush1.msra.mxu0 0.0
    %1862 = vmatprep.subr.mxu0 0.0
    %1863 = vmatpush1.msra.mxu0 0.0
    %1864 = vmatprep.subr.mxu0 0.0
    %1865 = vmatpush1.msra.mxu0 0.0
    %1866 = vmatprep.subr.mxu0 0.0
    %1867 = vmatpush1.msra.mxu0 0.0
    %1868 = vmatprep.subr.mxu0 0.0
    %1869 = vmatpush1.msra.mxu0 0.0
    %1870 = vmatprep.subr.mxu0 0.0
    %1871 = vmatpush1.msra.mxu0 0.0
    %1872 = vmatprep.subr.mxu0 0.0
    %1873 = vmatpush1.msra.mxu0 0.0
    %1874 = vmatprep.subr.mxu0 0.0
    %1875 = vmatpush1.msra.mxu0 0.0
    %1876 = vmatprep.subr.mxu0 0.0
    %1877 = vmatpush1.msra.mxu0 0.0
    %1878 = vmatprep.subr.mxu0 0.0
    %1879 = vmatpush1.msra.mxu0 0.0
    %1880 = vmatprep.subr.mxu0 0.0
    %1881 = vmatpush1.msra.mxu0 0.0
    %1882 = vmatprep.subr.mxu0 0.0
    %1883 = vmatpush1.msra.mxu0 0.0
    %1884 = vmatprep.subr.mxu0 0.0
    %1885 = vmatpush1.msra.mxu0 0.0
    %1886 = vmatprep.subr.mxu0 0.0
    %1887 = vmatpush1.msra.mxu0 0.0
    %1888 = vmatprep.subr.mxu0 0.0
    %1889 = vmatpush1.msra.mxu0 0.0
    %1890 = vmatprep.subr.mxu0 0.0
    %1891 = vmatpush1.msra.mxu0 0.0
    %1892 = vmatprep.subr.mxu0 0.0
    %1893 = vmatpush1.msra.mxu0 0.0
    %1894 = vmatprep.subr.mxu0 0.0
    %1895 = vmatpush1.msra.mxu0 0.0
    %1896 = vmatprep.subr.mxu0 0.0
    %1897 = vmatpush1.msra.mxu0 0.0
    %1898 = vmatprep.subr.mxu0 0.0
    %1899 = vmatpush1.msra.mxu0 0.0
    %1900 = vmatprep.subr.mxu0 0.0
    %1901 = vmatpush1.msra.mxu0 0.0
    %1902 = vmatprep.subr.mxu0 0.0
    %1903 = vmatpush1.msra.mxu0 0.0
    %1904 = vmatprep.subr.mxu0 0.0
    %1905 = vmatpush1.msra.mxu0 0.0
    %1906 = vmatprep.subr.mxu0 0.0
    %1907 = vmatpush1.msra.mxu0 0.0
    %1908 = vmatprep.subr.mxu0 0.0
    %1909 = vmatpush1.msra.mxu0 0.0
    %1910 = vmatprep.subr.mxu0 0.0
    %1911 = vmatpush1.msra.mxu0 0.0
    %1912 = vmatprep.subr.mxu0 0.0
    %1913 = vmatpush1.msra.mxu0 0.0
    %1914 = vmatprep.subr.mxu0 0.0
    %1915 = vmatpush1.msra.mxu0 0.0
    %1916 = vmatprep.subr.mxu0 0.0
    %1917 = vmatpush1.msra.mxu0 0.0
    %1918 = vmatprep.mubr.f32.mxu0 0.0
    %1919 = vmatmul.mubr.f32.gmra.mrb[0].mxu0 %v1852
    %v1920 = vpop.f32.mrb[0].mxu0
    %v1921 = vadd.f32 0.0, %v1920
    %v1922 = vpop.f32.mrb[0].mxu0
    %1923 = vdwg.mxu0
    %v1925 = vsel %vm307, %v1842, 0
    %v1928 = vsel %vm307, %v1921, 0
    %1930 = vmatprep.subr.mxu0 0.0
    %1931 = vmatpush1.msra.mxu0 %v93
    %1932 = vmatprep.subr.mxu0 0.0
    %1933 = vmatpush1.msra.mxu0 0.0
    %1934 = vmatprep.subr.mxu0 0.0
    %1935 = vmatpush1.msra.mxu0 0.0
    %1936 = vmatprep.subr.mxu0 0.0
    %1937 = vmatpush1.msra.mxu0 0.0
    %1938 = vmatprep.subr.mxu0 0.0
    %1939 = vmatpush1.msra.mxu0 0.0
    %1940 = vmatprep.subr.mxu0 0.0
    %1941 = vmatpush1.msra.mxu0 0.0
    %1942 = vmatprep.subr.mxu0 0.0
    %1943 = vmatpush1.msra.mxu0 0.0
    %1944 = vmatprep.subr.mxu0 0.0
    %1945 = vmatpush1.msra.mxu0 0.0
    %1946 = vmatprep.subr.mxu0 0.0
    %1947 = vmatpush1.msra.mxu0 0.0
    %1948 = vmatprep.subr.mxu0 0.0
    %1949 = vmatpush1.msra.mxu0 0.0
    %1950 = vmatprep.subr.mxu0 0.0
    %1951 = vmatpush1.msra.mxu0 0.0
    %1952 = vmatprep.subr.mxu0 0.0
    %1953 = vmatpush1.msra.mxu0 0.0
    %1954 = vmatprep.subr.mxu0 0.0
    %1955 = vmatpush1.msra.mxu0 0.0
    %1956 = vmatprep.subr.mxu0 0.0
    %1957 = vmatpush1.msra.mxu0 0.0
    %1958 = vmatprep.subr.mxu0 0.0
    %1959 = vmatpush1.msra.mxu0 0.0
    %1960 = vmatprep.subr.mxu0 0.0
    %1961 = vmatpush1.msra.mxu0 0.0
    %1962 = vmatprep.subr.mxu0 0.0
    %1963 = vmatpush1.msra.mxu0 0.0
    %1964 = vmatprep.subr.mxu0 0.0
    %1965 = vmatpush1.msra.mxu0 0.0
    %1966 = vmatprep.subr.mxu0 0.0
    %1967 = vmatpush1.msra.mxu0 0.0
    %1968 = vmatprep.subr.mxu0 0.0
    %1969 = vmatpush1.msra.mxu0 0.0
    %1970 = vmatprep.subr.mxu0 0.0
    %1971 = vmatpush1.msra.mxu0 0.0
    %1972 = vmatprep.subr.mxu0 0.0
    %1973 = vmatpush1.msra.mxu0 0.0
    %1974 = vmatprep.subr.mxu0 0.0
    %1975 = vmatpush1.msra.mxu0 0.0
    %1976 = vmatprep.subr.mxu0 0.0
    %1977 = vmatpush1.msra.mxu0 0.0
    %1978 = vmatprep.subr.mxu0 0.0
    %1979 = vmatpush1.msra.mxu0 0.0
    %1980 = vmatprep.subr.mxu0 0.0
    %1981 = vmatpush1.msra.mxu0 0.0
    %1982 = vmatprep.subr.mxu0 0.0
    %1983 = vmatpush1.msra.mxu0 0.0
    %1984 = vmatprep.subr.mxu0 0.0
    %1985 = vmatpush1.msra.mxu0 0.0
    %1986 = vmatprep.subr.mxu0 0.0
    %1987 = vmatpush1.msra.mxu0 0.0
    %1988 = vmatprep.subr.mxu0 0.0
    %1989 = vmatpush1.msra.mxu0 0.0
    %1990 = vmatprep.subr.mxu0 0.0
    %1991 = vmatpush1.msra.mxu0 0.0
    %1992 = vmatprep.subr.mxu0 0.0
    %1993 = vmatpush1.msra.mxu0 0.0
    %1994 = vmatprep.mubr.f32.mxu0 0.0
    %1995 = vmatmul.mubr.f32.gmra.mrb[0].mxu0 %v1925
    %v1996 = vpop.f32.mrb[0].mxu0
    %v1997 = vadd.f32 0.0, %v1996
    %v1998 = vpop.f32.mrb[0].mxu0
    %1999 = vmatprep.mubr.f32.mxu0 0.0
    %2000 = vmatmul.mubr.f32.gmra.mrb[0].mxu0 %v1928
    %v2001 = vpop.f32.mrb[0].mxu0
    %v2002 = vadd.f32 0.0, %v2001
    %v2003 = vpop.f32.mrb[0].mxu0
    %2004 = vdwg.mxu0
    %v2005 = vadd.f32 %v1578, %v1997
    %v2006 = vadd.f32 %v1579, %v2002
    %v2007 = vlaneseq
    %v2008 = vshrl.u32 %v2007, 7
    %v2009 = vsub.s32 2, %v2008
    %v2010 = vrot.slane %v106, %v2009
    %v2011 = vadd.f32 %v2005, %v2010
    %v2012 = vadd.f32 %v2006, %v2010
    %v2013 = vadd.f32 %v2011, %v74
    %v2014 = vadd.f32 %v2012, %v75
    %v2015 = vsel %vm112, %v2013, 0.0
    %2016 = vadd.xlane.f32.xlu0 %v2015
    %v2017 = vpop.xlane.xlu0 %2016
    %v2018 = vsel %vm112, %v2014, 0.0
    %2019 = vadd.xlane.f32.xlu0 %v2018
    %v2020 = vpop.xlane.xlu0 %2019
    %v2021 = vrcp.pop 32.0
    %v2022 = vmul.f32 %v2017, %v2021
    %v2023 = vmul.f32 %v2020, %v2021
    %v2024 = vsub.f32 %v2013, %v2022
    %v2025 = vsub.f32 %v2014, %v2023
    %v2026 = vmul.f32 %v2024, %v2024
    %v2027 = vmul.f32 %v2025, %v2025
    %v2028 = vsel %vm112, %v2026, 0.0
    %2029 = vadd.xlane.f32.xlu0 %v2028
    %v2030 = vpop.xlane.xlu0 %2029
    %v2031 = vsel %vm112, %v2027, 0.0
    %2032 = vadd.xlane.f32.xlu0 %v2031
    %v2033 = vpop.xlane.xlu0 %2032
    %v2034 = vmul.f32 %v2030, %v2021
    %v2035 = vmul.f32 %v2033, %v2021
    %v2036 = vadd.f32 %v2034, 1e-12
    %v2037 = vadd.f32 %v2035, 1e-12
    %v2038 = vrsqrt.pop %v2036
    %v2039 = vmul.f32 %v2036, %v2038
    %vm2040 = vcmp.eq.f32.partialorder %v2036, inf
    %v2041 = vsel %vm2040, %v2036, %v2039
    %vm2042 = vcmp.eq.f32.partialorder %v2036, 0.0
    %v2043 = vand.u32 %v2036, 2147483648
    %v2044 = vsel %vm2042, %v2043, %v2041
    %v2045 = vrsqrt.pop %v2037
    %v2046 = vmul.f32 %v2037, %v2045
    %vm2047 = vcmp.eq.f32.partialorder %v2037, inf
    %v2048 = vsel %vm2047, %v2037, %v2046
    %vm2049 = vcmp.eq.f32.partialorder %v2037, 0.0
    %v2050 = vand.u32 %v2037, 2147483648
    %v2051 = vsel %vm2049, %v2050, %v2048
    %v2052 = vrcp.pop %v2044
    %v2053 = vmul.f32 %v2024, %v2052
    %v2054 = vrcp.pop %v2051
    %v2055 = vmul.f32 %v2025, %v2054
    %v2056 = vlaneseq
    %v2057 = vshrl.u32 %v2056, 7
    %v2058 = vsub.s32 3, %v2057
    %v2059 = vrot.slane %v106, %v2058
    %v2060 = vmul.f32 %v2053, %v2059
    %v2061 = vmul.f32 %v2055, %v2059
    %v2062 = vlaneseq
    %v2063 = vshrl.u32 %v2062, 7
    %v2064 = vsub.s32 4, %v2063
    %v2065 = vrot.slane %v106, %v2064
    %v2066 = vadd.f32 %v2060, %v2065
    %v2067 = vadd.f32 %v2061, %v2065
    %v2068 = vlaneseq
    %v2069 = vshrl.u32 %v2068, 7
    %v2070 = vsub.s32 5, %v2069
    %v2071 = vrot.slane %v106, %v2070
    %v2073 = vsel %vm112, %v2066, 0
    %v2076 = vsel %vm112, %v2067, 0
    %2078 = vmatprep.subr.mxu0 0.0
    %2079 = vmatpush1.msra.mxu0 %v94
    %2080 = vmatprep.subr.mxu0 0.0
    %2081 = vmatpush1.msra.mxu0 %v95
    %2082 = vmatprep.subr.mxu0 0.0
    %2083 = vmatpush1.msra.mxu0 %v96
    %2084 = vmatprep.subr.mxu0 0.0
    %2085 = vmatpush1.msra.mxu0 %v97
    %2086 = vmatprep.subr.mxu0 0.0
    %2087 = vmatpush1.msra.mxu0 0.0
    %2088 = vmatprep.subr.mxu0 0.0
    %2089 = vmatpush1.msra.mxu0 0.0
    %2090 = vmatprep.subr.mxu0 0.0
    %2091 = vmatpush1.msra.mxu0 0.0
    %2092 = vmatprep.subr.mxu0 0.0
    %2093 = vmatpush1.msra.mxu0 0.0
    %2094 = vmatprep.subr.mxu0 0.0
    %2095 = vmatpush1.msra.mxu0 0.0
    %2096 = vmatprep.subr.mxu0 0.0
    %2097 = vmatpush1.msra.mxu0 0.0
    %2098 = vmatprep.subr.mxu0 0.0
    %2099 = vmatpush1.msra.mxu0 0.0
    %2100 = vmatprep.subr.mxu0 0.0
    %2101 = vmatpush1.msra.mxu0 0.0
    %2102 = vmatprep.subr.mxu0 0.0
    %2103 = vmatpush1.msra.mxu0 0.0
    %2104 = vmatprep.subr.mxu0 0.0
    %2105 = vmatpush1.msra.mxu0 0.0
    %2106 = vmatprep.subr.mxu0 0.0
    %2107 = vmatpush1.msra.mxu0 0.0
    %2108 = vmatprep.subr.mxu0 0.0
    %2109 = vmatpush1.msra.mxu0 0.0
    %2110 = vmatprep.subr.mxu0 0.0
    %2111 = vmatpush1.msra.mxu0 0.0
    %2112 = vmatprep.subr.mxu0 0.0
    %2113 = vmatpush1.msra.mxu0 0.0
    %2114 = vmatprep.subr.mxu0 0.0
    %2115 = vmatpush1.msra.mxu0 0.0
    %2116 = vmatprep.subr.mxu0 0.0
    %2117 = vmatpush1.msra.mxu0 0.0
    %2118 = vmatprep.subr.mxu0 0.0
    %2119 = vmatpush1.msra.mxu0 0.0
    %2120 = vmatprep.subr.mxu0 0.0
    %2121 = vmatpush1.msra.mxu0 0.0
    %2122 = vmatprep.subr.mxu0 0.0
    %2123 = vmatpush1.msra.mxu0 0.0
    %2124 = vmatprep.subr.mxu0 0.0
    %2125 = vmatpush1.msra.mxu0 0.0
    %2126 = vmatprep.subr.mxu0 0.0
    %2127 = vmatpush1.msra.mxu0 0.0
    %2128 = vmatprep.subr.mxu0 0.0
    %2129 = vmatpush1.msra.mxu0 0.0
    %2130 = vmatprep.subr.mxu0 0.0
    %2131 = vmatpush1.msra.mxu0 0.0
    %2132 = vmatprep.subr.mxu0 0.0
    %2133 = vmatpush1.msra.mxu0 0.0
    %2134 = vmatprep.subr.mxu0 0.0
    %2135 = vmatpush1.msra.mxu0 0.0
    %2136 = vmatprep.subr.mxu0 0.0
    %2137 = vmatpush1.msra.mxu0 0.0
    %2138 = vmatprep.subr.mxu0 0.0
    %2139 = vmatpush1.msra.mxu0 0.0
    %2140 = vmatprep.subr.mxu0 0.0
    %2141 = vmatpush1.msra.mxu0 0.0
    %2142 = vmatprep.mubr.f32.mxu0 0.0
    %2143 = vmatmul.mubr.f32.gmra.mrb[0].mxu0 %v2073
    %v2144 = vpop.f32.mrb[0].mxu0
    %v2145 = vadd.f32 %v2071, %v2144
    %v2146 = vpop.f32.mrb[0].mxu0
    %2147 = vmatprep.mubr.f32.mxu0 0.0
    %2148 = vmatmul.mubr.f32.gmra.mrb[0].mxu0 %v2076
    %v2149 = vpop.f32.mrb[0].mxu0
    %v2150 = vadd.f32 %v2071, %v2149
    %v2151 = vpop.f32.mrb[0].mxu0
    %2152 = vdwg.mxu0
    %v2153 = vmul.f32 %v2145, 0.5
    %v2154 = vmul.f32 %v2150, 0.5
    %v2155 = vrcp.pop 1.4142135
    %v2156 = vmul.f32 %v2145, %v2155
    %v2157 = vmul.f32 %v2150, %v2155
    %v2158 = verf.f32.pop %v2156
    %v2159 = verf.f32.pop %v2157
    %v2160 = vadd.f32 %v2158, 1.0
    %v2161 = vadd.f32 %v2159, 1.0
    %v2162 = vmul.f32 %v2153, %v2160
    %v2163 = vmul.f32 %v2154, %v2161
    %v2164 = vlaneseq
    %v2165 = vshrl.u32 %v2164, 7
    %v2166 = vsub.s32 6, %v2165
    %v2167 = vrot.slane %v106, %v2166
    %vm2168 = vcmask 523264
    %v2170 = vsel %vm2168, %v2162, 0
    %v2173 = vsel %vm2168, %v2163, 0
    %2175 = vmatprep.subr.mxu0 0.0
    %2176 = vmatpush1.msra.mxu0 %v98
    %2177 = vmatprep.subr.mxu0 0.0
    %2178 = vmatpush1.msra.mxu0 %v99
    %2179 = vmatprep.subr.mxu0 0.0
    %2180 = vmatpush1.msra.mxu0 %v100
    %2181 = vmatprep.subr.mxu0 0.0
    %2182 = vmatpush1.msra.mxu0 %v101
    %2183 = vmatprep.subr.mxu0 0.0
    %2184 = vmatpush1.msra.mxu0 %v102
    %2185 = vmatprep.subr.mxu0 0.0
    %2186 = vmatpush1.msra.mxu0 %v103
    %2187 = vmatprep.subr.mxu0 0.0
    %2188 = vmatpush1.msra.mxu0 %v104
    %2189 = vmatprep.subr.mxu0 0.0
    %2190 = vmatpush1.msra.mxu0 %v105
    %2191 = vmatprep.subr.mxu0 0.0
    %2192 = vmatpush1.msra.mxu0 0.0
    %2193 = vmatprep.subr.mxu0 0.0
    %2194 = vmatpush1.msra.mxu0 0.0
    %2195 = vmatprep.subr.mxu0 0.0
    %2196 = vmatpush1.msra.mxu0 0.0
    %2197 = vmatprep.subr.mxu0 0.0
    %2198 = vmatpush1.msra.mxu0 0.0
    %2199 = vmatprep.subr.mxu0 0.0
    %2200 = vmatpush1.msra.mxu0 0.0
    %2201 = vmatprep.subr.mxu0 0.0
    %2202 = vmatpush1.msra.mxu0 0.0
    %2203 = vmatprep.subr.mxu0 0.0
    %2204 = vmatpush1.msra.mxu0 0.0
    %2205 = vmatprep.subr.mxu0 0.0
    %2206 = vmatpush1.msra.mxu0 0.0
    %2207 = vmatprep.subr.mxu0 0.0
    %2208 = vmatpush1.msra.mxu0 0.0
    %2209 = vmatprep.subr.mxu0 0.0
    %2210 = vmatpush1.msra.mxu0 0.0
    %2211 = vmatprep.subr.mxu0 0.0
    %2212 = vmatpush1.msra.mxu0 0.0
    %2213 = vmatprep.subr.mxu0 0.0
    %2214 = vmatpush1.msra.mxu0 0.0
    %2215 = vmatprep.subr.mxu0 0.0
    %2216 = vmatpush1.msra.mxu0 0.0
    %2217 = vmatprep.subr.mxu0 0.0
    %2218 = vmatpush1.msra.mxu0 0.0
    %2219 = vmatprep.subr.mxu0 0.0
    %2220 = vmatpush1.msra.mxu0 0.0
    %2221 = vmatprep.subr.mxu0 0.0
    %2222 = vmatpush1.msra.mxu0 0.0
    %2223 = vmatprep.subr.mxu0 0.0
    %2224 = vmatpush1.msra.mxu0 0.0
    %2225 = vmatprep.subr.mxu0 0.0
    %2226 = vmatpush1.msra.mxu0 0.0
    %2227 = vmatprep.subr.mxu0 0.0
    %2228 = vmatpush1.msra.mxu0 0.0
    %2229 = vmatprep.subr.mxu0 0.0
    %2230 = vmatpush1.msra.mxu0 0.0
    %2231 = vmatprep.subr.mxu0 0.0
    %2232 = vmatpush1.msra.mxu0 0.0
    %2233 = vmatprep.subr.mxu0 0.0
    %2234 = vmatpush1.msra.mxu0 0.0
    %2235 = vmatprep.subr.mxu0 0.0
    %2236 = vmatpush1.msra.mxu0 0.0
    %2237 = vmatprep.subr.mxu0 0.0
    %2238 = vmatpush1.msra.mxu0 0.0
    %2239 = vmatprep.mubr.f32.mxu0 0.0
    %2240 = vmatmul.mubr.f32.gmra.mrb[0].mxu0 %v2170
    %v2241 = vpop.f32.mrb[0].mxu0
    %v2242 = vadd.f32 %v2167, %v2241
    %v2243 = vpop.f32.mrb[0].mxu0
    %2244 = vmatprep.mubr.f32.mxu0 0.0
    %2245 = vmatmul.mubr.f32.gmra.mrb[0].mxu0 %v2173
    %v2246 = vpop.f32.mrb[0].mxu0
    %v2247 = vadd.f32 %v2167, %v2246
    %v2248 = vpop.f32.mrb[0].mxu0
    %2249 = vdwg.mxu0
    %v2250 = vadd.f32 %v2242, %v2066
    %v2251 = vadd.f32 %v2247, %v2067
    %v2252 = vsel %vm112, %v2250, 0.0
    %2253 = vadd.xlane.f32.xlu0 %v2252
    %v2254 = vpop.xlane.xlu0 %2253
    %v2255 = vsel %vm112, %v2251, 0.0
    %2256 = vadd.xlane.f32.xlu0 %v2255
    %v2257 = vpop.xlane.xlu0 %2256
    %v2258 = vmul.f32 %v2254, %v2021
    %v2259 = vmul.f32 %v2257, %v2021
    %v2260 = vsub.f32 %v2250, %v2258
    %v2261 = vsub.f32 %v2251, %v2259
    %v2262 = vmul.f32 %v2260, %v2260
    %v2263 = vmul.f32 %v2261, %v2261
    %v2264 = vsel %vm112, %v2262, 0.0
    %2265 = vadd.xlane.f32.xlu0 %v2264
    %v2266 = vpop.xlane.xlu0 %2265
    %v2267 = vsel %vm112, %v2263, 0.0
    %2268 = vadd.xlane.f32.xlu0 %v2267
    %v2269 = vpop.xlane.xlu0 %2268
    %v2270 = vmul.f32 %v2266, %v2021
    %v2271 = vmul.f32 %v2269, %v2021
    %v2272 = vadd.f32 %v2270, 1e-12
    %v2273 = vadd.f32 %v2271, 1e-12
    %v2274 = vrsqrt.pop %v2272
    %v2275 = vmul.f32 %v2272, %v2274
    %vm2276 = vcmp.eq.f32.partialorder %v2272, inf
    %v2277 = vsel %vm2276, %v2272, %v2275
    %vm2278 = vcmp.eq.f32.partialorder %v2272, 0.0
    %v2279 = vand.u32 %v2272, 2147483648
    %v2280 = vsel %vm2278, %v2279, %v2277
    %v2281 = vrsqrt.pop %v2273
    %v2282 = vmul.f32 %v2273, %v2281
    %vm2283 = vcmp.eq.f32.partialorder %v2273, inf
    %v2284 = vsel %vm2283, %v2273, %v2282
    %vm2285 = vcmp.eq.f32.partialorder %v2273, 0.0
    %v2286 = vand.u32 %v2273, 2147483648
    %v2287 = vsel %vm2285, %v2286, %v2284
    %v2288 = vrcp.pop %v2280
    %v2289 = vmul.f32 %v2260, %v2288
    %v2290 = vrcp.pop %v2287
    %v2291 = vmul.f32 %v2261, %v2290
    %v2292 = vlaneseq
    %v2293 = vshrl.u32 %v2292, 7
    %v2294 = vsub.s32 7, %v2293
    %v2295 = vrot.slane %v106, %v2294
    %v2296 = vmul.f32 %v2289, %v2295
    %v2297 = vmul.f32 %v2291, %v2295
    %v2298 = vlaneseq
    %v2299 = vshrl.u32 %v2298, 7
    %v2300 = vsub.s32 0, %v2299
    %v2301 = vrot.slane %v107, %v2300
    %v2302 = vadd.f32 %v2296, %v2301
    %v2303 = vadd.f32 %v2297, %v2301
    %2304 = vst.msk [vmem:[#allocation8] sm:$0xff] %vm112, %v2302
    %2305 = vst.msk [vmem:[#allocation8 + $0x8] sm:$0xff] %vm112, %v2303
    %s2306 = scalar_lea.vmem %s3, 32
    %v2307 = vld [vmem:[%s2306] sm:$0xff]
    %v2308 = vld [vmem:[%s2306 + $0x8] sm:$0xff]
    %v2309 = vld [vmem:[%s2306 + $0x10] sm:$0xff]
    %v2310 = vld [vmem:[%s2306 + $0x18] sm:$0xff]
    %s2311 = scalar_lea.vmem %s4, 32
    %v2312 = vld [vmem:[%s2311] sm:$0xff]
    %v2313 = vld [vmem:[%s2311 + $0x8] sm:$0xff]
    %v2314 = vld [vmem:[%s2311 + $0x10] sm:$0xff]
    %v2315 = vld [vmem:[%s2311 + $0x18] sm:$0xff]
    %s2316 = scalar_lea.vmem %s5, 32
    %v2317 = vld [vmem:[%s2316] sm:$0xff]
    %v2318 = vld [vmem:[%s2316 + $0x8] sm:$0xff]
    %v2319 = vld [vmem:[%s2316 + $0x10] sm:$0xff]
    %v2320 = vld [vmem:[%s2316 + $0x18] sm:$0xff]
    %s2321 = scalar_lea.vmem [#allocation7], 32
    %v2322 = vld [vmem:[%s2321] sm:$0xff]
    %v2323 = vld [vmem:[%s2321 + $0x8] sm:$0xff]
    %v2324 = vld [vmem:[%s2321 + $0x10] sm:$0xff]
    %v2325 = vld [vmem:[%s2321 + $0x18] sm:$0xff]
    %s2326 = scalar_lea.vmem %s7, 64
    %v2327 = vld [vmem:[%s2326] sm:$0xff]
    %v2328 = vld [vmem:[%s2326 + $0x8] sm:$0xff]
    %v2329 = vld [vmem:[%s2326 + $0x10] sm:$0xff]
    %v2330 = vld [vmem:[%s2326 + $0x18] sm:$0xff]
    %v2331 = vld [vmem:[%s2326 + $0x20] sm:$0xff]
    %v2332 = vld [vmem:[%s2326 + $0x28] sm:$0xff]
    %v2333 = vld [vmem:[%s2326 + $0x30] sm:$0xff]
    %v2334 = vld [vmem:[%s2326 + $0x38] sm:$0xff]
    %s2335 = scalar_lea.vmem %s8, 16
    %v2336 = vld [vmem:[%s2335] sm:$0xff]
    %v2337 = vld [vmem:[%s2335 + $0x8] sm:$0x1]
    %v2338 = vlaneseq
    %v2339 = vshrl.u32 %v2338, 7
    %v2340 = vsub.s32 0, %v2339
    %v2341 = vrot.slane %v2336, %v2340
    %v2343 = vsel %vm112, %v2302, 0
    %v2346 = vsel %vm112, %v2303, 0
    %2348 = vmatprep.subr.mxu0 0.0
    %2349 = vmatpush1.msra.mxu0 %v2307
    %2350 = vmatprep.subr.mxu0 0.0
    %2351 = vmatpush1.msra.mxu0 %v2308
    %2352 = vmatprep.subr.mxu0 0.0
    %2353 = vmatpush1.msra.mxu0 %v2309
    %2354 = vmatprep.subr.mxu0 0.0
    %2355 = vmatpush1.msra.mxu0 %v2310
    %2356 = vmatprep.subr.mxu0 0.0
    %2357 = vmatpush1.msra.mxu0 0.0
    %2358 = vmatprep.subr.mxu0 0.0
    %2359 = vmatpush1.msra.mxu0 0.0
    %2360 = vmatprep.subr.mxu0 0.0
    %2361 = vmatpush1.msra.mxu0 0.0
    %2362 = vmatprep.subr.mxu0 0.0
    %2363 = vmatpush1.msra.mxu0 0.0
    %2364 = vmatprep.subr.mxu0 0.0
    %2365 = vmatpush1.msra.mxu0 0.0
    %2366 = vmatprep.subr.mxu0 0.0
    %2367 = vmatpush1.msra.mxu0 0.0
    %2368 = vmatprep.subr.mxu0 0.0
    %2369 = vmatpush1.msra.mxu0 0.0
    %2370 = vmatprep.subr.mxu0 0.0
    %2371 = vmatpush1.msra.mxu0 0.0
    %2372 = vmatprep.subr.mxu0 0.0
    %2373 = vmatpush1.msra.mxu0 0.0
    %2374 = vmatprep.subr.mxu0 0.0
    %2375 = vmatpush1.msra.mxu0 0.0
    %2376 = vmatprep.subr.mxu0 0.0
    %2377 = vmatpush1.msra.mxu0 0.0
    %2378 = vmatprep.subr.mxu0 0.0
    %2379 = vmatpush1.msra.mxu0 0.0
    %2380 = vmatprep.subr.mxu0 0.0
    %2381 = vmatpush1.msra.mxu0 0.0
    %2382 = vmatprep.subr.mxu0 0.0
    %2383 = vmatpush1.msra.mxu0 0.0
    %2384 = vmatprep.subr.mxu0 0.0
    %2385 = vmatpush1.msra.mxu0 0.0
    %2386 = vmatprep.subr.mxu0 0.0
    %2387 = vmatpush1.msra.mxu0 0.0
    %2388 = vmatprep.subr.mxu0 0.0
    %2389 = vmatpush1.msra.mxu0 0.0
    %2390 = vmatprep.subr.mxu0 0.0
    %2391 = vmatpush1.msra.mxu0 0.0
    %2392 = vmatprep.subr.mxu0 0.0
    %2393 = vmatpush1.msra.mxu0 0.0
    %2394 = vmatprep.subr.mxu0 0.0
    %2395 = vmatpush1.msra.mxu0 0.0
    %2396 = vmatprep.subr.mxu0 0.0
    %2397 = vmatpush1.msra.mxu0 0.0
    %2398 = vmatprep.subr.mxu0 0.0
    %2399 = vmatpush1.msra.mxu0 0.0
    %2400 = vmatprep.subr.mxu0 0.0
    %2401 = vmatpush1.msra.mxu0 0.0
    %2402 = vmatprep.subr.mxu0 0.0
    %2403 = vmatpush1.msra.mxu0 0.0
    %2404 = vmatprep.subr.mxu0 0.0
    %2405 = vmatpush1.msra.mxu0 0.0
    %2406 = vmatprep.subr.mxu0 0.0
    %2407 = vmatpush1.msra.mxu0 0.0
    %2408 = vmatprep.subr.mxu0 0.0
    %2409 = vmatpush1.msra.mxu0 0.0
    %2410 = vmatprep.subr.mxu0 0.0
    %2411 = vmatpush1.msra.mxu0 0.0
    %2412 = vmatprep.mubr.f32.mxu0 0.0
    %2413 = vmatmul.mubr.f32.gmra.mrb[0].mxu0 %v2343
    %v2414 = vpop.f32.mrb[0].mxu0
    %v2415 = vadd.f32 %v2341, %v2414
    %v2416 = vpop.f32.mrb[0].mxu0
    %2417 = vmatprep.mubr.f32.mxu0 0.0
    %2418 = vmatmul.mubr.f32.gmra.mrb[0].mxu0 %v2346
    %v2419 = vpop.f32.mrb[0].mxu0
    %v2420 = vadd.f32 %v2341, %v2419
    %v2421 = vpop.f32.mrb[0].mxu0
    %2422 = vdwg.mxu0
    %v2423 = vlaneseq
    %v2424 = vshrl.u32 %v2423, 7
    %v2425 = vsub.s32 1, %v2424
    %v2426 = vrot.slane %v2336, %v2425
    %2427 = vmatprep.subr.mxu0 0.0
    %2428 = vmatpush1.msra.mxu0 %v2312
    %2429 = vmatprep.subr.mxu0 0.0
    %2430 = vmatpush1.msra.mxu0 %v2313
    %2431 = vmatprep.subr.mxu0 0.0
    %2432 = vmatpush1.msra.mxu0 %v2314
    %2433 = vmatprep.subr.mxu0 0.0
    %2434 = vmatpush1.msra.mxu0 %v2315
    %2435 = vmatprep.subr.mxu0 0.0
    %2436 = vmatpush1.msra.mxu0 0.0
    %2437 = vmatprep.subr.mxu0 0.0
    %2438 = vmatpush1.msra.mxu0 0.0
    %2439 = vmatprep.subr.mxu0 0.0
    %2440 = vmatpush1.msra.mxu0 0.0
    %2441 = vmatprep.subr.mxu0 0.0
    %2442 = vmatpush1.msra.mxu0 0.0
    %2443 = vmatprep.subr.mxu0 0.0
    %2444 = vmatpush1.msra.mxu0 0.0
    %2445 = vmatprep.subr.mxu0 0.0
    %2446 = vmatpush1.msra.mxu0 0.0
    %2447 = vmatprep.subr.mxu0 0.0
    %2448 = vmatpush1.msra.mxu0 0.0
    %2449 = vmatprep.subr.mxu0 0.0
    %2450 = vmatpush1.msra.mxu0 0.0
    %2451 = vmatprep.subr.mxu0 0.0
    %2452 = vmatpush1.msra.mxu0 0.0
    %2453 = vmatprep.subr.mxu0 0.0
    %2454 = vmatpush1.msra.mxu0 0.0
    %2455 = vmatprep.subr.mxu0 0.0
    %2456 = vmatpush1.msra.mxu0 0.0
    %2457 = vmatprep.subr.mxu0 0.0
    %2458 = vmatpush1.msra.mxu0 0.0
    %2459 = vmatprep.subr.mxu0 0.0
    %2460 = vmatpush1.msra.mxu0 0.0
    %2461 = vmatprep.subr.mxu0 0.0
    %2462 = vmatpush1.msra.mxu0 0.0
    %2463 = vmatprep.subr.mxu0 0.0
    %2464 = vmatpush1.msra.mxu0 0.0
    %2465 = vmatprep.subr.mxu0 0.0
    %2466 = vmatpush1.msra.mxu0 0.0
    %2467 = vmatprep.subr.mxu0 0.0
    %2468 = vmatpush1.msra.mxu0 0.0
    %2469 = vmatprep.subr.mxu0 0.0
    %2470 = vmatpush1.msra.mxu0 0.0
    %2471 = vmatprep.subr.mxu0 0.0
    %2472 = vmatpush1.msra.mxu0 0.0
    %2473 = vmatprep.subr.mxu0 0.0
    %2474 = vmatpush1.msra.mxu0 0.0
    %2475 = vmatprep.subr.mxu0 0.0
    %2476 = vmatpush1.msra.mxu0 0.0
    %2477 = vmatprep.subr.mxu0 0.0
    %2478 = vmatpush1.msra.mxu0 0.0
    %2479 = vmatprep.subr.mxu0 0.0
    %2480 = vmatpush1.msra.mxu0 0.0
    %2481 = vmatprep.subr.mxu0 0.0
    %2482 = vmatpush1.msra.mxu0 0.0
    %2483 = vmatprep.subr.mxu0 0.0
    %2484 = vmatpush1.msra.mxu0 0.0
    %2485 = vmatprep.subr.mxu0 0.0
    %2486 = vmatpush1.msra.mxu0 0.0
    %2487 = vmatprep.subr.mxu0 0.0
    %2488 = vmatpush1.msra.mxu0 0.0
    %2489 = vmatprep.subr.mxu0 0.0
    %2490 = vmatpush1.msra.mxu0 0.0
    %2491 = vmatprep.mubr.f32.mxu0 0.0
    %2492 = vmatmul.mubr.f32.gmra.mrb[0].mxu0 %v199
    %v2493 = vpop.f32.mrb[0].mxu0
    %v2494 = vadd.f32 %v2426, %v2493
    %v2495 = vpop.f32.mrb[0].mxu0
    %2496 = vmatprep.mubr.f32.mxu0 0.0
    %2497 = vmatmul.mubr.f32.gmra.mrb[0].mxu0 %v202
    %v2498 = vpop.f32.mrb[0].mxu0
    %v2499 = vadd.f32 %v2426, %v2498
    %v2500 = vpop.f32.mrb[0].mxu0
    %2501 = vmatprep.mubr.f32.mxu0 0.0
    %2502 = vmatmul.mubr.f32.gmra.mrb[0].mxu0 %v205
    %v2503 = vpop.f32.mrb[0].mxu0
    %v2504 = vadd.f32 %v2426, %v2503
    %v2505 = vpop.f32.mrb[0].mxu0
    %2506 = vmatprep.mubr.f32.mxu0 0.0
    %2507 = vmatmul.mubr.f32.gmra.mrb[0].mxu0 %v208
    %v2508 = vpop.f32.mrb[0].mxu0
    %v2509 = vadd.f32 %v2426, %v2508
    %v2510 = vpop.f32.mrb[0].mxu0
    %2511 = vdwg.mxu0
    %v2513 = vsel %vm307, %v2415, 0
    %v2516 = vsel %vm307, %v2494, 0
    %v2519 = vsel %vm307, %v2499, 0
    %2521 = vmatprep.subr.mxu0 0.0
    %2522 = vmatpush1.xpose.msra.mxu0 %v2516
    %2523 = vmatprep.subr.mxu0 0.0
    %2524 = vmatpush1.xpose.msra.mxu0 %v2519
    %2525 = vmatprep.subr.mxu0 0.0
    %2526 = vmatpush1.xpose.msra.mxu0 0.0
    %2527 = vmatprep.subr.mxu0 0.0
    %2528 = vmatpush1.xpose.msra.mxu0 0.0
    %2529 = vmatprep.subr.mxu0 0.0
    %2530 = vmatpush1.xpose.msra.mxu0 0.0
    %2531 = vmatprep.subr.mxu0 0.0
    %2532 = vmatpush1.xpose.msra.mxu0 0.0
    %2533 = vmatprep.subr.mxu0 0.0
    %2534 = vmatpush1.xpose.msra.mxu0 0.0
    %2535 = vmatprep.subr.mxu0 0.0
    %2536 = vmatpush1.xpose.msra.mxu0 0.0
    %2537 = vmatprep.subr.mxu0 0.0
    %2538 = vmatpush1.xpose.msra.mxu0 0.0
    %2539 = vmatprep.subr.mxu0 0.0
    %2540 = vmatpush1.xpose.msra.mxu0 0.0
    %2541 = vmatprep.subr.mxu0 0.0
    %2542 = vmatpush1.xpose.msra.mxu0 0.0
    %2543 = vmatprep.subr.mxu0 0.0
    %2544 = vmatpush1.xpose.msra.mxu0 0.0
    %2545 = vmatprep.subr.mxu0 0.0
    %2546 = vmatpush1.xpose.msra.mxu0 0.0
    %2547 = vmatprep.subr.mxu0 0.0
    %2548 = vmatpush1.xpose.msra.mxu0 0.0
    %2549 = vmatprep.subr.mxu0 0.0
    %2550 = vmatpush1.xpose.msra.mxu0 0.0
    %2551 = vmatprep.subr.mxu0 0.0
    %2552 = vmatpush1.xpose.msra.mxu0 0.0
    %2553 = vmatprep.subr.mxu0 0.0
    %2554 = vmatpush1.xpose.msra.mxu0 0.0
    %2555 = vmatprep.subr.mxu0 0.0
    %2556 = vmatpush1.xpose.msra.mxu0 0.0
    %2557 = vmatprep.subr.mxu0 0.0
    %2558 = vmatpush1.xpose.msra.mxu0 0.0
    %2559 = vmatprep.subr.mxu0 0.0
    %2560 = vmatpush1.xpose.msra.mxu0 0.0
    %2561 = vmatprep.subr.mxu0 0.0
    %2562 = vmatpush1.xpose.msra.mxu0 0.0
    %2563 = vmatprep.subr.mxu0 0.0
    %2564 = vmatpush1.xpose.msra.mxu0 0.0
    %2565 = vmatprep.subr.mxu0 0.0
    %2566 = vmatpush1.xpose.msra.mxu0 0.0
    %2567 = vmatprep.subr.mxu0 0.0
    %2568 = vmatpush1.xpose.msra.mxu0 0.0
    %2569 = vmatprep.subr.mxu0 0.0
    %2570 = vmatpush1.xpose.msra.mxu0 0.0
    %2571 = vmatprep.subr.mxu0 0.0
    %2572 = vmatpush1.xpose.msra.mxu0 0.0
    %2573 = vmatprep.subr.mxu0 0.0
    %2574 = vmatpush1.xpose.msra.mxu0 0.0
    %2575 = vmatprep.subr.mxu0 0.0
    %2576 = vmatpush1.xpose.msra.mxu0 0.0
    %2577 = vmatprep.subr.mxu0 0.0
    %2578 = vmatpush1.xpose.msra.mxu0 0.0
    %2579 = vmatprep.subr.mxu0 0.0
    %2580 = vmatpush1.xpose.msra.mxu0 0.0
    %2581 = vmatprep.subr.mxu0 0.0
    %2582 = vmatpush1.xpose.msra.mxu0 0.0
    %2583 = vmatprep.subr.mxu0 0.0
    %2584 = vmatpush1.xpose.msra.mxu0 0.0
    %2585 = vmatprep.mubr.f32.mxu0 0.0
    %2586 = vmatmul.mubr.f32.gmra.mrb[0].mxu0 %v2513
    %v2587 = vpop.f32.mrb[0].mxu0
    %v2588 = vadd.f32 %v300, %v2587
    %v2589 = vpop.f32.mrb[0].mxu0
    %2590 = vdwg.mxu0
    %v2592 = vsel %vm307, %v2420, 0
    %v2595 = vsel %vm307, %v2504, 0
    %v2598 = vsel %vm307, %v2509, 0
    %2600 = vmatprep.subr.mxu0 0.0
    %2601 = vmatpush1.xpose.msra.mxu0 %v2595
    %2602 = vmatprep.subr.mxu0 0.0
    %2603 = vmatpush1.xpose.msra.mxu0 %v2598
    %2604 = vmatprep.subr.mxu0 0.0
    %2605 = vmatpush1.xpose.msra.mxu0 0.0
    %2606 = vmatprep.subr.mxu0 0.0
    %2607 = vmatpush1.xpose.msra.mxu0 0.0
    %2608 = vmatprep.subr.mxu0 0.0
    %2609 = vmatpush1.xpose.msra.mxu0 0.0
    %2610 = vmatprep.subr.mxu0 0.0
    %2611 = vmatpush1.xpose.msra.mxu0 0.0
    %2612 = vmatprep.subr.mxu0 0.0
    %2613 = vmatpush1.xpose.msra.mxu0 0.0
    %2614 = vmatprep.subr.mxu0 0.0
    %2615 = vmatpush1.xpose.msra.mxu0 0.0
    %2616 = vmatprep.subr.mxu0 0.0
    %2617 = vmatpush1.xpose.msra.mxu0 0.0
    %2618 = vmatprep.subr.mxu0 0.0
    %2619 = vmatpush1.xpose.msra.mxu0 0.0
    %2620 = vmatprep.subr.mxu0 0.0
    %2621 = vmatpush1.xpose.msra.mxu0 0.0
    %2622 = vmatprep.subr.mxu0 0.0
    %2623 = vmatpush1.xpose.msra.mxu0 0.0
    %2624 = vmatprep.subr.mxu0 0.0
    %2625 = vmatpush1.xpose.msra.mxu0 0.0
    %2626 = vmatprep.subr.mxu0 0.0
    %2627 = vmatpush1.xpose.msra.mxu0 0.0
    %2628 = vmatprep.subr.mxu0 0.0
    %2629 = vmatpush1.xpose.msra.mxu0 0.0
    %2630 = vmatprep.subr.mxu0 0.0
    %2631 = vmatpush1.xpose.msra.mxu0 0.0
    %2632 = vmatprep.subr.mxu0 0.0
    %2633 = vmatpush1.xpose.msra.mxu0 0.0
    %2634 = vmatprep.subr.mxu0 0.0
    %2635 = vmatpush1.xpose.msra.mxu0 0.0
    %2636 = vmatprep.subr.mxu0 0.0
    %2637 = vmatpush1.xpose.msra.mxu0 0.0
    %2638 = vmatprep.subr.mxu0 0.0
    %2639 = vmatpush1.xpose.msra.mxu0 0.0
    %2640 = vmatprep.subr.mxu0 0.0
    %2641 = vmatpush1.xpose.msra.mxu0 0.0
    %2642 = vmatprep.subr.mxu0 0.0
    %2643 = vmatpush1.xpose.msra.mxu0 0.0
    %2644 = vmatprep.subr.mxu0 0.0
    %2645 = vmatpush1.xpose.msra.mxu0 0.0
    %2646 = vmatprep.subr.mxu0 0.0
    %2647 = vmatpush1.xpose.msra.mxu0 0.0
    %2648 = vmatprep.subr.mxu0 0.0
    %2649 = vmatpush1.xpose.msra.mxu0 0.0
    %2650 = vmatprep.subr.mxu0 0.0
    %2651 = vmatpush1.xpose.msra.mxu0 0.0
    %2652 = vmatprep.subr.mxu0 0.0
    %2653 = vmatpush1.xpose.msra.mxu0 0.0
    %2654 = vmatprep.subr.mxu0 0.0
    %2655 = vmatpush1.xpose.msra.mxu0 0.0
    %2656 = vmatprep.subr.mxu0 0.0
    %2657 = vmatpush1.xpose.msra.mxu0 0.0
    %2658 = vmatprep.subr.mxu0 0.0
    %2659 = vmatpush1.xpose.msra.mxu0 0.0
    %2660 = vmatprep.subr.mxu0 0.0
    %2661 = vmatpush1.xpose.msra.mxu0 0.0
    %2662 = vmatprep.subr.mxu0 0.0
    %2663 = vmatpush1.xpose.msra.mxu0 0.0
    %2664 = vmatprep.mubr.f32.mxu0 0.0
    %2665 = vmatmul.mubr.f32.gmra.mrb[0].mxu0 %v2592
    %v2666 = vpop.f32.mrb[0].mxu0
    %v2667 = vadd.f32 %v304, %v2666
    %v2668 = vpop.f32.mrb[0].mxu0
    %2669 = vdwg.mxu0
    %v2670 = vsel %vm466, %v2588, -inf
    %2671 = vmax.xlane.f32.xlu0 %v2670
    %v2672 = vpop.xlane.xlu0 %2671
    %v2673 = vsel %vm466, %v2667, -inf
    %2674 = vmax.xlane.f32.xlu0 %v2673
    %v2675 = vpop.xlane.xlu0 %2674
    %v2676 = vsub.f32 %v2588, %v2672
    %v2677 = vsub.f32 %v2667, %v2675
    %v2678 = vmul.f32 %v2676, 1.442695
    %v2679 = vpow.pop %v2678
    %v2680 = vmul.f32 %v2677, 1.442695
    %v2681 = vpow.pop %v2680
    %v2682 = vsel %vm466, %v2679, 0.0
    %2683 = vadd.xlane.f32.xlu0 %v2682
    %v2684 = vpop.xlane.xlu0 %2683
    %v2685 = vsel %vm466, %v2681, 0.0
    %2686 = vadd.xlane.f32.xlu0 %v2685
    %v2687 = vpop.xlane.xlu0 %2686
    %v2688 = vrcp.pop %v2684
    %v2689 = vrcp.pop %v2687
    %v2690 = vmul.f32 %v2679, %v2688
    %v2691 = vmul.f32 %v2681, %v2689
    %2692 = vrot.lane.b32.xlu0 %v2494, 96
    %v2693 = vpop.permute.xlu0 %2692
    %2694 = vrot.lane.b32.xlu0 %v2499, 96
    %v2695 = vpop.permute.xlu0 %2694
    %v2699 = vsel %vm466, %v2690, 0
    %2701 = vmatprep.subr.mxu0 0.0
    %2702 = vmatpush1.msra.mxu0 %v2693
    %2703 = vmatprep.subr.mxu0 0.0
    %2704 = vmatpush1.msra.mxu0 %v2695
    %2705 = vmatprep.subr.mxu0 0.0
    %2706 = vmatpush1.msra.mxu0 0.0
    %2707 = vmatprep.subr.mxu0 0.0
    %2708 = vmatpush1.msra.mxu0 0.0
    %2709 = vmatprep.subr.mxu0 0.0
    %2710 = vmatpush1.msra.mxu0 0.0
    %2711 = vmatprep.subr.mxu0 0.0
    %2712 = vmatpush1.msra.mxu0 0.0
    %2713 = vmatprep.subr.mxu0 0.0
    %2714 = vmatpush1.msra.mxu0 0.0
    %2715 = vmatprep.subr.mxu0 0.0
    %2716 = vmatpush1.msra.mxu0 0.0
    %2717 = vmatprep.subr.mxu0 0.0
    %2718 = vmatpush1.msra.mxu0 0.0
    %2719 = vmatprep.subr.mxu0 0.0
    %2720 = vmatpush1.msra.mxu0 0.0
    %2721 = vmatprep.subr.mxu0 0.0
    %2722 = vmatpush1.msra.mxu0 0.0
    %2723 = vmatprep.subr.mxu0 0.0
    %2724 = vmatpush1.msra.mxu0 0.0
    %2725 = vmatprep.subr.mxu0 0.0
    %2726 = vmatpush1.msra.mxu0 0.0
    %2727 = vmatprep.subr.mxu0 0.0
    %2728 = vmatpush1.msra.mxu0 0.0
    %2729 = vmatprep.subr.mxu0 0.0
    %2730 = vmatpush1.msra.mxu0 0.0
    %2731 = vmatprep.subr.mxu0 0.0
    %2732 = vmatpush1.msra.mxu0 0.0
    %2733 = vmatprep.subr.mxu0 0.0
    %2734 = vmatpush1.msra.mxu0 0.0
    %2735 = vmatprep.subr.mxu0 0.0
    %2736 = vmatpush1.msra.mxu0 0.0
    %2737 = vmatprep.subr.mxu0 0.0
    %2738 = vmatpush1.msra.mxu0 0.0
    %2739 = vmatprep.subr.mxu0 0.0
    %2740 = vmatpush1.msra.mxu0 0.0
    %2741 = vmatprep.subr.mxu0 0.0
    %2742 = vmatpush1.msra.mxu0 0.0
    %2743 = vmatprep.subr.mxu0 0.0
    %2744 = vmatpush1.msra.mxu0 0.0
    %2745 = vmatprep.subr.mxu0 0.0
    %2746 = vmatpush1.msra.mxu0 0.0
    %2747 = vmatprep.subr.mxu0 0.0
    %2748 = vmatpush1.msra.mxu0 0.0
    %2749 = vmatprep.subr.mxu0 0.0
    %2750 = vmatpush1.msra.mxu0 0.0
    %2751 = vmatprep.subr.mxu0 0.0
    %2752 = vmatpush1.msra.mxu0 0.0
    %2753 = vmatprep.subr.mxu0 0.0
    %2754 = vmatpush1.msra.mxu0 0.0
    %2755 = vmatprep.subr.mxu0 0.0
    %2756 = vmatpush1.msra.mxu0 0.0
    %2757 = vmatprep.subr.mxu0 0.0
    %2758 = vmatpush1.msra.mxu0 0.0
    %2759 = vmatprep.subr.mxu0 0.0
    %2760 = vmatpush1.msra.mxu0 0.0
    %2761 = vmatprep.subr.mxu0 0.0
    %2762 = vmatpush1.msra.mxu0 0.0
    %2763 = vmatprep.subr.mxu0 0.0
    %2764 = vmatpush1.msra.mxu0 0.0
    %2765 = vmatprep.mubr.f32.mxu0 0.0
    %2766 = vmatmul.mubr.f32.gmra.mrb[0].mxu0 %v2699
    %v2767 = vpop.f32.mrb[0].mxu0
    %v2768 = vadd.f32 0.0, %v2767
    %v2769 = vpop.f32.mrb[0].mxu0
    %2770 = vdwg.mxu0
    %2771 = vrot.lane.b32.xlu0 %v2504, 96
    %v2772 = vpop.permute.xlu0 %2771
    %2773 = vrot.lane.b32.xlu0 %v2509, 96
    %v2774 = vpop.permute.xlu0 %2773
    %v2778 = vsel %vm466, %v2691, 0
    %2780 = vmatprep.subr.mxu0 0.0
    %2781 = vmatpush1.msra.mxu0 %v2772
    %2782 = vmatprep.subr.mxu0 0.0
    %2783 = vmatpush1.msra.mxu0 %v2774
    %2784 = vmatprep.subr.mxu0 0.0
    %2785 = vmatpush1.msra.mxu0 0.0
    %2786 = vmatprep.subr.mxu0 0.0
    %2787 = vmatpush1.msra.mxu0 0.0
    %2788 = vmatprep.subr.mxu0 0.0
    %2789 = vmatpush1.msra.mxu0 0.0
    %2790 = vmatprep.subr.mxu0 0.0
    %2791 = vmatpush1.msra.mxu0 0.0
    %2792 = vmatprep.subr.mxu0 0.0
    %2793 = vmatpush1.msra.mxu0 0.0
    %2794 = vmatprep.subr.mxu0 0.0
    %2795 = vmatpush1.msra.mxu0 0.0
    %2796 = vmatprep.subr.mxu0 0.0
    %2797 = vmatpush1.msra.mxu0 0.0
    %2798 = vmatprep.subr.mxu0 0.0
    %2799 = vmatpush1.msra.mxu0 0.0
    %2800 = vmatprep.subr.mxu0 0.0
    %2801 = vmatpush1.msra.mxu0 0.0
    %2802 = vmatprep.subr.mxu0 0.0
    %2803 = vmatpush1.msra.mxu0 0.0
    %2804 = vmatprep.subr.mxu0 0.0
    %2805 = vmatpush1.msra.mxu0 0.0
    %2806 = vmatprep.subr.mxu0 0.0
    %2807 = vmatpush1.msra.mxu0 0.0
    %2808 = vmatprep.subr.mxu0 0.0
    %2809 = vmatpush1.msra.mxu0 0.0
    %2810 = vmatprep.subr.mxu0 0.0
    %2811 = vmatpush1.msra.mxu0 0.0
    %2812 = vmatprep.subr.mxu0 0.0
    %2813 = vmatpush1.msra.mxu0 0.0
    %2814 = vmatprep.subr.mxu0 0.0
    %2815 = vmatpush1.msra.mxu0 0.0
    %2816 = vmatprep.subr.mxu0 0.0
    %2817 = vmatpush1.msra.mxu0 0.0
    %2818 = vmatprep.subr.mxu0 0.0
    %2819 = vmatpush1.msra.mxu0 0.0
    %2820 = vmatprep.subr.mxu0 0.0
    %2821 = vmatpush1.msra.mxu0 0.0
    %2822 = vmatprep.subr.mxu0 0.0
    %2823 = vmatpush1.msra.mxu0 0.0
    %2824 = vmatprep.subr.mxu0 0.0
    %2825 = vmatpush1.msra.mxu0 0.0
    %2826 = vmatprep.subr.mxu0 0.0
    %2827 = vmatpush1.msra.mxu0 0.0
    %2828 = vmatprep.subr.mxu0 0.0
    %2829 = vmatpush1.msra.mxu0 0.0
    %2830 = vmatprep.subr.mxu0 0.0
    %2831 = vmatpush1.msra.mxu0 0.0
    %2832 = vmatprep.subr.mxu0 0.0
    %2833 = vmatpush1.msra.mxu0 0.0
    %2834 = vmatprep.subr.mxu0 0.0
    %2835 = vmatpush1.msra.mxu0 0.0
    %2836 = vmatprep.subr.mxu0 0.0
    %2837 = vmatpush1.msra.mxu0 0.0
    %2838 = vmatprep.subr.mxu0 0.0
    %2839 = vmatpush1.msra.mxu0 0.0
    %2840 = vmatprep.subr.mxu0 0.0
    %2841 = vmatpush1.msra.mxu0 0.0
    %2842 = vmatprep.subr.mxu0 0.0
    %2843 = vmatpush1.msra.mxu0 0.0
    %2844 = vmatprep.mubr.f32.mxu0 0.0
    %2845 = vmatmul.mubr.f32.gmra.mrb[0].mxu0 %v2778
    %v2846 = vpop.f32.mrb[0].mxu0
    %v2847 = vadd.f32 0.0, %v2846
    %v2848 = vpop.f32.mrb[0].mxu0
    %2849 = vdwg.mxu0
    %2850 = vrot.lane.b32.xlu0 %v2415, 120
    %v2851 = vpop.permute.xlu0 %2850
    %2852 = vrot.lane.b32.xlu0 %v2494, 120
    %v2853 = vpop.permute.xlu0 %2852
    %2854 = vrot.lane.b32.xlu0 %v2499, 120
    %v2855 = vpop.permute.xlu0 %2854
    %v2856 = vsel %vm307, %v2851, 0
    %v2858 = vsel %vm307, %v2853, 0
    %v2860 = vsel %vm307, %v2855, 0
    %2862 = vmatprep.subr.mxu0 0.0
    %2863 = vmatpush1.xpose.msra.mxu0 %v2858
    %2864 = vmatprep.subr.mxu0 0.0
    %2865 = vmatpush1.xpose.msra.mxu0 %v2860
    %2866 = vmatprep.subr.mxu0 0.0
    %2867 = vmatpush1.xpose.msra.mxu0 0.0
    %2868 = vmatprep.subr.mxu0 0.0
    %2869 = vmatpush1.xpose.msra.mxu0 0.0
    %2870 = vmatprep.subr.mxu0 0.0
    %2871 = vmatpush1.xpose.msra.mxu0 0.0
    %2872 = vmatprep.subr.mxu0 0.0
    %2873 = vmatpush1.xpose.msra.mxu0 0.0
    %2874 = vmatprep.subr.mxu0 0.0
    %2875 = vmatpush1.xpose.msra.mxu0 0.0
    %2876 = vmatprep.subr.mxu0 0.0
    %2877 = vmatpush1.xpose.msra.mxu0 0.0
    %2878 = vmatprep.subr.mxu0 0.0
    %2879 = vmatpush1.xpose.msra.mxu0 0.0
    %2880 = vmatprep.subr.mxu0 0.0
    %2881 = vmatpush1.xpose.msra.mxu0 0.0
    %2882 = vmatprep.subr.mxu0 0.0
    %2883 = vmatpush1.xpose.msra.mxu0 0.0
    %2884 = vmatprep.subr.mxu0 0.0
    %2885 = vmatpush1.xpose.msra.mxu0 0.0
    %2886 = vmatprep.subr.mxu0 0.0
    %2887 = vmatpush1.xpose.msra.mxu0 0.0
    %2888 = vmatprep.subr.mxu0 0.0
    %2889 = vmatpush1.xpose.msra.mxu0 0.0
    %2890 = vmatprep.subr.mxu0 0.0
    %2891 = vmatpush1.xpose.msra.mxu0 0.0
    %2892 = vmatprep.subr.mxu0 0.0
    %2893 = vmatpush1.xpose.msra.mxu0 0.0
    %2894 = vmatprep.subr.mxu0 0.0
    %2895 = vmatpush1.xpose.msra.mxu0 0.0
    %2896 = vmatprep.subr.mxu0 0.0
    %2897 = vmatpush1.xpose.msra.mxu0 0.0
    %2898 = vmatprep.subr.mxu0 0.0
    %2899 = vmatpush1.xpose.msra.mxu0 0.0
    %2900 = vmatprep.subr.mxu0 0.0
    %2901 = vmatpush1.xpose.msra.mxu0 0.0
    %2902 = vmatprep.subr.mxu0 0.0
    %2903 = vmatpush1.xpose.msra.mxu0 0.0
    %2904 = vmatprep.subr.mxu0 0.0
    %2905 = vmatpush1.xpose.msra.mxu0 0.0
    %2906 = vmatprep.subr.mxu0 0.0
    %2907 = vmatpush1.xpose.msra.mxu0 0.0
    %2908 = vmatprep.subr.mxu0 0.0
    %2909 = vmatpush1.xpose.msra.mxu0 0.0
    %2910 = vmatprep.subr.mxu0 0.0
    %2911 = vmatpush1.xpose.msra.mxu0 0.0
    %2912 = vmatprep.subr.mxu0 0.0
    %2913 = vmatpush1.xpose.msra.mxu0 0.0
    %2914 = vmatprep.subr.mxu0 0.0
    %2915 = vmatpush1.xpose.msra.mxu0 0.0
    %2916 = vmatprep.subr.mxu0 0.0
    %2917 = vmatpush1.xpose.msra.mxu0 0.0
    %2918 = vmatprep.subr.mxu0 0.0
    %2919 = vmatpush1.xpose.msra.mxu0 0.0
    %2920 = vmatprep.subr.mxu0 0.0
    %2921 = vmatpush1.xpose.msra.mxu0 0.0
    %2922 = vmatprep.subr.mxu0 0.0
    %2923 = vmatpush1.xpose.msra.mxu0 0.0
    %2924 = vmatprep.subr.mxu0 0.0
    %2925 = vmatpush1.xpose.msra.mxu0 0.0
    %2926 = vmatprep.mubr.f32.mxu0 0.0
    %2927 = vmatmul.mubr.f32.gmra.mrb[0].mxu0 %v2856
    %v2928 = vpop.f32.mrb[0].mxu0
    %v2929 = vadd.f32 %v300, %v2928
    %v2930 = vpop.f32.mrb[0].mxu0
    %2931 = vdwg.mxu0
    %2932 = vrot.lane.b32.xlu0 %v2420, 120
    %v2933 = vpop.permute.xlu0 %2932
    %2934 = vrot.lane.b32.xlu0 %v2504, 120
    %v2935 = vpop.permute.xlu0 %2934
    %2936 = vrot.lane.b32.xlu0 %v2509, 120
    %v2937 = vpop.permute.xlu0 %2936
    %v2938 = vsel %vm307, %v2933, 0
    %v2940 = vsel %vm307, %v2935, 0
    %v2942 = vsel %vm307, %v2937, 0
    %2944 = vmatprep.subr.mxu0 0.0
    %2945 = vmatpush1.xpose.msra.mxu0 %v2940
    %2946 = vmatprep.subr.mxu0 0.0
    %2947 = vmatpush1.xpose.msra.mxu0 %v2942
    %2948 = vmatprep.subr.mxu0 0.0
    %2949 = vmatpush1.xpose.msra.mxu0 0.0
    %2950 = vmatprep.subr.mxu0 0.0
    %2951 = vmatpush1.xpose.msra.mxu0 0.0
    %2952 = vmatprep.subr.mxu0 0.0
    %2953 = vmatpush1.xpose.msra.mxu0 0.0
    %2954 = vmatprep.subr.mxu0 0.0
    %2955 = vmatpush1.xpose.msra.mxu0 0.0
    %2956 = vmatprep.subr.mxu0 0.0
    %2957 = vmatpush1.xpose.msra.mxu0 0.0
    %2958 = vmatprep.subr.mxu0 0.0
    %2959 = vmatpush1.xpose.msra.mxu0 0.0
    %2960 = vmatprep.subr.mxu0 0.0
    %2961 = vmatpush1.xpose.msra.mxu0 0.0
    %2962 = vmatprep.subr.mxu0 0.0
    %2963 = vmatpush1.xpose.msra.mxu0 0.0
    %2964 = vmatprep.subr.mxu0 0.0
    %2965 = vmatpush1.xpose.msra.mxu0 0.0
    %2966 = vmatprep.subr.mxu0 0.0
    %2967 = vmatpush1.xpose.msra.mxu0 0.0
    %2968 = vmatprep.subr.mxu0 0.0
    %2969 = vmatpush1.xpose.msra.mxu0 0.0
    %2970 = vmatprep.subr.mxu0 0.0
    %2971 = vmatpush1.xpose.msra.mxu0 0.0
    %2972 = vmatprep.subr.mxu0 0.0
    %2973 = vmatpush1.xpose.msra.mxu0 0.0
    %2974 = vmatprep.subr.mxu0 0.0
    %2975 = vmatpush1.xpose.msra.mxu0 0.0
    %2976 = vmatprep.subr.mxu0 0.0
    %2977 = vmatpush1.xpose.msra.mxu0 0.0
    %2978 = vmatprep.subr.mxu0 0.0
    %2979 = vmatpush1.xpose.msra.mxu0 0.0
    %2980 = vmatprep.subr.mxu0 0.0
    %2981 = vmatpush1.xpose.msra.mxu0 0.0
    %2982 = vmatprep.subr.mxu0 0.0
    %2983 = vmatpush1.xpose.msra.mxu0 0.0
    %2984 = vmatprep.subr.mxu0 0.0
    %2985 = vmatpush1.xpose.msra.mxu0 0.0
    %2986 = vmatprep.subr.mxu0 0.0
    %2987 = vmatpush1.xpose.msra.mxu0 0.0
    %2988 = vmatprep.subr.mxu0 0.0
    %2989 = vmatpush1.xpose.msra.mxu0 0.0
    %2990 = vmatprep.subr.mxu0 0.0
    %2991 = vmatpush1.xpose.msra.mxu0 0.0
    %2992 = vmatprep.subr.mxu0 0.0
    %2993 = vmatpush1.xpose.msra.mxu0 0.0
    %2994 = vmatprep.subr.mxu0 0.0
    %2995 = vmatpush1.xpose.msra.mxu0 0.0
    %2996 = vmatprep.subr.mxu0 0.0
    %2997 = vmatpush1.xpose.msra.mxu0 0.0
    %2998 = vmatprep.subr.mxu0 0.0
    %2999 = vmatpush1.xpose.msra.mxu0 0.0
    %3000 = vmatprep.subr.mxu0 0.0
    %3001 = vmatpush1.xpose.msra.mxu0 0.0
    %3002 = vmatprep.subr.mxu0 0.0
    %3003 = vmatpush1.xpose.msra.mxu0 0.0
    %3004 = vmatprep.subr.mxu0 0.0
    %3005 = vmatpush1.xpose.msra.mxu0 0.0
    %3006 = vmatprep.subr.mxu0 0.0
    %3007 = vmatpush1.xpose.msra.mxu0 0.0
    %3008 = vmatprep.mubr.f32.mxu0 0.0
    %3009 = vmatmul.mubr.f32.gmra.mrb[0].mxu0 %v2938
    %v3010 = vpop.f32.mrb[0].mxu0
    %v3011 = vadd.f32 %v304, %v3010
    %v3012 = vpop.f32.mrb[0].mxu0
    %3013 = vdwg.mxu0
    %v3014 = vsel %vm466, %v2929, -inf
    %3015 = vmax.xlane.f32.xlu0 %v3014
    %v3016 = vpop.xlane.xlu0 %3015
    %v3017 = vsel %vm466, %v3011, -inf
    %3018 = vmax.xlane.f32.xlu0 %v3017
    %v3019 = vpop.xlane.xlu0 %3018
    %v3020 = vsub.f32 %v2929, %v3016
    %v3021 = vsub.f32 %v3011, %v3019
    %v3022 = vmul.f32 %v3020, 1.442695
    %v3023 = vpow.pop %v3022
    %v3024 = vmul.f32 %v3021, 1.442695
    %v3025 = vpow.pop %v3024
    %v3026 = vsel %vm466, %v3023, 0.0
    %3027 = vadd.xlane.f32.xlu0 %v3026
    %v3028 = vpop.xlane.xlu0 %3027
    %v3029 = vsel %vm466, %v3025, 0.0
    %3030 = vadd.xlane.f32.xlu0 %v3029
    %v3031 = vpop.xlane.xlu0 %3030
    %v3032 = vrcp.pop %v3028
    %v3033 = vrcp.pop %v3031
    %v3034 = vmul.f32 %v3023, %v3032
    %v3035 = vmul.f32 %v3025, %v3033
    %3036 = vrot.lane.b32.xlu0 %v2494, 88
    %v3037 = vpop.permute.xlu0 %3036
    %3038 = vrot.lane.b32.xlu0 %v2499, 88
    %v3039 = vpop.permute.xlu0 %3038
    %v3043 = vsel %vm466, %v3034, 0
    %3045 = vmatprep.subr.mxu0 0.0
    %3046 = vmatpush1.msra.mxu0 %v3037
    %3047 = vmatprep.subr.mxu0 0.0
    %3048 = vmatpush1.msra.mxu0 %v3039
    %3049 = vmatprep.subr.mxu0 0.0
    %3050 = vmatpush1.msra.mxu0 0.0
    %3051 = vmatprep.subr.mxu0 0.0
    %3052 = vmatpush1.msra.mxu0 0.0
    %3053 = vmatprep.subr.mxu0 0.0
    %3054 = vmatpush1.msra.mxu0 0.0
    %3055 = vmatprep.subr.mxu0 0.0
    %3056 = vmatpush1.msra.mxu0 0.0
    %3057 = vmatprep.subr.mxu0 0.0
    %3058 = vmatpush1.msra.mxu0 0.0
    %3059 = vmatprep.subr.mxu0 0.0
    %3060 = vmatpush1.msra.mxu0 0.0
    %3061 = vmatprep.subr.mxu0 0.0
    %3062 = vmatpush1.msra.mxu0 0.0
    %3063 = vmatprep.subr.mxu0 0.0
    %3064 = vmatpush1.msra.mxu0 0.0
    %3065 = vmatprep.subr.mxu0 0.0
    %3066 = vmatpush1.msra.mxu0 0.0
    %3067 = vmatprep.subr.mxu0 0.0
    %3068 = vmatpush1.msra.mxu0 0.0
    %3069 = vmatprep.subr.mxu0 0.0
    %3070 = vmatpush1.msra.mxu0 0.0
    %3071 = vmatprep.subr.mxu0 0.0
    %3072 = vmatpush1.msra.mxu0 0.0
    %3073 = vmatprep.subr.mxu0 0.0
    %3074 = vmatpush1.msra.mxu0 0.0
    %3075 = vmatprep.subr.mxu0 0.0
    %3076 = vmatpush1.msra.mxu0 0.0
    %3077 = vmatprep.subr.mxu0 0.0
    %3078 = vmatpush1.msra.mxu0 0.0
    %3079 = vmatprep.subr.mxu0 0.0
    %3080 = vmatpush1.msra.mxu0 0.0
    %3081 = vmatprep.subr.mxu0 0.0
    %3082 = vmatpush1.msra.mxu0 0.0
    %3083 = vmatprep.subr.mxu0 0.0
    %3084 = vmatpush1.msra.mxu0 0.0
    %3085 = vmatprep.subr.mxu0 0.0
    %3086 = vmatpush1.msra.mxu0 0.0
    %3087 = vmatprep.subr.mxu0 0.0
    %3088 = vmatpush1.msra.mxu0 0.0
    %3089 = vmatprep.subr.mxu0 0.0
    %3090 = vmatpush1.msra.mxu0 0.0
    %3091 = vmatprep.subr.mxu0 0.0
    %3092 = vmatpush1.msra.mxu0 0.0
    %3093 = vmatprep.subr.mxu0 0.0
    %3094 = vmatpush1.msra.mxu0 0.0
    %3095 = vmatprep.subr.mxu0 0.0
    %3096 = vmatpush1.msra.mxu0 0.0
    %3097 = vmatprep.subr.mxu0 0.0
    %3098 = vmatpush1.msra.mxu0 0.0
    %3099 = vmatprep.subr.mxu0 0.0
    %3100 = vmatpush1.msra.mxu0 0.0
    %3101 = vmatprep.subr.mxu0 0.0
    %3102 = vmatpush1.msra.mxu0 0.0
    %3103 = vmatprep.subr.mxu0 0.0
    %3104 = vmatpush1.msra.mxu0 0.0
    %3105 = vmatprep.subr.mxu0 0.0
    %3106 = vmatpush1.msra.mxu0 0.0
    %3107 = vmatprep.subr.mxu0 0.0
    %3108 = vmatpush1.msra.mxu0 0.0
    %3109 = vmatprep.mubr.f32.mxu0 0.0
    %3110 = vmatmul.mubr.f32.gmra.mrb[0].mxu0 %v3043
    %v3111 = vpop.f32.mrb[0].mxu0
    %v3112 = vadd.f32 0.0, %v3111
    %v3113 = vpop.f32.mrb[0].mxu0
    %3114 = vdwg.mxu0
    %3115 = vrot.lane.b32.xlu0 %v2504, 88
    %v3116 = vpop.permute.xlu0 %3115
    %3117 = vrot.lane.b32.xlu0 %v2509, 88
    %v3118 = vpop.permute.xlu0 %3117
    %v3122 = vsel %vm466, %v3035, 0
    %3124 = vmatprep.subr.mxu0 0.0
    %3125 = vmatpush1.msra.mxu0 %v3116
    %3126 = vmatprep.subr.mxu0 0.0
    %3127 = vmatpush1.msra.mxu0 %v3118
    %3128 = vmatprep.subr.mxu0 0.0
    %3129 = vmatpush1.msra.mxu0 0.0
    %3130 = vmatprep.subr.mxu0 0.0
    %3131 = vmatpush1.msra.mxu0 0.0
    %3132 = vmatprep.subr.mxu0 0.0
    %3133 = vmatpush1.msra.mxu0 0.0
    %3134 = vmatprep.subr.mxu0 0.0
    %3135 = vmatpush1.msra.mxu0 0.0
    %3136 = vmatprep.subr.mxu0 0.0
    %3137 = vmatpush1.msra.mxu0 0.0
    %3138 = vmatprep.subr.mxu0 0.0
    %3139 = vmatpush1.msra.mxu0 0.0
    %3140 = vmatprep.subr.mxu0 0.0
    %3141 = vmatpush1.msra.mxu0 0.0
    %3142 = vmatprep.subr.mxu0 0.0
    %3143 = vmatpush1.msra.mxu0 0.0
    %3144 = vmatprep.subr.mxu0 0.0
    %3145 = vmatpush1.msra.mxu0 0.0
    %3146 = vmatprep.subr.mxu0 0.0
    %3147 = vmatpush1.msra.mxu0 0.0
    %3148 = vmatprep.subr.mxu0 0.0
    %3149 = vmatpush1.msra.mxu0 0.0
    %3150 = vmatprep.subr.mxu0 0.0
    %3151 = vmatpush1.msra.mxu0 0.0
    %3152 = vmatprep.subr.mxu0 0.0
    %3153 = vmatpush1.msra.mxu0 0.0
    %3154 = vmatprep.subr.mxu0 0.0
    %3155 = vmatpush1.msra.mxu0 0.0
    %3156 = vmatprep.subr.mxu0 0.0
    %3157 = vmatpush1.msra.mxu0 0.0
    %3158 = vmatprep.subr.mxu0 0.0
    %3159 = vmatpush1.msra.mxu0 0.0
    %3160 = vmatprep.subr.mxu0 0.0
    %3161 = vmatpush1.msra.mxu0 0.0
    %3162 = vmatprep.subr.mxu0 0.0
    %3163 = vmatpush1.msra.mxu0 0.0
    %3164 = vmatprep.subr.mxu0 0.0
    %3165 = vmatpush1.msra.mxu0 0.0
    %3166 = vmatprep.subr.mxu0 0.0
    %3167 = vmatpush1.msra.mxu0 0.0
    %3168 = vmatprep.subr.mxu0 0.0
    %3169 = vmatpush1.msra.mxu0 0.0
    %3170 = vmatprep.subr.mxu0 0.0
    %3171 = vmatpush1.msra.mxu0 0.0
    %3172 = vmatprep.subr.mxu0 0.0
    %3173 = vmatpush1.msra.mxu0 0.0
    %3174 = vmatprep.subr.mxu0 0.0
    %3175 = vmatpush1.msra.mxu0 0.0
    %3176 = vmatprep.subr.mxu0 0.0
    %3177 = vmatpush1.msra.mxu0 0.0
    %3178 = vmatprep.subr.mxu0 0.0
    %3179 = vmatpush1.msra.mxu0 0.0
    %3180 = vmatprep.subr.mxu0 0.0
    %3181 = vmatpush1.msra.mxu0 0.0
    %3182 = vmatprep.subr.mxu0 0.0
    %3183 = vmatpush1.msra.mxu0 0.0
    %3184 = vmatprep.subr.mxu0 0.0
    %3185 = vmatpush1.msra.mxu0 0.0
    %3186 = vmatprep.subr.mxu0 0.0
    %3187 = vmatpush1.msra.mxu0 0.0
    %3188 = vmatprep.mubr.f32.mxu0 0.0
    %3189 = vmatmul.mubr.f32.gmra.mrb[0].mxu0 %v3122
    %v3190 = vpop.f32.mrb[0].mxu0
    %v3191 = vadd.f32 0.0, %v3190
    %v3192 = vpop.f32.mrb[0].mxu0
    %3193 = vdwg.mxu0
    %v3195 = vsel %vm307, %v3112, 0
    %v3198 = vsel %vm307, %v3191, 0
    %3200 = vmatprep.subr.mxu0 0.0
    %3201 = vmatpush1.msra.mxu0 %v2318
    %3202 = vmatprep.subr.mxu0 0.0
    %3203 = vmatpush1.msra.mxu0 0.0
    %3204 = vmatprep.subr.mxu0 0.0
    %3205 = vmatpush1.msra.mxu0 0.0
    %3206 = vmatprep.subr.mxu0 0.0
    %3207 = vmatpush1.msra.mxu0 0.0
    %3208 = vmatprep.subr.mxu0 0.0
    %3209 = vmatpush1.msra.mxu0 0.0
    %3210 = vmatprep.subr.mxu0 0.0
    %3211 = vmatpush1.msra.mxu0 0.0
    %3212 = vmatprep.subr.mxu0 0.0
    %3213 = vmatpush1.msra.mxu0 0.0
    %3214 = vmatprep.subr.mxu0 0.0
    %3215 = vmatpush1.msra.mxu0 0.0
    %3216 = vmatprep.subr.mxu0 0.0
    %3217 = vmatpush1.msra.mxu0 0.0
    %3218 = vmatprep.subr.mxu0 0.0
    %3219 = vmatpush1.msra.mxu0 0.0
    %3220 = vmatprep.subr.mxu0 0.0
    %3221 = vmatpush1.msra.mxu0 0.0
    %3222 = vmatprep.subr.mxu0 0.0
    %3223 = vmatpush1.msra.mxu0 0.0
    %3224 = vmatprep.subr.mxu0 0.0
    %3225 = vmatpush1.msra.mxu0 0.0
    %3226 = vmatprep.subr.mxu0 0.0
    %3227 = vmatpush1.msra.mxu0 0.0
    %3228 = vmatprep.subr.mxu0 0.0
    %3229 = vmatpush1.msra.mxu0 0.0
    %3230 = vmatprep.subr.mxu0 0.0
    %3231 = vmatpush1.msra.mxu0 0.0
    %3232 = vmatprep.subr.mxu0 0.0
    %3233 = vmatpush1.msra.mxu0 0.0
    %3234 = vmatprep.subr.mxu0 0.0
    %3235 = vmatpush1.msra.mxu0 0.0
    %3236 = vmatprep.subr.mxu0 0.0
    %3237 = vmatpush1.msra.mxu0 0.0
    %3238 = vmatprep.subr.mxu0 0.0
    %3239 = vmatpush1.msra.mxu0 0.0
    %3240 = vmatprep.subr.mxu0 0.0
    %3241 = vmatpush1.msra.mxu0 0.0
    %3242 = vmatprep.subr.mxu0 0.0
    %3243 = vmatpush1.msra.mxu0 0.0
    %3244 = vmatprep.subr.mxu0 0.0
    %3245 = vmatpush1.msra.mxu0 0.0
    %3246 = vmatprep.subr.mxu0 0.0
    %3247 = vmatpush1.msra.mxu0 0.0
    %3248 = vmatprep.subr.mxu0 0.0
    %3249 = vmatpush1.msra.mxu0 0.0
    %3250 = vmatprep.subr.mxu0 0.0
    %3251 = vmatpush1.msra.mxu0 0.0
    %3252 = vmatprep.subr.mxu0 0.0
    %3253 = vmatpush1.msra.mxu0 0.0
    %3254 = vmatprep.subr.mxu0 0.0
    %3255 = vmatpush1.msra.mxu0 0.0
    %3256 = vmatprep.subr.mxu0 0.0
    %3257 = vmatpush1.msra.mxu0 0.0
    %3258 = vmatprep.subr.mxu0 0.0
    %3259 = vmatpush1.msra.mxu0 0.0
    %3260 = vmatprep.subr.mxu0 0.0
    %3261 = vmatpush1.msra.mxu0 0.0
    %3262 = vmatprep.subr.mxu0 0.0
    %3263 = vmatpush1.msra.mxu0 0.0
    %3264 = vmatprep.mubr.f32.mxu0 0.0
    %3265 = vmatmul.mubr.f32.gmra.mrb[0].mxu0 %v3195
    %v3266 = vpop.f32.mrb[0].mxu0
    %v3267 = vadd.f32 0.0, %v3266
    %v3268 = vpop.f32.mrb[0].mxu0
    %3269 = vmatprep.mubr.f32.mxu0 0.0
    %3270 = vmatmul.mubr.f32.gmra.mrb[0].mxu0 %v3198
    %v3271 = vpop.f32.mrb[0].mxu0
    %v3272 = vadd.f32 0.0, %v3271
    %v3273 = vpop.f32.mrb[0].mxu0
    %3274 = vdwg.mxu0
    %v3276 = vsel %vm307, %v2768, 0
    %v3279 = vsel %vm307, %v2847, 0
    %3281 = vmatprep.subr.mxu0 0.0
    %3282 = vmatpush1.msra.mxu0 %v2317
    %3283 = vmatprep.subr.mxu0 0.0
    %3284 = vmatpush1.msra.mxu0 0.0
    %3285 = vmatprep.subr.mxu0 0.0
    %3286 = vmatpush1.msra.mxu0 0.0
    %3287 = vmatprep.subr.mxu0 0.0
    %3288 = vmatpush1.msra.mxu0 0.0
    %3289 = vmatprep.subr.mxu0 0.0
    %3290 = vmatpush1.msra.mxu0 0.0
    %3291 = vmatprep.subr.mxu0 0.0
    %3292 = vmatpush1.msra.mxu0 0.0
    %3293 = vmatprep.subr.mxu0 0.0
    %3294 = vmatpush1.msra.mxu0 0.0
    %3295 = vmatprep.subr.mxu0 0.0
    %3296 = vmatpush1.msra.mxu0 0.0
    %3297 = vmatprep.subr.mxu0 0.0
    %3298 = vmatpush1.msra.mxu0 0.0
    %3299 = vmatprep.subr.mxu0 0.0
    %3300 = vmatpush1.msra.mxu0 0.0
    %3301 = vmatprep.subr.mxu0 0.0
    %3302 = vmatpush1.msra.mxu0 0.0
    %3303 = vmatprep.subr.mxu0 0.0
    %3304 = vmatpush1.msra.mxu0 0.0
    %3305 = vmatprep.subr.mxu0 0.0
    %3306 = vmatpush1.msra.mxu0 0.0
    %3307 = vmatprep.subr.mxu0 0.0
    %3308 = vmatpush1.msra.mxu0 0.0
    %3309 = vmatprep.subr.mxu0 0.0
    %3310 = vmatpush1.msra.mxu0 0.0
    %3311 = vmatprep.subr.mxu0 0.0
    %3312 = vmatpush1.msra.mxu0 0.0
    %3313 = vmatprep.subr.mxu0 0.0
    %3314 = vmatpush1.msra.mxu0 0.0
    %3315 = vmatprep.subr.mxu0 0.0
    %3316 = vmatpush1.msra.mxu0 0.0
    %3317 = vmatprep.subr.mxu0 0.0
    %3318 = vmatpush1.msra.mxu0 0.0
    %3319 = vmatprep.subr.mxu0 0.0
    %3320 = vmatpush1.msra.mxu0 0.0
    %3321 = vmatprep.subr.mxu0 0.0
    %3322 = vmatpush1.msra.mxu0 0.0
    %3323 = vmatprep.subr.mxu0 0.0
    %3324 = vmatpush1.msra.mxu0 0.0
    %3325 = vmatprep.subr.mxu0 0.0
    %3326 = vmatpush1.msra.mxu0 0.0
    %3327 = vmatprep.subr.mxu0 0.0
    %3328 = vmatpush1.msra.mxu0 0.0
    %3329 = vmatprep.subr.mxu0 0.0
    %3330 = vmatpush1.msra.mxu0 0.0
    %3331 = vmatprep.subr.mxu0 0.0
    %3332 = vmatpush1.msra.mxu0 0.0
    %3333 = vmatprep.subr.mxu0 0.0
    %3334 = vmatpush1.msra.mxu0 0.0
    %3335 = vmatprep.subr.mxu0 0.0
    %3336 = vmatpush1.msra.mxu0 0.0
    %3337 = vmatprep.subr.mxu0 0.0
    %3338 = vmatpush1.msra.mxu0 0.0
    %3339 = vmatprep.subr.mxu0 0.0
    %3340 = vmatpush1.msra.mxu0 0.0
    %3341 = vmatprep.subr.mxu0 0.0
    %3342 = vmatpush1.msra.mxu0 0.0
    %3343 = vmatprep.subr.mxu0 0.0
    %3344 = vmatpush1.msra.mxu0 0.0
    %3345 = vmatprep.mubr.f32.mxu0 0.0
    %3346 = vmatmul.mubr.f32.gmra.mrb[0].mxu0 %v3276
    %v3347 = vpop.f32.mrb[0].mxu0
    %v3348 = vadd.f32 %v3267, %v3347
    %v3349 = vpop.f32.mrb[0].mxu0
    %3350 = vmatprep.mubr.f32.mxu0 0.0
    %3351 = vmatmul.mubr.f32.gmra.mrb[0].mxu0 %v3279
    %v3352 = vpop.f32.mrb[0].mxu0
    %v3353 = vadd.f32 %v3272, %v3352
    %v3354 = vpop.f32.mrb[0].mxu0
    %3355 = vdwg.mxu0
    %3356 = vrot.lane.b32.xlu0 %v2415, 112
    %v3357 = vpop.permute.xlu0 %3356
    %3358 = vrot.lane.b32.xlu0 %v2494, 112
    %v3359 = vpop.permute.xlu0 %3358
    %3360 = vrot.lane.b32.xlu0 %v2499, 112
    %v3361 = vpop.permute.xlu0 %3360
    %v3362 = vsel %vm307, %v3357, 0
    %v3364 = vsel %vm307, %v3359, 0
    %v3366 = vsel %vm307, %v3361, 0
    %3368 = vmatprep.subr.mxu0 0.0
    %3369 = vmatpush1.xpose.msra.mxu0 %v3364
    %3370 = vmatprep.subr.mxu0 0.0
    %3371 = vmatpush1.xpose.msra.mxu0 %v3366
    %3372 = vmatprep.subr.mxu0 0.0
    %3373 = vmatpush1.xpose.msra.mxu0 0.0
    %3374 = vmatprep.subr.mxu0 0.0
    %3375 = vmatpush1.xpose.msra.mxu0 0.0
    %3376 = vmatprep.subr.mxu0 0.0
    %3377 = vmatpush1.xpose.msra.mxu0 0.0
    %3378 = vmatprep.subr.mxu0 0.0
    %3379 = vmatpush1.xpose.msra.mxu0 0.0
    %3380 = vmatprep.subr.mxu0 0.0
    %3381 = vmatpush1.xpose.msra.mxu0 0.0
    %3382 = vmatprep.subr.mxu0 0.0
    %3383 = vmatpush1.xpose.msra.mxu0 0.0
    %3384 = vmatprep.subr.mxu0 0.0
    %3385 = vmatpush1.xpose.msra.mxu0 0.0
    %3386 = vmatprep.subr.mxu0 0.0
    %3387 = vmatpush1.xpose.msra.mxu0 0.0
    %3388 = vmatprep.subr.mxu0 0.0
    %3389 = vmatpush1.xpose.msra.mxu0 0.0
    %3390 = vmatprep.subr.mxu0 0.0
    %3391 = vmatpush1.xpose.msra.mxu0 0.0
    %3392 = vmatprep.subr.mxu0 0.0
    %3393 = vmatpush1.xpose.msra.mxu0 0.0
    %3394 = vmatprep.subr.mxu0 0.0
    %3395 = vmatpush1.xpose.msra.mxu0 0.0
    %3396 = vmatprep.subr.mxu0 0.0
    %3397 = vmatpush1.xpose.msra.mxu0 0.0
    %3398 = vmatprep.subr.mxu0 0.0
    %3399 = vmatpush1.xpose.msra.mxu0 0.0
    %3400 = vmatprep.subr.mxu0 0.0
    %3401 = vmatpush1.xpose.msra.mxu0 0.0
    %3402 = vmatprep.subr.mxu0 0.0
    %3403 = vmatpush1.xpose.msra.mxu0 0.0
    %3404 = vmatprep.subr.mxu0 0.0
    %3405 = vmatpush1.xpose.msra.mxu0 0.0
    %3406 = vmatprep.subr.mxu0 0.0
    %3407 = vmatpush1.xpose.msra.mxu0 0.0
    %3408 = vmatprep.subr.mxu0 0.0
    %3409 = vmatpush1.xpose.msra.mxu0 0.0
    %3410 = vmatprep.subr.mxu0 0.0
    %3411 = vmatpush1.xpose.msra.mxu0 0.0
    %3412 = vmatprep.subr.mxu0 0.0
    %3413 = vmatpush1.xpose.msra.mxu0 0.0
    %3414 = vmatprep.subr.mxu0 0.0
    %3415 = vmatpush1.xpose.msra.mxu0 0.0
    %3416 = vmatprep.subr.mxu0 0.0
    %3417 = vmatpush1.xpose.msra.mxu0 0.0
    %3418 = vmatprep.subr.mxu0 0.0
    %3419 = vmatpush1.xpose.msra.mxu0 0.0
    %3420 = vmatprep.subr.mxu0 0.0
    %3421 = vmatpush1.xpose.msra.mxu0 0.0
    %3422 = vmatprep.subr.mxu0 0.0
    %3423 = vmatpush1.xpose.msra.mxu0 0.0
    %3424 = vmatprep.subr.mxu0 0.0
    %3425 = vmatpush1.xpose.msra.mxu0 0.0
    %3426 = vmatprep.subr.mxu0 0.0
    %3427 = vmatpush1.xpose.msra.mxu0 0.0
    %3428 = vmatprep.subr.mxu0 0.0
    %3429 = vmatpush1.xpose.msra.mxu0 0.0
    %3430 = vmatprep.subr.mxu0 0.0
    %3431 = vmatpush1.xpose.msra.mxu0 0.0
    %3432 = vmatprep.mubr.f32.mxu0 0.0
    %3433 = vmatmul.mubr.f32.gmra.mrb[0].mxu0 %v3362
    %v3434 = vpop.f32.mrb[0].mxu0
    %v3435 = vadd.f32 %v300, %v3434
    %v3436 = vpop.f32.mrb[0].mxu0
    %3437 = vdwg.mxu0
    %3438 = vrot.lane.b32.xlu0 %v2420, 112
    %v3439 = vpop.permute.xlu0 %3438
    %3440 = vrot.lane.b32.xlu0 %v2504, 112
    %v3441 = vpop.permute.xlu0 %3440
    %3442 = vrot.lane.b32.xlu0 %v2509, 112
    %v3443 = vpop.permute.xlu0 %3442
    %v3444 = vsel %vm307, %v3439, 0
    %v3446 = vsel %vm307, %v3441, 0
    %v3448 = vsel %vm307, %v3443, 0
    %3450 = vmatprep.subr.mxu0 0.0
    %3451 = vmatpush1.xpose.msra.mxu0 %v3446
    %3452 = vmatprep.subr.mxu0 0.0
    %3453 = vmatpush1.xpose.msra.mxu0 %v3448
    %3454 = vmatprep.subr.mxu0 0.0
    %3455 = vmatpush1.xpose.msra.mxu0 0.0
    %3456 = vmatprep.subr.mxu0 0.0
    %3457 = vmatpush1.xpose.msra.mxu0 0.0
    %3458 = vmatprep.subr.mxu0 0.0
    %3459 = vmatpush1.xpose.msra.mxu0 0.0
    %3460 = vmatprep.subr.mxu0 0.0
    %3461 = vmatpush1.xpose.msra.mxu0 0.0
    %3462 = vmatprep.subr.mxu0 0.0
    %3463 = vmatpush1.xpose.msra.mxu0 0.0
    %3464 = vmatprep.subr.mxu0 0.0
    %3465 = vmatpush1.xpose.msra.mxu0 0.0
    %3466 = vmatprep.subr.mxu0 0.0
    %3467 = vmatpush1.xpose.msra.mxu0 0.0
    %3468 = vmatprep.subr.mxu0 0.0
    %3469 = vmatpush1.xpose.msra.mxu0 0.0
    %3470 = vmatprep.subr.mxu0 0.0
    %3471 = vmatpush1.xpose.msra.mxu0 0.0
    %3472 = vmatprep.subr.mxu0 0.0
    %3473 = vmatpush1.xpose.msra.mxu0 0.0
    %3474 = vmatprep.subr.mxu0 0.0
    %3475 = vmatpush1.xpose.msra.mxu0 0.0
    %3476 = vmatprep.subr.mxu0 0.0
    %3477 = vmatpush1.xpose.msra.mxu0 0.0
    %3478 = vmatprep.subr.mxu0 0.0
    %3479 = vmatpush1.xpose.msra.mxu0 0.0
    %3480 = vmatprep.subr.mxu0 0.0
    %3481 = vmatpush1.xpose.msra.mxu0 0.0
    %3482 = vmatprep.subr.mxu0 0.0
    %3483 = vmatpush1.xpose.msra.mxu0 0.0
    %3484 = vmatprep.subr.mxu0 0.0
    %3485 = vmatpush1.xpose.msra.mxu0 0.0
    %3486 = vmatprep.subr.mxu0 0.0
    %3487 = vmatpush1.xpose.msra.mxu0 0.0
    %3488 = vmatprep.subr.mxu0 0.0
    %3489 = vmatpush1.xpose.msra.mxu0 0.0
    %3490 = vmatprep.subr.mxu0 0.0
    %3491 = vmatpush1.xpose.msra.mxu0 0.0
    %3492 = vmatprep.subr.mxu0 0.0
    %3493 = vmatpush1.xpose.msra.mxu0 0.0
    %3494 = vmatprep.subr.mxu0 0.0
    %3495 = vmatpush1.xpose.msra.mxu0 0.0
    %3496 = vmatprep.subr.mxu0 0.0
    %3497 = vmatpush1.xpose.msra.mxu0 0.0
    %3498 = vmatprep.subr.mxu0 0.0
    %3499 = vmatpush1.xpose.msra.mxu0 0.0
    %3500 = vmatprep.subr.mxu0 0.0
    %3501 = vmatpush1.xpose.msra.mxu0 0.0
    %3502 = vmatprep.subr.mxu0 0.0
    %3503 = vmatpush1.xpose.msra.mxu0 0.0
    %3504 = vmatprep.subr.mxu0 0.0
    %3505 = vmatpush1.xpose.msra.mxu0 0.0
    %3506 = vmatprep.subr.mxu0 0.0
    %3507 = vmatpush1.xpose.msra.mxu0 0.0
    %3508 = vmatprep.subr.mxu0 0.0
    %3509 = vmatpush1.xpose.msra.mxu0 0.0
    %3510 = vmatprep.subr.mxu0 0.0
    %3511 = vmatpush1.xpose.msra.mxu0 0.0
    %3512 = vmatprep.subr.mxu0 0.0
    %3513 = vmatpush1.xpose.msra.mxu0 0.0
    %3514 = vmatprep.mubr.f32.mxu0 0.0
    %3515 = vmatmul.mubr.f32.gmra.mrb[0].mxu0 %v3444
    %v3516 = vpop.f32.mrb[0].mxu0
    %v3517 = vadd.f32 %v304, %v3516
    %v3518 = vpop.f32.mrb[0].mxu0
    %3519 = vdwg.mxu0
    %v3520 = vsel %vm466, %v3435, -inf
    %3521 = vmax.xlane.f32.xlu0 %v3520
    %v3522 = vpop.xlane.xlu0 %3521
    %v3523 = vsel %vm466, %v3517, -inf
    %3524 = vmax.xlane.f32.xlu0 %v3523
    %v3525 = vpop.xlane.xlu0 %3524
    %v3526 = vsub.f32 %v3435, %v3522
    %v3527 = vsub.f32 %v3517, %v3525
    %v3528 = vmul.f32 %v3526, 1.442695
    %v3529 = vpow.pop %v3528
    %v3530 = vmul.f32 %v3527, 1.442695
    %v3531 = vpow.pop %v3530
    %v3532 = vsel %vm466, %v3529, 0.0
    %3533 = vadd.xlane.f32.xlu0 %v3532
    %v3534 = vpop.xlane.xlu0 %3533
    %v3535 = vsel %vm466, %v3531, 0.0
    %3536 = vadd.xlane.f32.xlu0 %v3535
    %v3537 = vpop.xlane.xlu0 %3536
    %v3538 = vrcp.pop %v3534
    %v3539 = vrcp.pop %v3537
    %v3540 = vmul.f32 %v3529, %v3538
    %v3541 = vmul.f32 %v3531, %v3539
    %3542 = vrot.lane.b32.xlu0 %v2494, 80
    %v3543 = vpop.permute.xlu0 %3542
    %3544 = vrot.lane.b32.xlu0 %v2499, 80
    %v3545 = vpop.permute.xlu0 %3544
    %v3549 = vsel %vm466, %v3540, 0
    %3551 = vmatprep.subr.mxu0 0.0
    %3552 = vmatpush1.msra.mxu0 %v3543
    %3553 = vmatprep.subr.mxu0 0.0
    %3554 = vmatpush1.msra.mxu0 %v3545
    %3555 = vmatprep.subr.mxu0 0.0
    %3556 = vmatpush1.msra.mxu0 0.0
    %3557 = vmatprep.subr.mxu0 0.0
    %3558 = vmatpush1.msra.mxu0 0.0
    %3559 = vmatprep.subr.mxu0 0.0
    %3560 = vmatpush1.msra.mxu0 0.0
    %3561 = vmatprep.subr.mxu0 0.0
    %3562 = vmatpush1.msra.mxu0 0.0
    %3563 = vmatprep.subr.mxu0 0.0
    %3564 = vmatpush1.msra.mxu0 0.0
    %3565 = vmatprep.subr.mxu0 0.0
    %3566 = vmatpush1.msra.mxu0 0.0
    %3567 = vmatprep.subr.mxu0 0.0
    %3568 = vmatpush1.msra.mxu0 0.0
    %3569 = vmatprep.subr.mxu0 0.0
    %3570 = vmatpush1.msra.mxu0 0.0
    %3571 = vmatprep.subr.mxu0 0.0
    %3572 = vmatpush1.msra.mxu0 0.0
    %3573 = vmatprep.subr.mxu0 0.0
    %3574 = vmatpush1.msra.mxu0 0.0
    %3575 = vmatprep.subr.mxu0 0.0
    %3576 = vmatpush1.msra.mxu0 0.0
    %3577 = vmatprep.subr.mxu0 0.0
    %3578 = vmatpush1.msra.mxu0 0.0
    %3579 = vmatprep.subr.mxu0 0.0
    %3580 = vmatpush1.msra.mxu0 0.0
    %3581 = vmatprep.subr.mxu0 0.0
    %3582 = vmatpush1.msra.mxu0 0.0
    %3583 = vmatprep.subr.mxu0 0.0
    %3584 = vmatpush1.msra.mxu0 0.0
    %3585 = vmatprep.subr.mxu0 0.0
    %3586 = vmatpush1.msra.mxu0 0.0
    %3587 = vmatprep.subr.mxu0 0.0
    %3588 = vmatpush1.msra.mxu0 0.0
    %3589 = vmatprep.subr.mxu0 0.0
    %3590 = vmatpush1.msra.mxu0 0.0
    %3591 = vmatprep.subr.mxu0 0.0
    %3592 = vmatpush1.msra.mxu0 0.0
    %3593 = vmatprep.subr.mxu0 0.0
    %3594 = vmatpush1.msra.mxu0 0.0
    %3595 = vmatprep.subr.mxu0 0.0
    %3596 = vmatpush1.msra.mxu0 0.0
    %3597 = vmatprep.subr.mxu0 0.0
    %3598 = vmatpush1.msra.mxu0 0.0
    %3599 = vmatprep.subr.mxu0 0.0
    %3600 = vmatpush1.msra.mxu0 0.0
    %3601 = vmatprep.subr.mxu0 0.0
    %3602 = vmatpush1.msra.mxu0 0.0
    %3603 = vmatprep.subr.mxu0 0.0
    %3604 = vmatpush1.msra.mxu0 0.0
    %3605 = vmatprep.subr.mxu0 0.0
    %3606 = vmatpush1.msra.mxu0 0.0
    %3607 = vmatprep.subr.mxu0 0.0
    %3608 = vmatpush1.msra.mxu0 0.0
    %3609 = vmatprep.subr.mxu0 0.0
    %3610 = vmatpush1.msra.mxu0 0.0
    %3611 = vmatprep.subr.mxu0 0.0
    %3612 = vmatpush1.msra.mxu0 0.0
    %3613 = vmatprep.subr.mxu0 0.0
    %3614 = vmatpush1.msra.mxu0 0.0
    %3615 = vmatprep.mubr.f32.mxu0 0.0
    %3616 = vmatmul.mubr.f32.gmra.mrb[0].mxu0 %v3549
    %v3617 = vpop.f32.mrb[0].mxu0
    %v3618 = vadd.f32 0.0, %v3617
    %v3619 = vpop.f32.mrb[0].mxu0
    %3620 = vdwg.mxu0
    %3621 = vrot.lane.b32.xlu0 %v2504, 80
    %v3622 = vpop.permute.xlu0 %3621
    %3623 = vrot.lane.b32.xlu0 %v2509, 80
    %v3624 = vpop.permute.xlu0 %3623
    %v3628 = vsel %vm466, %v3541, 0
    %3630 = vmatprep.subr.mxu0 0.0
    %3631 = vmatpush1.msra.mxu0 %v3622
    %3632 = vmatprep.subr.mxu0 0.0
    %3633 = vmatpush1.msra.mxu0 %v3624
    %3634 = vmatprep.subr.mxu0 0.0
    %3635 = vmatpush1.msra.mxu0 0.0
    %3636 = vmatprep.subr.mxu0 0.0
    %3637 = vmatpush1.msra.mxu0 0.0
    %3638 = vmatprep.subr.mxu0 0.0
    %3639 = vmatpush1.msra.mxu0 0.0
    %3640 = vmatprep.subr.mxu0 0.0
    %3641 = vmatpush1.msra.mxu0 0.0
    %3642 = vmatprep.subr.mxu0 0.0
    %3643 = vmatpush1.msra.mxu0 0.0
    %3644 = vmatprep.subr.mxu0 0.0
    %3645 = vmatpush1.msra.mxu0 0.0
    %3646 = vmatprep.subr.mxu0 0.0
    %3647 = vmatpush1.msra.mxu0 0.0
    %3648 = vmatprep.subr.mxu0 0.0
    %3649 = vmatpush1.msra.mxu0 0.0
    %3650 = vmatprep.subr.mxu0 0.0
    %3651 = vmatpush1.msra.mxu0 0.0
    %3652 = vmatprep.subr.mxu0 0.0
    %3653 = vmatpush1.msra.mxu0 0.0
    %3654 = vmatprep.subr.mxu0 0.0
    %3655 = vmatpush1.msra.mxu0 0.0
    %3656 = vmatprep.subr.mxu0 0.0
    %3657 = vmatpush1.msra.mxu0 0.0
    %3658 = vmatprep.subr.mxu0 0.0
    %3659 = vmatpush1.msra.mxu0 0.0
    %3660 = vmatprep.subr.mxu0 0.0
    %3661 = vmatpush1.msra.mxu0 0.0
    %3662 = vmatprep.subr.mxu0 0.0
    %3663 = vmatpush1.msra.mxu0 0.0
    %3664 = vmatprep.subr.mxu0 0.0
    %3665 = vmatpush1.msra.mxu0 0.0
    %3666 = vmatprep.subr.mxu0 0.0
    %3667 = vmatpush1.msra.mxu0 0.0
    %3668 = vmatprep.subr.mxu0 0.0
    %3669 = vmatpush1.msra.mxu0 0.0
    %3670 = vmatprep.subr.mxu0 0.0
    %3671 = vmatpush1.msra.mxu0 0.0
    %3672 = vmatprep.subr.mxu0 0.0
    %3673 = vmatpush1.msra.mxu0 0.0
    %3674 = vmatprep.subr.mxu0 0.0
    %3675 = vmatpush1.msra.mxu0 0.0
    %3676 = vmatprep.subr.mxu0 0.0
    %3677 = vmatpush1.msra.mxu0 0.0
    %3678 = vmatprep.subr.mxu0 0.0
    %3679 = vmatpush1.msra.mxu0 0.0
    %3680 = vmatprep.subr.mxu0 0.0
    %3681 = vmatpush1.msra.mxu0 0.0
    %3682 = vmatprep.subr.mxu0 0.0
    %3683 = vmatpush1.msra.mxu0 0.0
    %3684 = vmatprep.subr.mxu0 0.0
    %3685 = vmatpush1.msra.mxu0 0.0
    %3686 = vmatprep.subr.mxu0 0.0
    %3687 = vmatpush1.msra.mxu0 0.0
    %3688 = vmatprep.subr.mxu0 0.0
    %3689 = vmatpush1.msra.mxu0 0.0
    %3690 = vmatprep.subr.mxu0 0.0
    %3691 = vmatpush1.msra.mxu0 0.0
    %3692 = vmatprep.subr.mxu0 0.0
    %3693 = vmatpush1.msra.mxu0 0.0
    %3694 = vmatprep.mubr.f32.mxu0 0.0
    %3695 = vmatmul.mubr.f32.gmra.mrb[0].mxu0 %v3628
    %v3696 = vpop.f32.mrb[0].mxu0
    %v3697 = vadd.f32 0.0, %v3696
    %v3698 = vpop.f32.mrb[0].mxu0
    %3699 = vdwg.mxu0
    %v3701 = vsel %vm307, %v3618, 0
    %v3704 = vsel %vm307, %v3697, 0
    %3706 = vmatprep.subr.mxu0 0.0
    %3707 = vmatpush1.msra.mxu0 %v2319
    %3708 = vmatprep.subr.mxu0 0.0
    %3709 = vmatpush1.msra.mxu0 0.0
    %3710 = vmatprep.subr.mxu0 0.0
    %3711 = vmatpush1.msra.mxu0 0.0
    %3712 = vmatprep.subr.mxu0 0.0
    %3713 = vmatpush1.msra.mxu0 0.0
    %3714 = vmatprep.subr.mxu0 0.0
    %3715 = vmatpush1.msra.mxu0 0.0
    %3716 = vmatprep.subr.mxu0 0.0
    %3717 = vmatpush1.msra.mxu0 0.0
    %3718 = vmatprep.subr.mxu0 0.0
    %3719 = vmatpush1.msra.mxu0 0.0
    %3720 = vmatprep.subr.mxu0 0.0
    %3721 = vmatpush1.msra.mxu0 0.0
    %3722 = vmatprep.subr.mxu0 0.0
    %3723 = vmatpush1.msra.mxu0 0.0
    %3724 = vmatprep.subr.mxu0 0.0
    %3725 = vmatpush1.msra.mxu0 0.0
    %3726 = vmatprep.subr.mxu0 0.0
    %3727 = vmatpush1.msra.mxu0 0.0
    %3728 = vmatprep.subr.mxu0 0.0
    %3729 = vmatpush1.msra.mxu0 0.0
    %3730 = vmatprep.subr.mxu0 0.0
    %3731 = vmatpush1.msra.mxu0 0.0
    %3732 = vmatprep.subr.mxu0 0.0
    %3733 = vmatpush1.msra.mxu0 0.0
    %3734 = vmatprep.subr.mxu0 0.0
    %3735 = vmatpush1.msra.mxu0 0.0
    %3736 = vmatprep.subr.mxu0 0.0
    %3737 = vmatpush1.msra.mxu0 0.0
    %3738 = vmatprep.subr.mxu0 0.0
    %3739 = vmatpush1.msra.mxu0 0.0
    %3740 = vmatprep.subr.mxu0 0.0
    %3741 = vmatpush1.msra.mxu0 0.0
    %3742 = vmatprep.subr.mxu0 0.0
    %3743 = vmatpush1.msra.mxu0 0.0
    %3744 = vmatprep.subr.mxu0 0.0
    %3745 = vmatpush1.msra.mxu0 0.0
    %3746 = vmatprep.subr.mxu0 0.0
    %3747 = vmatpush1.msra.mxu0 0.0
    %3748 = vmatprep.subr.mxu0 0.0
    %3749 = vmatpush1.msra.mxu0 0.0
    %3750 = vmatprep.subr.mxu0 0.0
    %3751 = vmatpush1.msra.mxu0 0.0
    %3752 = vmatprep.subr.mxu0 0.0
    %3753 = vmatpush1.msra.mxu0 0.0
    %3754 = vmatprep.subr.mxu0 0.0
    %3755 = vmatpush1.msra.mxu0 0.0
    %3756 = vmatprep.subr.mxu0 0.0
    %3757 = vmatpush1.msra.mxu0 0.0
    %3758 = vmatprep.subr.mxu0 0.0
    %3759 = vmatpush1.msra.mxu0 0.0
    %3760 = vmatprep.subr.mxu0 0.0
    %3761 = vmatpush1.msra.mxu0 0.0
    %3762 = vmatprep.subr.mxu0 0.0
    %3763 = vmatpush1.msra.mxu0 0.0
    %3764 = vmatprep.subr.mxu0 0.0
    %3765 = vmatpush1.msra.mxu0 0.0
    %3766 = vmatprep.subr.mxu0 0.0
    %3767 = vmatpush1.msra.mxu0 0.0
    %3768 = vmatprep.subr.mxu0 0.0
    %3769 = vmatpush1.msra.mxu0 0.0
    %3770 = vmatprep.mubr.f32.mxu0 0.0
    %3771 = vmatmul.mubr.f32.gmra.mrb[0].mxu0 %v3701
    %v3772 = vpop.f32.mrb[0].mxu0
    %v3773 = vadd.f32 0.0, %v3772
    %v3774 = vpop.f32.mrb[0].mxu0
    %3775 = vmatprep.mubr.f32.mxu0 0.0
    %3776 = vmatmul.mubr.f32.gmra.mrb[0].mxu0 %v3704
    %v3777 = vpop.f32.mrb[0].mxu0
    %v3778 = vadd.f32 0.0, %v3777
    %v3779 = vpop.f32.mrb[0].mxu0
    %3780 = vdwg.mxu0
    %v3781 = vadd.f32 %v3348, %v3773
    %v3782 = vadd.f32 %v3353, %v3778
    %3783 = vrot.lane.b32.xlu0 %v2415, 104
    %v3784 = vpop.permute.xlu0 %3783
    %3785 = vrot.lane.b32.xlu0 %v2494, 104
    %v3786 = vpop.permute.xlu0 %3785
    %3787 = vrot.lane.b32.xlu0 %v2499, 104
    %v3788 = vpop.permute.xlu0 %3787
    %v3789 = vsel %vm307, %v3784, 0
    %v3791 = vsel %vm307, %v3786, 0
    %v3793 = vsel %vm307, %v3788, 0
    %3795 = vmatprep.subr.mxu0 0.0
    %3796 = vmatpush1.xpose.msra.mxu0 %v3791
    %3797 = vmatprep.subr.mxu0 0.0
    %3798 = vmatpush1.xpose.msra.mxu0 %v3793
    %3799 = vmatprep.subr.mxu0 0.0
    %3800 = vmatpush1.xpose.msra.mxu0 0.0
    %3801 = vmatprep.subr.mxu0 0.0
    %3802 = vmatpush1.xpose.msra.mxu0 0.0
    %3803 = vmatprep.subr.mxu0 0.0
    %3804 = vmatpush1.xpose.msra.mxu0 0.0
    %3805 = vmatprep.subr.mxu0 0.0
    %3806 = vmatpush1.xpose.msra.mxu0 0.0
    %3807 = vmatprep.subr.mxu0 0.0
    %3808 = vmatpush1.xpose.msra.mxu0 0.0
    %3809 = vmatprep.subr.mxu0 0.0
    %3810 = vmatpush1.xpose.msra.mxu0 0.0
    %3811 = vmatprep.subr.mxu0 0.0
    %3812 = vmatpush1.xpose.msra.mxu0 0.0
    %3813 = vmatprep.subr.mxu0 0.0
    %3814 = vmatpush1.xpose.msra.mxu0 0.0
    %3815 = vmatprep.subr.mxu0 0.0
    %3816 = vmatpush1.xpose.msra.mxu0 0.0
    %3817 = vmatprep.subr.mxu0 0.0
    %3818 = vmatpush1.xpose.msra.mxu0 0.0
    %3819 = vmatprep.subr.mxu0 0.0
    %3820 = vmatpush1.xpose.msra.mxu0 0.0
    %3821 = vmatprep.subr.mxu0 0.0
    %3822 = vmatpush1.xpose.msra.mxu0 0.0
    %3823 = vmatprep.subr.mxu0 0.0
    %3824 = vmatpush1.xpose.msra.mxu0 0.0
    %3825 = vmatprep.subr.mxu0 0.0
    %3826 = vmatpush1.xpose.msra.mxu0 0.0
    %3827 = vmatprep.subr.mxu0 0.0
    %3828 = vmatpush1.xpose.msra.mxu0 0.0
    %3829 = vmatprep.subr.mxu0 0.0
    %3830 = vmatpush1.xpose.msra.mxu0 0.0
    %3831 = vmatprep.subr.mxu0 0.0
    %3832 = vmatpush1.xpose.msra.mxu0 0.0
    %3833 = vmatprep.subr.mxu0 0.0
    %3834 = vmatpush1.xpose.msra.mxu0 0.0
    %3835 = vmatprep.subr.mxu0 0.0
    %3836 = vmatpush1.xpose.msra.mxu0 0.0
    %3837 = vmatprep.subr.mxu0 0.0
    %3838 = vmatpush1.xpose.msra.mxu0 0.0
    %3839 = vmatprep.subr.mxu0 0.0
    %3840 = vmatpush1.xpose.msra.mxu0 0.0
    %3841 = vmatprep.subr.mxu0 0.0
    %3842 = vmatpush1.xpose.msra.mxu0 0.0
    %3843 = vmatprep.subr.mxu0 0.0
    %3844 = vmatpush1.xpose.msra.mxu0 0.0
    %3845 = vmatprep.subr.mxu0 0.0
    %3846 = vmatpush1.xpose.msra.mxu0 0.0
    %3847 = vmatprep.subr.mxu0 0.0
    %3848 = vmatpush1.xpose.msra.mxu0 0.0
    %3849 = vmatprep.subr.mxu0 0.0
    %3850 = vmatpush1.xpose.msra.mxu0 0.0
    %3851 = vmatprep.subr.mxu0 0.0
    %3852 = vmatpush1.xpose.msra.mxu0 0.0
    %3853 = vmatprep.subr.mxu0 0.0
    %3854 = vmatpush1.xpose.msra.mxu0 0.0
    %3855 = vmatprep.subr.mxu0 0.0
    %3856 = vmatpush1.xpose.msra.mxu0 0.0
    %3857 = vmatprep.subr.mxu0 0.0
    %3858 = vmatpush1.xpose.msra.mxu0 0.0
    %3859 = vmatprep.mubr.f32.mxu0 0.0
    %3860 = vmatmul.mubr.f32.gmra.mrb[0].mxu0 %v3789
    %v3861 = vpop.f32.mrb[0].mxu0
    %v3862 = vadd.f32 %v300, %v3861
    %v3863 = vpop.f32.mrb[0].mxu0
    %3864 = vdwg.mxu0
    %3865 = vrot.lane.b32.xlu0 %v2420, 104
    %v3866 = vpop.permute.xlu0 %3865
    %3867 = vrot.lane.b32.xlu0 %v2504, 104
    %v3868 = vpop.permute.xlu0 %3867
    %3869 = vrot.lane.b32.xlu0 %v2509, 104
    %v3870 = vpop.permute.xlu0 %3869
    %v3871 = vsel %vm307, %v3866, 0
    %v3873 = vsel %vm307, %v3868, 0
    %v3875 = vsel %vm307, %v3870, 0
    %3877 = vmatprep.subr.mxu0 0.0
    %3878 = vmatpush1.xpose.msra.mxu0 %v3873
    %3879 = vmatprep.subr.mxu0 0.0
    %3880 = vmatpush1.xpose.msra.mxu0 %v3875
    %3881 = vmatprep.subr.mxu0 0.0
    %3882 = vmatpush1.xpose.msra.mxu0 0.0
    %3883 = vmatprep.subr.mxu0 0.0
    %3884 = vmatpush1.xpose.msra.mxu0 0.0
    %3885 = vmatprep.subr.mxu0 0.0
    %3886 = vmatpush1.xpose.msra.mxu0 0.0
    %3887 = vmatprep.subr.mxu0 0.0
    %3888 = vmatpush1.xpose.msra.mxu0 0.0
    %3889 = vmatprep.subr.mxu0 0.0
    %3890 = vmatpush1.xpose.msra.mxu0 0.0
    %3891 = vmatprep.subr.mxu0 0.0
    %3892 = vmatpush1.xpose.msra.mxu0 0.0
    %3893 = vmatprep.subr.mxu0 0.0
    %3894 = vmatpush1.xpose.msra.mxu0 0.0
    %3895 = vmatprep.subr.mxu0 0.0
    %3896 = vmatpush1.xpose.msra.mxu0 0.0
    %3897 = vmatprep.subr.mxu0 0.0
    %3898 = vmatpush1.xpose.msra.mxu0 0.0
    %3899 = vmatprep.subr.mxu0 0.0
    %3900 = vmatpush1.xpose.msra.mxu0 0.0
    %3901 = vmatprep.subr.mxu0 0.0
    %3902 = vmatpush1.xpose.msra.mxu0 0.0
    %3903 = vmatprep.subr.mxu0 0.0
    %3904 = vmatpush1.xpose.msra.mxu0 0.0
    %3905 = vmatprep.subr.mxu0 0.0
    %3906 = vmatpush1.xpose.msra.mxu0 0.0
    %3907 = vmatprep.subr.mxu0 0.0
    %3908 = vmatpush1.xpose.msra.mxu0 0.0
    %3909 = vmatprep.subr.mxu0 0.0
    %3910 = vmatpush1.xpose.msra.mxu0 0.0
    %3911 = vmatprep.subr.mxu0 0.0
    %3912 = vmatpush1.xpose.msra.mxu0 0.0
    %3913 = vmatprep.subr.mxu0 0.0
    %3914 = vmatpush1.xpose.msra.mxu0 0.0
    %3915 = vmatprep.subr.mxu0 0.0
    %3916 = vmatpush1.xpose.msra.mxu0 0.0
    %3917 = vmatprep.subr.mxu0 0.0
    %3918 = vmatpush1.xpose.msra.mxu0 0.0
    %3919 = vmatprep.subr.mxu0 0.0
    %3920 = vmatpush1.xpose.msra.mxu0 0.0
    %3921 = vmatprep.subr.mxu0 0.0
    %3922 = vmatpush1.xpose.msra.mxu0 0.0
    %3923 = vmatprep.subr.mxu0 0.0
    %3924 = vmatpush1.xpose.msra.mxu0 0.0
    %3925 = vmatprep.subr.mxu0 0.0
    %3926 = vmatpush1.xpose.msra.mxu0 0.0
    %3927 = vmatprep.subr.mxu0 0.0
    %3928 = vmatpush1.xpose.msra.mxu0 0.0
    %3929 = vmatprep.subr.mxu0 0.0
    %3930 = vmatpush1.xpose.msra.mxu0 0.0
    %3931 = vmatprep.subr.mxu0 0.0
    %3932 = vmatpush1.xpose.msra.mxu0 0.0
    %3933 = vmatprep.subr.mxu0 0.0
    %3934 = vmatpush1.xpose.msra.mxu0 0.0
    %3935 = vmatprep.subr.mxu0 0.0
    %3936 = vmatpush1.xpose.msra.mxu0 0.0
    %3937 = vmatprep.subr.mxu0 0.0
    %3938 = vmatpush1.xpose.msra.mxu0 0.0
    %3939 = vmatprep.subr.mxu0 0.0
    %3940 = vmatpush1.xpose.msra.mxu0 0.0
    %3941 = vmatprep.mubr.f32.mxu0 0.0
    %3942 = vmatmul.mubr.f32.gmra.mrb[0].mxu0 %v3871
    %v3943 = vpop.f32.mrb[0].mxu0
    %v3944 = vadd.f32 %v304, %v3943
    %v3945 = vpop.f32.mrb[0].mxu0
    %3946 = vdwg.mxu0
    %v3947 = vsel %vm466, %v3862, -inf
    %3948 = vmax.xlane.f32.xlu0 %v3947
    %v3949 = vpop.xlane.xlu0 %3948
    %v3950 = vsel %vm466, %v3944, -inf
    %3951 = vmax.xlane.f32.xlu0 %v3950
    %v3952 = vpop.xlane.xlu0 %3951
    %v3953 = vsub.f32 %v3862, %v3949
    %v3954 = vsub.f32 %v3944, %v3952
    %v3955 = vmul.f32 %v3953, 1.442695
    %v3956 = vpow.pop %v3955
    %v3957 = vmul.f32 %v3954, 1.442695
    %v3958 = vpow.pop %v3957
    %v3959 = vsel %vm466, %v3956, 0.0
    %3960 = vadd.xlane.f32.xlu0 %v3959
    %v3961 = vpop.xlane.xlu0 %3960
    %v3962 = vsel %vm466, %v3958, 0.0
    %3963 = vadd.xlane.f32.xlu0 %v3962
    %v3964 = vpop.xlane.xlu0 %3963
    %v3965 = vrcp.pop %v3961
    %v3966 = vrcp.pop %v3964
    %v3967 = vmul.f32 %v3956, %v3965
    %v3968 = vmul.f32 %v3958, %v3966
    %3969 = vrot.lane.b32.xlu0 %v2494, 72
    %v3970 = vpop.permute.xlu0 %3969
    %3971 = vrot.lane.b32.xlu0 %v2499, 72
    %v3972 = vpop.permute.xlu0 %3971
    %v3976 = vsel %vm466, %v3967, 0
    %3978 = vmatprep.subr.mxu0 0.0
    %3979 = vmatpush1.msra.mxu0 %v3970
    %3980 = vmatprep.subr.mxu0 0.0
    %3981 = vmatpush1.msra.mxu0 %v3972
    %3982 = vmatprep.subr.mxu0 0.0
    %3983 = vmatpush1.msra.mxu0 0.0
    %3984 = vmatprep.subr.mxu0 0.0
    %3985 = vmatpush1.msra.mxu0 0.0
    %3986 = vmatprep.subr.mxu0 0.0
    %3987 = vmatpush1.msra.mxu0 0.0
    %3988 = vmatprep.subr.mxu0 0.0
    %3989 = vmatpush1.msra.mxu0 0.0
    %3990 = vmatprep.subr.mxu0 0.0
    %3991 = vmatpush1.msra.mxu0 0.0
    %3992 = vmatprep.subr.mxu0 0.0
    %3993 = vmatpush1.msra.mxu0 0.0
    %3994 = vmatprep.subr.mxu0 0.0
    %3995 = vmatpush1.msra.mxu0 0.0
    %3996 = vmatprep.subr.mxu0 0.0
    %3997 = vmatpush1.msra.mxu0 0.0
    %3998 = vmatprep.subr.mxu0 0.0
    %3999 = vmatpush1.msra.mxu0 0.0
    %4000 = vmatprep.subr.mxu0 0.0
    %4001 = vmatpush1.msra.mxu0 0.0
    %4002 = vmatprep.subr.mxu0 0.0
    %4003 = vmatpush1.msra.mxu0 0.0
    %4004 = vmatprep.subr.mxu0 0.0
    %4005 = vmatpush1.msra.mxu0 0.0
    %4006 = vmatprep.subr.mxu0 0.0
    %4007 = vmatpush1.msra.mxu0 0.0
    %4008 = vmatprep.subr.mxu0 0.0
    %4009 = vmatpush1.msra.mxu0 0.0
    %4010 = vmatprep.subr.mxu0 0.0
    %4011 = vmatpush1.msra.mxu0 0.0
    %4012 = vmatprep.subr.mxu0 0.0
    %4013 = vmatpush1.msra.mxu0 0.0
    %4014 = vmatprep.subr.mxu0 0.0
    %4015 = vmatpush1.msra.mxu0 0.0
    %4016 = vmatprep.subr.mxu0 0.0
    %4017 = vmatpush1.msra.mxu0 0.0
    %4018 = vmatprep.subr.mxu0 0.0
    %4019 = vmatpush1.msra.mxu0 0.0
    %4020 = vmatprep.subr.mxu0 0.0
    %4021 = vmatpush1.msra.mxu0 0.0
    %4022 = vmatprep.subr.mxu0 0.0
    %4023 = vmatpush1.msra.mxu0 0.0
    %4024 = vmatprep.subr.mxu0 0.0
    %4025 = vmatpush1.msra.mxu0 0.0
    %4026 = vmatprep.subr.mxu0 0.0
    %4027 = vmatpush1.msra.mxu0 0.0
    %4028 = vmatprep.subr.mxu0 0.0
    %4029 = vmatpush1.msra.mxu0 0.0
    %4030 = vmatprep.subr.mxu0 0.0
    %4031 = vmatpush1.msra.mxu0 0.0
    %4032 = vmatprep.subr.mxu0 0.0
    %4033 = vmatpush1.msra.mxu0 0.0
    %4034 = vmatprep.subr.mxu0 0.0
    %4035 = vmatpush1.msra.mxu0 0.0
    %4036 = vmatprep.subr.mxu0 0.0
    %4037 = vmatpush1.msra.mxu0 0.0
    %4038 = vmatprep.subr.mxu0 0.0
    %4039 = vmatpush1.msra.mxu0 0.0
    %4040 = vmatprep.subr.mxu0 0.0
    %4041 = vmatpush1.msra.mxu0 0.0
    %4042 = vmatprep.mubr.f32.mxu0 0.0
    %4043 = vmatmul.mubr.f32.gmra.mrb[0].mxu0 %v3976
    %v4044 = vpop.f32.mrb[0].mxu0
    %v4045 = vadd.f32 0.0, %v4044
    %v4046 = vpop.f32.mrb[0].mxu0
    %4047 = vdwg.mxu0
    %4048 = vrot.lane.b32.xlu0 %v2504, 72
    %v4049 = vpop.permute.xlu0 %4048
    %4050 = vrot.lane.b32.xlu0 %v2509, 72
    %v4051 = vpop.permute.xlu0 %4050
    %v4055 = vsel %vm466, %v3968, 0
    %4057 = vmatprep.subr.mxu0 0.0
    %4058 = vmatpush1.msra.mxu0 %v4049
    %4059 = vmatprep.subr.mxu0 0.0
    %4060 = vmatpush1.msra.mxu0 %v4051
    %4061 = vmatprep.subr.mxu0 0.0
    %4062 = vmatpush1.msra.mxu0 0.0
    %4063 = vmatprep.subr.mxu0 0.0
    %4064 = vmatpush1.msra.mxu0 0.0
    %4065 = vmatprep.subr.mxu0 0.0
    %4066 = vmatpush1.msra.mxu0 0.0
    %4067 = vmatprep.subr.mxu0 0.0
    %4068 = vmatpush1.msra.mxu0 0.0
    %4069 = vmatprep.subr.mxu0 0.0
    %4070 = vmatpush1.msra.mxu0 0.0
    %4071 = vmatprep.subr.mxu0 0.0
    %4072 = vmatpush1.msra.mxu0 0.0
    %4073 = vmatprep.subr.mxu0 0.0
    %4074 = vmatpush1.msra.mxu0 0.0
    %4075 = vmatprep.subr.mxu0 0.0
    %4076 = vmatpush1.msra.mxu0 0.0
    %4077 = vmatprep.subr.mxu0 0.0
    %4078 = vmatpush1.msra.mxu0 0.0
    %4079 = vmatprep.subr.mxu0 0.0
    %4080 = vmatpush1.msra.mxu0 0.0
    %4081 = vmatprep.subr.mxu0 0.0
    %4082 = vmatpush1.msra.mxu0 0.0
    %4083 = vmatprep.subr.mxu0 0.0
    %4084 = vmatpush1.msra.mxu0 0.0
    %4085 = vmatprep.subr.mxu0 0.0
    %4086 = vmatpush1.msra.mxu0 0.0
    %4087 = vmatprep.subr.mxu0 0.0
    %4088 = vmatpush1.msra.mxu0 0.0
    %4089 = vmatprep.subr.mxu0 0.0
    %4090 = vmatpush1.msra.mxu0 0.0
    %4091 = vmatprep.subr.mxu0 0.0
    %4092 = vmatpush1.msra.mxu0 0.0
    %4093 = vmatprep.subr.mxu0 0.0
    %4094 = vmatpush1.msra.mxu0 0.0
    %4095 = vmatprep.subr.mxu0 0.0
    %4096 = vmatpush1.msra.mxu0 0.0
    %4097 = vmatprep.subr.mxu0 0.0
    %4098 = vmatpush1.msra.mxu0 0.0
    %4099 = vmatprep.subr.mxu0 0.0
    %4100 = vmatpush1.msra.mxu0 0.0
    %4101 = vmatprep.subr.mxu0 0.0
    %4102 = vmatpush1.msra.mxu0 0.0
    %4103 = vmatprep.subr.mxu0 0.0
    %4104 = vmatpush1.msra.mxu0 0.0
    %4105 = vmatprep.subr.mxu0 0.0
    %4106 = vmatpush1.msra.mxu0 0.0
    %4107 = vmatprep.subr.mxu0 0.0
    %4108 = vmatpush1.msra.mxu0 0.0
    %4109 = vmatprep.subr.mxu0 0.0
    %4110 = vmatpush1.msra.mxu0 0.0
    %4111 = vmatprep.subr.mxu0 0.0
    %4112 = vmatpush1.msra.mxu0 0.0
    %4113 = vmatprep.subr.mxu0 0.0
    %4114 = vmatpush1.msra.mxu0 0.0
    %4115 = vmatprep.subr.mxu0 0.0
    %4116 = vmatpush1.msra.mxu0 0.0
    %4117 = vmatprep.subr.mxu0 0.0
    %4118 = vmatpush1.msra.mxu0 0.0
    %4119 = vmatprep.subr.mxu0 0.0
    %4120 = vmatpush1.msra.mxu0 0.0
    %4121 = vmatprep.mubr.f32.mxu0 0.0
    %4122 = vmatmul.mubr.f32.gmra.mrb[0].mxu0 %v4055
    %v4123 = vpop.f32.mrb[0].mxu0
    %v4124 = vadd.f32 0.0, %v4123
    %v4125 = vpop.f32.mrb[0].mxu0
    %4126 = vdwg.mxu0
    %v4128 = vsel %vm307, %v4045, 0
    %v4131 = vsel %vm307, %v4124, 0
    %4133 = vmatprep.subr.mxu0 0.0
    %4134 = vmatpush1.msra.mxu0 %v2320
    %4135 = vmatprep.subr.mxu0 0.0
    %4136 = vmatpush1.msra.mxu0 0.0
    %4137 = vmatprep.subr.mxu0 0.0
    %4138 = vmatpush1.msra.mxu0 0.0
    %4139 = vmatprep.subr.mxu0 0.0
    %4140 = vmatpush1.msra.mxu0 0.0
    %4141 = vmatprep.subr.mxu0 0.0
    %4142 = vmatpush1.msra.mxu0 0.0
    %4143 = vmatprep.subr.mxu0 0.0
    %4144 = vmatpush1.msra.mxu0 0.0
    %4145 = vmatprep.subr.mxu0 0.0
    %4146 = vmatpush1.msra.mxu0 0.0
    %4147 = vmatprep.subr.mxu0 0.0
    %4148 = vmatpush1.msra.mxu0 0.0
    %4149 = vmatprep.subr.mxu0 0.0
    %4150 = vmatpush1.msra.mxu0 0.0
    %4151 = vmatprep.subr.mxu0 0.0
    %4152 = vmatpush1.msra.mxu0 0.0
    %4153 = vmatprep.subr.mxu0 0.0
    %4154 = vmatpush1.msra.mxu0 0.0
    %4155 = vmatprep.subr.mxu0 0.0
    %4156 = vmatpush1.msra.mxu0 0.0
    %4157 = vmatprep.subr.mxu0 0.0
    %4158 = vmatpush1.msra.mxu0 0.0
    %4159 = vmatprep.subr.mxu0 0.0
    %4160 = vmatpush1.msra.mxu0 0.0
    %4161 = vmatprep.subr.mxu0 0.0
    %4162 = vmatpush1.msra.mxu0 0.0
    %4163 = vmatprep.subr.mxu0 0.0
    %4164 = vmatpush1.msra.mxu0 0.0
    %4165 = vmatprep.subr.mxu0 0.0
    %4166 = vmatpush1.msra.mxu0 0.0
    %4167 = vmatprep.subr.mxu0 0.0
    %4168 = vmatpush1.msra.mxu0 0.0
    %4169 = vmatprep.subr.mxu0 0.0
    %4170 = vmatpush1.msra.mxu0 0.0
    %4171 = vmatprep.subr.mxu0 0.0
    %4172 = vmatpush1.msra.mxu0 0.0
    %4173 = vmatprep.subr.mxu0 0.0
    %4174 = vmatpush1.msra.mxu0 0.0
    %4175 = vmatprep.subr.mxu0 0.0
    %4176 = vmatpush1.msra.mxu0 0.0
    %4177 = vmatprep.subr.mxu0 0.0
    %4178 = vmatpush1.msra.mxu0 0.0
    %4179 = vmatprep.subr.mxu0 0.0
    %4180 = vmatpush1.msra.mxu0 0.0
    %4181 = vmatprep.subr.mxu0 0.0
    %4182 = vmatpush1.msra.mxu0 0.0
    %4183 = vmatprep.subr.mxu0 0.0
    %4184 = vmatpush1.msra.mxu0 0.0
    %4185 = vmatprep.subr.mxu0 0.0
    %4186 = vmatpush1.msra.mxu0 0.0
    %4187 = vmatprep.subr.mxu0 0.0
    %4188 = vmatpush1.msra.mxu0 0.0
    %4189 = vmatprep.subr.mxu0 0.0
    %4190 = vmatpush1.msra.mxu0 0.0
    %4191 = vmatprep.subr.mxu0 0.0
    %4192 = vmatpush1.msra.mxu0 0.0
    %4193 = vmatprep.subr.mxu0 0.0
    %4194 = vmatpush1.msra.mxu0 0.0
    %4195 = vmatprep.subr.mxu0 0.0
    %4196 = vmatpush1.msra.mxu0 0.0
    %4197 = vmatprep.mubr.f32.mxu0 0.0
    %4198 = vmatmul.mubr.f32.gmra.mrb[0].mxu0 %v4128
    %v4199 = vpop.f32.mrb[0].mxu0
    %v4200 = vadd.f32 0.0, %v4199
    %v4201 = vpop.f32.mrb[0].mxu0
    %4202 = vmatprep.mubr.f32.mxu0 0.0
    %4203 = vmatmul.mubr.f32.gmra.mrb[0].mxu0 %v4131
    %v4204 = vpop.f32.mrb[0].mxu0
    %v4205 = vadd.f32 0.0, %v4204
    %v4206 = vpop.f32.mrb[0].mxu0
    %4207 = vdwg.mxu0
    %v4208 = vadd.f32 %v3781, %v4200
    %v4209 = vadd.f32 %v3782, %v4205
    %v4210 = vlaneseq
    %v4211 = vshrl.u32 %v4210, 7
    %v4212 = vsub.s32 2, %v4211
    %v4213 = vrot.slane %v2336, %v4212
    %v4214 = vadd.f32 %v4208, %v4213
    %v4215 = vadd.f32 %v4209, %v4213
    %v4216 = vadd.f32 %v4214, %v2302
    %v4217 = vadd.f32 %v4215, %v2303
    %v4218 = vsel %vm112, %v4216, 0.0
    %4219 = vadd.xlane.f32.xlu0 %v4218
    %v4220 = vpop.xlane.xlu0 %4219
    %v4221 = vsel %vm112, %v4217, 0.0
    %4222 = vadd.xlane.f32.xlu0 %v4221
    %v4223 = vpop.xlane.xlu0 %4222
    %v4224 = vmul.f32 %v4220, %v2021
    %v4225 = vmul.f32 %v4223, %v2021
    %v4226 = vsub.f32 %v4216, %v4224
    %v4227 = vsub.f32 %v4217, %v4225
    %v4228 = vmul.f32 %v4226, %v4226
    %v4229 = vmul.f32 %v4227, %v4227
    %v4230 = vsel %vm112, %v4228, 0.0
    %4231 = vadd.xlane.f32.xlu0 %v4230
    %v4232 = vpop.xlane.xlu0 %4231
    %v4233 = vsel %vm112, %v4229, 0.0
    %4234 = vadd.xlane.f32.xlu0 %v4233
    %v4235 = vpop.xlane.xlu0 %4234
    %v4236 = vmul.f32 %v4232, %v2021
    %v4237 = vmul.f32 %v4235, %v2021
    %v4238 = vadd.f32 %v4236, 1e-12
    %v4239 = vadd.f32 %v4237, 1e-12
    %v4240 = vrsqrt.pop %v4238
    %v4241 = vmul.f32 %v4238, %v4240
    %vm4242 = vcmp.eq.f32.partialorder %v4238, inf
    %v4243 = vsel %vm4242, %v4238, %v4241
    %vm4244 = vcmp.eq.f32.partialorder %v4238, 0.0
    %v4245 = vand.u32 %v4238, 2147483648
    %v4246 = vsel %vm4244, %v4245, %v4243
    %v4247 = vrsqrt.pop %v4239
    %v4248 = vmul.f32 %v4239, %v4247
    %vm4249 = vcmp.eq.f32.partialorder %v4239, inf
    %v4250 = vsel %vm4249, %v4239, %v4248
    %vm4251 = vcmp.eq.f32.partialorder %v4239, 0.0
    %v4252 = vand.u32 %v4239, 2147483648
    %v4253 = vsel %vm4251, %v4252, %v4250
    %v4254 = vrcp.pop %v4246
    %v4255 = vmul.f32 %v4226, %v4254
    %v4256 = vrcp.pop %v4253
    %v4257 = vmul.f32 %v4227, %v4256
    %v4258 = vlaneseq
    %v4259 = vshrl.u32 %v4258, 7
    %v4260 = vsub.s32 3, %v4259
    %v4261 = vrot.slane %v2336, %v4260
    %v4262 = vmul.f32 %v4255, %v4261
    %v4263 = vmul.f32 %v4257, %v4261
    %v4264 = vlaneseq
    %v4265 = vshrl.u32 %v4264, 7
    %v4266 = vsub.s32 4, %v4265
    %v4267 = vrot.slane %v2336, %v4266
    %v4268 = vadd.f32 %v4262, %v4267
    %v4269 = vadd.f32 %v4263, %v4267
    %v4270 = vlaneseq
    %v4271 = vshrl.u32 %v4270, 7
    %v4272 = vsub.s32 5, %v4271
    %v4273 = vrot.slane %v2336, %v4272
    %v4275 = vsel %vm112, %v4268, 0
    %v4278 = vsel %vm112, %v4269, 0
    %4280 = vmatprep.subr.mxu0 0.0
    %4281 = vmatpush1.msra.mxu0 %v2322
    %4282 = vmatprep.subr.mxu0 0.0
    %4283 = vmatpush1.msra.mxu0 %v2323
    %4284 = vmatprep.subr.mxu0 0.0
    %4285 = vmatpush1.msra.mxu0 %v2324
    %4286 = vmatprep.subr.mxu0 0.0
    %4287 = vmatpush1.msra.mxu0 %v2325
    %4288 = vmatprep.subr.mxu0 0.0
    %4289 = vmatpush1.msra.mxu0 0.0
    %4290 = vmatprep.subr.mxu0 0.0
    %4291 = vmatpush1.msra.mxu0 0.0
    %4292 = vmatprep.subr.mxu0 0.0
    %4293 = vmatpush1.msra.mxu0 0.0
    %4294 = vmatprep.subr.mxu0 0.0
    %4295 = vmatpush1.msra.mxu0 0.0
    %4296 = vmatprep.subr.mxu0 0.0
    %4297 = vmatpush1.msra.mxu0 0.0
    %4298 = vmatprep.subr.mxu0 0.0
    %4299 = vmatpush1.msra.mxu0 0.0
    %4300 = vmatprep.subr.mxu0 0.0
    %4301 = vmatpush1.msra.mxu0 0.0
    %4302 = vmatprep.subr.mxu0 0.0
    %4303 = vmatpush1.msra.mxu0 0.0
    %4304 = vmatprep.subr.mxu0 0.0
    %4305 = vmatpush1.msra.mxu0 0.0
    %4306 = vmatprep.subr.mxu0 0.0
    %4307 = vmatpush1.msra.mxu0 0.0
    %4308 = vmatprep.subr.mxu0 0.0
    %4309 = vmatpush1.msra.mxu0 0.0
    %4310 = vmatprep.subr.mxu0 0.0
    %4311 = vmatpush1.msra.mxu0 0.0
    %4312 = vmatprep.subr.mxu0 0.0
    %4313 = vmatpush1.msra.mxu0 0.0
    %4314 = vmatprep.subr.mxu0 0.0
    %4315 = vmatpush1.msra.mxu0 0.0
    %4316 = vmatprep.subr.mxu0 0.0
    %4317 = vmatpush1.msra.mxu0 0.0
    %4318 = vmatprep.subr.mxu0 0.0
    %4319 = vmatpush1.msra.mxu0 0.0
    %4320 = vmatprep.subr.mxu0 0.0
    %4321 = vmatpush1.msra.mxu0 0.0
    %4322 = vmatprep.subr.mxu0 0.0
    %4323 = vmatpush1.msra.mxu0 0.0
    %4324 = vmatprep.subr.mxu0 0.0
    %4325 = vmatpush1.msra.mxu0 0.0
    %4326 = vmatprep.subr.mxu0 0.0
    %4327 = vmatpush1.msra.mxu0 0.0
    %4328 = vmatprep.subr.mxu0 0.0
    %4329 = vmatpush1.msra.mxu0 0.0
    %4330 = vmatprep.subr.mxu0 0.0
    %4331 = vmatpush1.msra.mxu0 0.0
    %4332 = vmatprep.subr.mxu0 0.0
    %4333 = vmatpush1.msra.mxu0 0.0
    %4334 = vmatprep.subr.mxu0 0.0
    %4335 = vmatpush1.msra.mxu0 0.0
    %4336 = vmatprep.subr.mxu0 0.0
    %4337 = vmatpush1.msra.mxu0 0.0
    %4338 = vmatprep.subr.mxu0 0.0
    %4339 = vmatpush1.msra.mxu0 0.0
    %4340 = vmatprep.subr.mxu0 0.0
    %4341 = vmatpush1.msra.mxu0 0.0
    %4342 = vmatprep.subr.mxu0 0.0
    %4343 = vmatpush1.msra.mxu0 0.0
    %4344 = vmatprep.mubr.f32.mxu0 0.0
    %4345 = vmatmul.mubr.f32.gmra.mrb[0].mxu0 %v4275
    %v4346 = vpop.f32.mrb[0].mxu0
    %v4347 = vadd.f32 %v4273, %v4346
    %v4348 = vpop.f32.mrb[0].mxu0
    %4349 = vmatprep.mubr.f32.mxu0 0.0
    %4350 = vmatmul.mubr.f32.gmra.mrb[0].mxu0 %v4278
    %v4351 = vpop.f32.mrb[0].mxu0
    %v4352 = vadd.f32 %v4273, %v4351
    %v4353 = vpop.f32.mrb[0].mxu0
    %4354 = vdwg.mxu0
    %v4355 = vmul.f32 %v4347, 0.5
    %v4356 = vmul.f32 %v4352, 0.5
    %v4357 = vmul.f32 %v4347, %v2155
    %v4358 = vmul.f32 %v4352, %v2155
    %v4359 = verf.f32.pop %v4357
    %v4360 = verf.f32.pop %v4358
    %v4361 = vadd.f32 %v4359, 1.0
    %v4362 = vadd.f32 %v4360, 1.0
    %v4363 = vmul.f32 %v4355, %v4361
    %v4364 = vmul.f32 %v4356, %v4362
    %v4365 = vlaneseq
    %v4366 = vshrl.u32 %v4365, 7
    %v4367 = vsub.s32 6, %v4366
    %v4368 = vrot.slane %v2336, %v4367
    %v4370 = vsel %vm2168, %v4363, 0
    %v4373 = vsel %vm2168, %v4364, 0
    %4375 = vmatprep.subr.mxu0 0.0
    %4376 = vmatpush1.msra.mxu0 %v2327
    %4377 = vmatprep.subr.mxu0 0.0
    %4378 = vmatpush1.msra.mxu0 %v2328
    %4379 = vmatprep.subr.mxu0 0.0
    %4380 = vmatpush1.msra.mxu0 %v2329
    %4381 = vmatprep.subr.mxu0 0.0
    %4382 = vmatpush1.msra.mxu0 %v2330
    %4383 = vmatprep.subr.mxu0 0.0
    %4384 = vmatpush1.msra.mxu0 %v2331
    %4385 = vmatprep.subr.mxu0 0.0
    %4386 = vmatpush1.msra.mxu0 %v2332
    %4387 = vmatprep.subr.mxu0 0.0
    %4388 = vmatpush1.msra.mxu0 %v2333
    %4389 = vmatprep.subr.mxu0 0.0
    %4390 = vmatpush1.msra.mxu0 %v2334
    %4391 = vmatprep.subr.mxu0 0.0
    %4392 = vmatpush1.msra.mxu0 0.0
    %4393 = vmatprep.subr.mxu0 0.0
    %4394 = vmatpush1.msra.mxu0 0.0
    %4395 = vmatprep.subr.mxu0 0.0
    %4396 = vmatpush1.msra.mxu0 0.0
    %4397 = vmatprep.subr.mxu0 0.0
    %4398 = vmatpush1.msra.mxu0 0.0
    %4399 = vmatprep.subr.mxu0 0.0
    %4400 = vmatpush1.msra.mxu0 0.0
    %4401 = vmatprep.subr.mxu0 0.0
    %4402 = vmatpush1.msra.mxu0 0.0
    %4403 = vmatprep.subr.mxu0 0.0
    %4404 = vmatpush1.msra.mxu0 0.0
    %4405 = vmatprep.subr.mxu0 0.0
    %4406 = vmatpush1.msra.mxu0 0.0
    %4407 = vmatprep.subr.mxu0 0.0
    %4408 = vmatpush1.msra.mxu0 0.0
    %4409 = vmatprep.subr.mxu0 0.0
    %4410 = vmatpush1.msra.mxu0 0.0
    %4411 = vmatprep.subr.mxu0 0.0
    %4412 = vmatpush1.msra.mxu0 0.0
    %4413 = vmatprep.subr.mxu0 0.0
    %4414 = vmatpush1.msra.mxu0 0.0
    %4415 = vmatprep.subr.mxu0 0.0
    %4416 = vmatpush1.msra.mxu0 0.0
    %4417 = vmatprep.subr.mxu0 0.0
    %4418 = vmatpush1.msra.mxu0 0.0
    %4419 = vmatprep.subr.mxu0 0.0
    %4420 = vmatpush1.msra.mxu0 0.0
    %4421 = vmatprep.subr.mxu0 0.0
    %4422 = vmatpush1.msra.mxu0 0.0
    %4423 = vmatprep.subr.mxu0 0.0
    %4424 = vmatpush1.msra.mxu0 0.0
    %4425 = vmatprep.subr.mxu0 0.0
    %4426 = vmatpush1.msra.mxu0 0.0
    %4427 = vmatprep.subr.mxu0 0.0
    %4428 = vmatpush1.msra.mxu0 0.0
    %4429 = vmatprep.subr.mxu0 0.0
    %4430 = vmatpush1.msra.mxu0 0.0
    %4431 = vmatprep.subr.mxu0 0.0
    %4432 = vmatpush1.msra.mxu0 0.0
    %4433 = vmatprep.subr.mxu0 0.0
    %4434 = vmatpush1.msra.mxu0 0.0
    %4435 = vmatprep.subr.mxu0 0.0
    %4436 = vmatpush1.msra.mxu0 0.0
    %4437 = vmatprep.subr.mxu0 0.0
    %4438 = vmatpush1.msra.mxu0 0.0
    %4439 = vmatprep.mubr.f32.mxu0 0.0
    %4440 = vmatmul.mubr.f32.gmra.mrb[0].mxu0 %v4370
    %v4441 = vpop.f32.mrb[0].mxu0
    %v4442 = vadd.f32 %v4368, %v4441
    %v4443 = vpop.f32.mrb[0].mxu0
    %4444 = vmatprep.mubr.f32.mxu0 0.0
    %4445 = vmatmul.mubr.f32.gmra.mrb[0].mxu0 %v4373
    %v4446 = vpop.f32.mrb[0].mxu0
    %v4447 = vadd.f32 %v4368, %v4446
    %v4448 = vpop.f32.mrb[0].mxu0
    %4449 = vdwg.mxu0
    %v4450 = vadd.f32 %v4442, %v4268
    %v4451 = vadd.f32 %v4447, %v4269
    %v4452 = vsel %vm112, %v4450, 0.0
    %4453 = vadd.xlane.f32.xlu0 %v4452
    %v4454 = vpop.xlane.xlu0 %4453
    %v4455 = vsel %vm112, %v4451, 0.0
    %4456 = vadd.xlane.f32.xlu0 %v4455
    %v4457 = vpop.xlane.xlu0 %4456
    %v4458 = vmul.f32 %v4454, %v2021
    %v4459 = vmul.f32 %v4457, %v2021
    %v4460 = vsub.f32 %v4450, %v4458
    %v4461 = vsub.f32 %v4451, %v4459
    %v4462 = vmul.f32 %v4460, %v4460
    %v4463 = vmul.f32 %v4461, %v4461
    %v4464 = vsel %vm112, %v4462, 0.0
    %4465 = vadd.xlane.f32.xlu0 %v4464
    %v4466 = vpop.xlane.xlu0 %4465
    %v4467 = vsel %vm112, %v4463, 0.0
    %4468 = vadd.xlane.f32.xlu0 %v4467
    %v4469 = vpop.xlane.xlu0 %4468
    %v4470 = vmul.f32 %v4466, %v2021
    %v4471 = vmul.f32 %v4469, %v2021
    %v4472 = vadd.f32 %v4470, 1e-12
    %v4473 = vadd.f32 %v4471, 1e-12
    %v4474 = vrsqrt.pop %v4472
    %v4475 = vmul.f32 %v4472, %v4474
    %vm4476 = vcmp.eq.f32.partialorder %v4472, inf
    %v4477 = vsel %vm4476, %v4472, %v4475
    %vm4478 = vcmp.eq.f32.partialorder %v4472, 0.0
    %v4479 = vand.u32 %v4472, 2147483648
    %v4480 = vsel %vm4478, %v4479, %v4477
    %v4481 = vrsqrt.pop %v4473
    %v4482 = vmul.f32 %v4473, %v4481
    %vm4483 = vcmp.eq.f32.partialorder %v4473, inf
    %v4484 = vsel %vm4483, %v4473, %v4482
    %vm4485 = vcmp.eq.f32.partialorder %v4473, 0.0
    %v4486 = vand.u32 %v4473, 2147483648
    %v4487 = vsel %vm4485, %v4486, %v4484
    %v4488 = vrcp.pop %v4480
    %v4489 = vmul.f32 %v4460, %v4488
    %v4490 = vrcp.pop %v4487
    %v4491 = vmul.f32 %v4461, %v4490
    %v4492 = vlaneseq
    %v4493 = vshrl.u32 %v4492, 7
    %v4494 = vsub.s32 7, %v4493
    %v4495 = vrot.slane %v2336, %v4494
    %v4496 = vmul.f32 %v4489, %v4495
    %v4497 = vmul.f32 %v4491, %v4495
    %v4498 = vlaneseq
    %v4499 = vshrl.u32 %v4498, 7
    %v4500 = vsub.s32 0, %v4499
    %v4501 = vrot.slane %v2337, %v4500
    %v4502 = vadd.f32 %v4496, %v4501
    %v4503 = vadd.f32 %v4497, %v4501
    %s4504 = scalar_lea.vmem [#allocation8], 16
    %4505 = vst.msk [vmem:[%s4504] sm:$0xff] %vm112, %v4502
    %4506 = vst.msk [vmem:[%s4504 + $0x8] sm:$0xff] %vm112, %v4503
    // Predicated region
    $region50: #{tpu_custom_call.1} parent=1 // pred_check
      _
    $region51: #{tpu_custom_call.1} parent=1 // pred_check_branch
      %4508 = sbr.rel (0) target = $region53
    $region52: #{tpu_custom_call.1} parent=1 // pred_region
      %s4510 = ssub.s32 512, 512
      %4511 = vsyncadd [#allocation4], %s4510
      %s4512 = sshll.u32 [#allocation8], 4
      %s4513 = int_to_ptr.vmem [resolvable:$true] %s4512
      %4518 = dma.vmem_to_hbm [thread:$0]  %s4513, 512, %s9, [#allocation4], 128, 128, 8
    $region53: #{tpu_custom_call.1} parent=1 // pred_fallthru
      _
    // Predicated region
    $region54: #{tpu_custom_call.1} parent=1 // pred_check
      _
    $region55: #{tpu_custom_call.1} parent=1 // pred_check_branch
      %4520 = sbr.rel (0) target = $region57
    $region56: #{tpu_custom_call.1} parent=1 // pred_region
      %4521 = dma.done [#allocation4], 512
    $region57: #{tpu_custom_call.1} parent=1 // pred_fallthru
      _
    %4522 = vsyncpa [#allocation3], 1
    %4523 = vsyncpa [#allocation6], 1
    %4524 = vsyncpa [#allocation4], 1

</llo_original>
